<compile_context>
chip_gen: v7x
topology: tpu7x:2x2x1
jax: 0.10.0
libtpu: 0.0.40
codegen_flags: <defaults>
</compile_context>

<pallas_src>
import functools

import jax
import jax.numpy as jnp
import numpy as np
from jax.experimental import pallas as pl
from jax.experimental.pallas import tpu as pltpu


# -----------------------------------------------------------------------------
# Fused kernel: gated conv (filter & attention as one matmul) + running max-pool.
#   x_ref  : (1, TP, K*E)  bf16   embedded windows for batch row b, P-tile p
#   w_ref  : (K*E, 2W)     bf16   [filter | attention] conv weights
#   b_ref  : (1, 2W)       f32    [filter | attention] conv bias
#   out_ref: (1, 1, W)     f32    running max over window positions (accumulator)
# -----------------------------------------------------------------------------
def gated_conv_pool_kernel(x_ref, w_ref, b_ref, out_ref, *, p_valid, mask_rows):
    p = pl.program_id(1)
    _, tp, ke = x_ref.shape
    w_out = out_ref.shape[-1]

    x = x_ref[...].reshape(tp, ke)                       # bf16 (TP, K*E)
    z = jnp.dot(x, w_ref[...], preferred_element_type=jnp.float32) + b_ref[...]
    filt = z[:, :w_out]                                  # (TP, W) f32
    attn = z[:, w_out:]                                  # (TP, W) f32
    g = filt * jax.nn.sigmoid(attn)                      # f32 elementwise (v5e-safe)

    if mask_rows:
        # Padded window positions must never win the running max.
        rows = p * tp + jax.lax.broadcasted_iota(jnp.int32, (tp, 1), 0)
        g = jnp.where(rows < p_valid, g, -jnp.inf)

    tile_max = jnp.max(g, axis=0, keepdims=True).reshape(1, 1, w_out)

    @pl.when(p == 0)
    def _():
        out_ref[...] = tile_max

    @pl.when(p > 0)
    def _():
        out_ref[...] = jnp.maximum(out_ref[...], tile_max)


def _choose_row_tile(p_total, target):
    """Pick the P-tile (rows per grid step) and the padded P extent."""
    if p_total <= target:
        return p_total, p_total                     # full extent, no padding
    tp = (target // 8) * 8                          # sublane-aligned tile
    p_pad = -(-p_total // tp) * tp
    return tp, p_pad


def prepare_params(params, *, embedding_dim, window_size, kernel_size):
    """One-time weight re-layout (hoisted out of the per-call forward path)."""
    E, W, K = embedding_dim, window_size, kernel_size
    # Conv weights (W, E, K) -> (W, K, E) -> (K*E, W) to match the (k, c)
    # window flattening; then fuse filter+attention on the output axis.
    wf = jnp.transpose(params["filter_w"], (0, 2, 1)).reshape(W, K * E).T
    wa = jnp.transpose(params["attn_w"], (0, 2, 1)).reshape(W, K * E).T
    conv_w = jnp.concatenate([wf, wa], axis=1).astype(jnp.bfloat16)        # (K*E, 2W)
    conv_b = jnp.concatenate([params["filter_b"], params["attn_b"]]
                             ).reshape(1, 2 * W).astype(jnp.float32)        # (1, 2W)
    return {
        "embed": params["embed"].astype(jnp.bfloat16),   # bf16 table -> bf16 gather
        "conv_w": conv_w,
        "conv_b": conv_b,
        "fc1_w_t": params["fc1_w"].T.astype(jnp.float32),     # (W, W)
        "fc1_b": params["fc1_b"].astype(jnp.float32),          # (W,)
        "fc2_w_t": params["fc2_w"].T.astype(jnp.float32),     # (W, 1)
        "fc2_b": params["fc2_b"].astype(jnp.float32),          # (1,)
    }


@functools.partial(
    jax.jit,
    static_argnames=("embedding_dim", "window_size", "kernel_size", "row_tile"),
)
def malconv_forward(x_bytes, prepared, *, embedding_dim, window_size, kernel_size,
                    row_tile=512):
    B, L = x_bytes.shape
    E, W, K = embedding_dim, window_size, kernel_size
    P = L // K                       # conv output positions (stride == kernel_size)
    KE = K * E

    # ---- glue: embedding gather (bf16) + non-overlapping window flattening ----
    emb = prepared["embed"][x_bytes]                     # (B, L, E) bf16
    x_win = emb[:, : P * K].reshape(B, P, KE)            # rows=(b,p), cols=(k,c)

    tp, p_pad = _choose_row_tile(P, row_tile)
    if p_pad != P:
        x_win = jnp.pad(x_win, ((0, 0), (0, p_pad - P), (0, 0)))
    num_p_tiles = p_pad // tp

    kernel = functools.partial(
        gated_conv_pool_kernel, p_valid=P, mask_rows=(p_pad != P))

    pooled = pl.pallas_call(
        kernel,
        out_shape=jax.ShapeDtypeStruct((B, 1, W), jnp.float32),
        grid=(B, num_p_tiles),
        in_specs=[
            pl.BlockSpec((1, tp, KE), lambda b, p: (b, p, 0)),   # streamed rows
            pl.BlockSpec((KE, 2 * W), lambda b, p: (0, 0)),      # resident weights
            pl.BlockSpec((1, 2 * W), lambda b, p: (0, 0)),       # resident bias
        ],
        out_specs=pl.BlockSpec((1, 1, W), lambda b, p: (b, 0, 0)),  # accumulator
        compiler_params=pltpu.CompilerParams(
            dimension_semantics=("parallel", "arbitrary"),
            vmem_limit_bytes=64 * 1024 * 1024,
        ),
    )(x_win, prepared["conv_w"], prepared["conv_b"])

    # ---- tiny head MLP on the pooled (B, W) output: plain JAX by design ----
    pooled = pooled.reshape(B, W)
    h = jnp.maximum(pooled @ prepared["fc1_w_t"] + prepared["fc1_b"], 0.0)
    return jax.nn.sigmoid(h @ prepared["fc2_w_t"] + prepared["fc2_b"])


def malconv_reference(x_bytes, params, *, embedding_dim, window_size, kernel_size):
    """Pure-JAX f32 reference matching the PyTorch forward semantics."""
    B, L = x_bytes.shape
    E, W, K = embedding_dim, window_size, kernel_size
    P = L // K
    emb = params["embed"][x_bytes]                       # (B, L, E)
    xc = jnp.transpose(emb[:, : P * K], (0, 2, 1))       # (B, E, P*K)  (NCW)
    xw = xc.reshape(B, E, P, K)                          # non-overlapping windows
    filt = jnp.einsum("bepk,oek->bop", xw, params["filter_w"]) + params["filter_b"][None, :, None]
    attn = jnp.einsum("bepk,oek->bop", xw, params["attn_w"]) + params["attn_b"][None, :, None]
    gated = filt * jax.nn.sigmoid(attn)                  # (B, W, P)
    pooled = jnp.max(gated, axis=-1)                     # (B, W)
    h = jnp.maximum(pooled @ params["fc1_w"].T + params["fc1_b"], 0.0)
    return jax.nn.sigmoid(h @ params["fc2_w"].T + params["fc2_b"])


def init_params(key, embedding_dim, window_size, kernel_size):
    E, W, K = embedding_dim, window_size, kernel_size
    ks = jax.random.split(key, 9)
    scale = 0.02
    return {
        "embed": jax.random.normal(ks[0], (256, E), jnp.float32),
        "filter_w": scale * jax.random.normal(ks[1], (W, E, K), jnp.float32),
        "filter_b": scale * jax.random.normal(ks[2], (W,), jnp.float32),
        "attn_w": scale * jax.random.normal(ks[3], (W, E, K), jnp.float32),
        "attn_b": scale * jax.random.normal(ks[4], (W,), jnp.float32),
        "fc1_w": scale * jax.random.normal(ks[5], (W, W), jnp.float32),
        "fc1_b": scale * jax.random.normal(ks[6], (W,), jnp.float32),
        "fc2_w": scale * jax.random.normal(ks[7], (1, W), jnp.float32),
        "fc2_b": scale * jax.random.normal(ks[8], (1,), jnp.float32),
    }


if __name__ == "__main__":
    # Small-but-consistent shapes: keep embedding_dim / window_size / kernel_size
    # from the module defaults, shrink the sequence length.
    B = 2
    E = 8            # embedding_dim
    W = 128          # window_size (conv out channels / fc width)
    K = 512          # conv kernel_size == stride
    L = 2048         # input_length (=> 4 conv output positions)

    key = jax.random.PRNGKey(0)
    pkey, xkey = jax.random.split(key)
    params = init_params(pkey, E, W, K)
    x_bytes = jax.random.randint(xkey, (B, L), 0, 256, dtype=jnp.int32).astype(jnp.uint8)

    prepared = prepare_params(params, embedding_dim=E, window_size=W, kernel_size=K)

    out = malconv_forward(x_bytes, prepared,
                          embedding_dim=E, window_size=W, kernel_size=K)
    out = jax.block_until_ready(out)

    ref = malconv_reference(x_bytes, params,
                            embedding_dim=E, window_size=W, kernel_size=K)
    # bf16 inputs to the MXU (f32 accumulation) -> loosened tolerance.
    np.testing.assert_allclose(np.asarray(out), np.asarray(ref), rtol=2e-2, atol=1e-3)
    assert out.shape == (B, 1)

    print("KERNEL_OK")
</pallas_src>

<mosaic_0001>
module attributes {stable_mosaic.version = 11 : i64} {
  func.func @gated_conv_pool_kernel(%arg0: i32, %arg1: i32, %arg2: memref<1x4x4096xbf16, #tpu.memory_space<vmem>>, %arg3: memref<4096x256xbf16, #tpu.memory_space<vmem>>, %arg4: memref<1x256xf32, #tpu.memory_space<vmem>>, %arg5: memref<1x1x128xf32, #tpu.memory_space<vmem>>) attributes {dimension_semantics = [#tpu.dimension_semantics<parallel>, #tpu.dimension_semantics<arbitrary>], iteration_bounds = array<i64: 2, 1>, scalar_prefetch = 0 : i64, scratch_operands = 0 : i64, tpu.core_type = #tpu.core_type<tc>, window_params = [{transform_indices = @transform_0, window_bounds = array<i64: 1, 4, 4096>}, {pipeline_mode = #tpu.pipeline_mode<synchronous>, transform_indices = @transform_1, window_bounds = array<i64: 4096, 256>}, {pipeline_mode = #tpu.pipeline_mode<synchronous>, transform_indices = @transform_2, window_bounds = array<i64: 1, 256>}, {transform_indices = @transform_3, window_bounds = array<i64: 1, 1, 128>}]} {
    %c0 = arith.constant 0 : index
    %c0_0 = arith.constant 0 : index
    %c0_1 = arith.constant 0 : index
    %0 = vector.load %arg2[%c0, %c0_0, %c0_1] : memref<1x4x4096xbf16, #tpu.memory_space<vmem>>, vector<1x4x4096xbf16>
    %1 = vector.shape_cast %0 : vector<1x4x4096xbf16> to vector<4x4096xbf16>
    %c0_2 = arith.constant 0 : index
    %c0_3 = arith.constant 0 : index
    %2 = vector.load %arg3[%c0_2, %c0_3] : memref<4096x256xbf16, #tpu.memory_space<vmem>>, vector<4096x256xbf16>
    %cst = arith.constant dense<0.000000e+00> : vector<4x256xf32>
    %3 = tpu.matmul %1, %2, %cst {dimension_numbers = #tpu.dot_dimension_numbers<[1], [0], [0], [1], [0, 0, 1, 1], [], []>} : vector<4x4096xbf16>, vector<4096x256xbf16>, vector<4x256xf32> -> vector<4x256xf32>
    %c0_4 = arith.constant 0 : index
    %c0_5 = arith.constant 0 : index
    %4 = vector.load %arg4[%c0_4, %c0_5] : memref<1x256xf32, #tpu.memory_space<vmem>>, vector<1x256xf32>
    %5 = vector.broadcast %4 : vector<1x256xf32> to vector<4x256xf32>
    %6 = arith.addf %3, %5 : vector<4x256xf32>
    %7 = vector.extract_strided_slice %6 {offsets = [0, 0], sizes = [4, 128], strides = [1, 1]} : vector<4x256xf32> to vector<4x128xf32>
    %8 = vector.extract_strided_slice %6 {offsets = [0, 128], sizes = [4, 128], strides = [1, 1]} : vector<4x256xf32> to vector<4x128xf32>
    %9 = arith.negf %8 : vector<4x128xf32>
    %10 = math.exp %9 : vector<4x128xf32>
    %cst_6 = arith.constant 1.000000e+00 : f32
    %11 = vector.broadcast %cst_6 : f32 to vector<4x128xf32>
    %12 = arith.addf %11, %10 : vector<4x128xf32>
    %13 = arith.divf %11, %12 : vector<4x128xf32>
    %14 = arith.mulf %7, %13 : vector<4x128xf32>
    %cst_7 = arith.constant dense<0xFF800000> : vector<128xf32>
    %15 = vector.multi_reduction <maximumf>, %14, %cst_7 [0] : vector<4x128xf32> to vector<128xf32>
    %16 = vector.shape_cast %15 : vector<128xf32> to vector<1x128xf32>
    %17 = vector.shape_cast %16 : vector<1x128xf32> to vector<1x1x128xf32>
    %c0_i32 = arith.constant 0 : i32
    %18 = arith.cmpi eq, %arg1, %c0_i32 : i32
    %19 = arith.extui %18 : i1 to i32
    %c0_i32_8 = arith.constant 0 : i32
    %20 = arith.cmpi ne, %19, %c0_i32_8 : i32
    scf.if %20 {
      %c0_11 = arith.constant 0 : index
      %c0_12 = arith.constant 0 : index
      %c0_13 = arith.constant 0 : index
      %24 = vector.load %arg5[%c0_11, %c0_12, %c0_13] : memref<1x1x128xf32, #tpu.memory_space<vmem>>, vector<1x1x128xf32>
      tpu.vector_store %arg5[%c0_11, %c0_12, %c0_13], %17 {strides = array<i32>} : memref<1x1x128xf32, #tpu.memory_space<vmem>>, vector<1x1x128xf32>,
    } else {
    }
    %c0_i32_9 = arith.constant 0 : i32
    %21 = arith.cmpi sgt, %arg1, %c0_i32_9 : i32
    %22 = arith.extui %21 : i1 to i32
    %c0_i32_10 = arith.constant 0 : i32
    %23 = arith.cmpi ne, %22, %c0_i32_10 : i32
    scf.if %23 {
      %c0_11 = arith.constant 0 : index
      %c0_12 = arith.constant 0 : index
      %c0_13 = arith.constant 0 : index
      %24 = vector.load %arg5[%c0_11, %c0_12, %c0_13] : memref<1x1x128xf32, #tpu.memory_space<vmem>>, vector<1x1x128xf32>
      %25 = arith.maximumf %24, %17 : vector<1x1x128xf32>
      %c0_14 = arith.constant 0 : index
      %c0_15 = arith.constant 0 : index
      %c0_16 = arith.constant 0 : index
      %26 = vector.load %arg5[%c0_14, %c0_15, %c0_16] : memref<1x1x128xf32, #tpu.memory_space<vmem>>, vector<1x1x128xf32>
      tpu.vector_store %arg5[%c0_14, %c0_15, %c0_16], %25 {strides = array<i32>} : memref<1x1x128xf32, #tpu.memory_space<vmem>>, vector<1x1x128xf32>,
    } else {
    }
    return
  }
  func.func @transform_0(%arg0: i32, %arg1: i32) -> (i32, i32, i32) {
    %c0_i32 = arith.constant 0 : i32
    %c0_i32_0 = arith.constant 0 : i32
    return %arg0, %arg1, %c0_i32 : i32, i32, i32
  }
  func.func @transform_1(%arg0: i32, %arg1: i32) -> (i32, i32) {
    %c0_i32 = arith.constant 0 : i32
    %c0_i32_0 = arith.constant 0 : i32
    %c0_i32_1 = arith.constant 0 : i32
    return %c0_i32, %c0_i32_0 : i32, i32
  }
  func.func @transform_2(%arg0: i32, %arg1: i32) -> (i32, i32) {
    %c0_i32 = arith.constant 0 : i32
    %c0_i32_0 = arith.constant 0 : i32
    %c0_i32_1 = arith.constant 0 : i32
    return %c0_i32, %c0_i32_0 : i32, i32
  }
  func.func @transform_3(%arg0: i32, %arg1: i32) -> (i32, i32, i32) {
    %c0_i32 = arith.constant 0 : i32
    %c0_i32_0 = arith.constant 0 : i32
    %c0_i32_1 = arith.constant 0 : i32
    return %arg0, %c0_i32, %c0_i32_0 : i32, i32, i32
  }
}

</mosaic_0001>

<llo_original>
// kernel: malconv_forward.1
$region0: #{malconv_forward.1}
  #allocation0 [shape = 'u32[]', space=smem, size = 0x4, offset = 0x4, fixed_abs, tag = 'smem constant byte address 0x4 - core index']
  #allocation1 [shape = 'u32[144,128]{1,0:T(1,128)}', space=vmem, size = 0x12000, scoped, tag = 'internal scratch']
  %s0 = inlined_call_operand.hbm [shape: bf16[2,4,4096], index: 0, kind: input, shape index: {}]
  %s1 = inlined_call_operand.hbm [shape: bf16[4096,256], index: 1, kind: input, shape index: {}]
  %s2 = inlined_call_operand.hbm [shape: f32[1,256], index: 2, kind: input, shape index: {}]
  %s3 = inlined_call_operand.hbm [shape: f32[2,1,128], index: 3, kind: output, shape index: {}]
  %s4 = sld [smem:[#allocation0]]
  $region65: #{malconv_forward.1} parent=0
    _
  %s6 = ssub.s32 1, %s4
  %s7 = scalar_select 0, %s6, %s4
  $region1: #{malconv_forward.1} parent=0
    #allocation2 [shape = 'u8[65536]{0}', space=vmem, size = 0x10000, scoped, tag = 'input window, operand 0']
    #allocation3 [shape = 's32[2]{0}', space=sflag, size = 0x8, scoped, tag = 'scoped memory for malconv_forward.1']
    #allocation4 [shape = 's32[2]{0}', space=sflag, size = 0x8, scoped, tag = 'scoped memory for malconv_forward.1']
    #allocation5 [shape = 'u8[2097152]{0}', space=vmem, size = 0x200000, scoped, tag = 'input window, operand 1, single buffered']
    #allocation6 [shape = 's32[1]{0}', space=sflag, size = 0x4, scoped, tag = 'scoped memory for malconv_forward.1']
    #allocation7 [shape = 'u8[1024]{0}', space=vmem, size = 0x400, scoped, tag = 'input window, operand 2, single buffered']
    #allocation8 [shape = 'u8[1024]{0}', space=vmem, size = 0x400, scoped, tag = 'output window, operand 0']
    %8 = vsyncpa [#allocation3], 0
    %s9 = scalar_lea.sflag [#allocation3], 1
    %10 = vsyncpa %s9, 0
    %11 = vsyncpa [#allocation6], 0
    %12 = vsyncpa [#allocation4], 0
    %s13 = scalar_lea.sflag [#allocation4], 1
    %14 = vsyncpa %s13, 0
    loop: start=0, step=1, limit=4
    $region2: #{malconv_forward.1} parent=1 // loop_pre_header
      _
    $region3: #{malconv_forward.1} parent=1 // loop_header
      %s16 = sphi 0, %s20
      %p17 = scmp.ge.s32.totalorder %s16, 4
      %s23 = sphi 0, %s35
      %s24 = sphi 0, %s31
      %s25 = sphi 0, %s23
      %s26 = sphi 0, %s24
      %s27 = sphi 0, %s25
      %s28 = sphi 0, %s26
      %s40 = sphi 0, %s42
      %s43 = sphi 0, %s40
      %s44 = sphi 0, %s43
      %s60 = sphi 0, %s44
      %s64 = sphi 0, %s64
      %s66 = sphi 0, %s64
      %s67 = sphi 0, %s66
      %s81 = sphi 0, %s67
      %s85 = sphi 0, %s85
      %s87 = sphi 0, %s85
      %s88 = sphi 0, %s87
      %s102 = sphi 0, %s88
      %s108 = sphi 0, %s110
      %s111 = sphi 0, %s108
      %s112 = sphi 0, %s111
      %s128 = sphi 0, %s112
    $region4: #{malconv_forward.1} parent=1 // loop_header_branch
      %19 = sbr.rel (%p17) target = $region8
    $region5: #{malconv_forward.1} parent=1 // loop_body
      %s21 = ssub.s32 %s16, 1
      %s22 = ssub.s32 %s16, 2
      %s29 = sadd.s32 1, %s24
      %p30 = scmp.ge.s32.totalorder %s29, 1
      %s31 = scalar_select %p30, 0, %s29
      %s32 = sadd.s32 1, %s23
      %s33 = scalar_select %p30, %s32, %s23
      %p34 = scmp.ge.s32.totalorder %s33, 2
      %s35 = scalar_select %p34, 0, %s33
      %s36 = ssub.s32 %s23, %s35
      %s37 = ssub.s32 %s24, %s31
      %s38 = sor.u32 %s36, %s37
      %p39 = scmp.eq.s32.totalorder %s38, 0
      %s41 = sadd.s32 %s40, 1
      %s42 = scalar_select %p39, %s40, %s41
      %p45 = pneg %p39
      %p46 = scmp.eq.s32.totalorder %s16, 1
      %p47 = por %p45, %p46
      %p48 = scmp.ne.s32.totalorder %s40, %s43
      %p49 = scmp.eq.s32.totalorder %s16, 0
      %p50 = por %p48, %p49
      %p51 = scmp.ne.s32.totalorder %s40, %s43
      %p52 = scmp.eq.s32.totalorder %s21, 1
      %p53 = por %p51, %p52
      %p54 = scmp.ne.s32.totalorder %s43, %s44
      %p55 = scmp.eq.s32.totalorder %s21, 0
      %p56 = por %p54, %p55
      %p57 = scmp.ne.s32.totalorder %s43, %s44
      %p58 = scmp.eq.s32.totalorder %s22, 1
      %p59 = por %p57, %p58
      %p61 = scmp.ne.s32.totalorder %s44, %s60
      %p62 = scmp.eq.s32.totalorder %s22, 0
      %p63 = por %p61, %p62
      %s65 = sadd.s32 %s64, 1
      %p68 = scmp.eq.s32.totalorder %s16, 1
      %p69 = scmp.ne.s32.totalorder %s64, %s66
      %p70 = scmp.eq.s32.totalorder %s16, 0
      %p71 = por %p69, %p70
      %p72 = scmp.ne.s32.totalorder %s64, %s66
      %p73 = scmp.eq.s32.totalorder %s21, 1
      %p74 = por %p72, %p73
      %p75 = scmp.ne.s32.totalorder %s66, %s67
      %p76 = scmp.eq.s32.totalorder %s21, 0
      %p77 = por %p75, %p76
      %p78 = scmp.ne.s32.totalorder %s66, %s67
      %p79 = scmp.eq.s32.totalorder %s22, 1
      %p80 = por %p78, %p79
      %p82 = scmp.ne.s32.totalorder %s67, %s81
      %p83 = scmp.eq.s32.totalorder %s22, 0
      %p84 = por %p82, %p83
      %s86 = sadd.s32 %s85, 1
      %p89 = scmp.eq.s32.totalorder %s16, 1
      %p90 = scmp.ne.s32.totalorder %s85, %s87
      %p91 = scmp.eq.s32.totalorder %s16, 0
      %p92 = por %p90, %p91
      %p93 = scmp.ne.s32.totalorder %s85, %s87
      %p94 = scmp.eq.s32.totalorder %s21, 1
      %p95 = por %p93, %p94
      %p96 = scmp.ne.s32.totalorder %s87, %s88
      %p97 = scmp.eq.s32.totalorder %s21, 0
      %p98 = por %p96, %p97
      %p99 = scmp.ne.s32.totalorder %s87, %s88
      %p100 = scmp.eq.s32.totalorder %s22, 1
      %p101 = por %p99, %p100
      %p103 = scmp.ne.s32.totalorder %s88, %s102
      %p104 = scmp.eq.s32.totalorder %s22, 0
      %p105 = por %p103, %p104
      %s106 = ssub.s32 %s23, %s35
      %p107 = scmp.eq.s32.totalorder %s106, 0
      %s109 = sadd.s32 %s108, 1
      %s110 = scalar_select %p107, %s108, %s109
      %p113 = pneg %p107
      %p114 = scmp.eq.s32.totalorder %s16, 1
      %p115 = por %p113, %p114
      %p116 = scmp.ne.s32.totalorder %s108, %s111
      %p117 = scmp.eq.s32.totalorder %s16, 0
      %p118 = por %p116, %p117
      %p119 = scmp.ne.s32.totalorder %s108, %s111
      %p120 = scmp.eq.s32.totalorder %s21, 1
      %p121 = por %p119, %p120
      %p122 = scmp.ne.s32.totalorder %s111, %s112
      %p123 = scmp.eq.s32.totalorder %s21, 0
      %p124 = por %p122, %p123
      %p125 = scmp.ne.s32.totalorder %s111, %s112
      %p126 = scmp.eq.s32.totalorder %s22, 1
      %p127 = por %p125, %p126
      %p129 = scmp.ne.s32.totalorder %s112, %s128
      %p130 = scmp.eq.s32.totalorder %s22, 0
      %p131 = por %p129, %p130
      %p132 = scmp.le.s32.totalorder 1, %s16
      %p133 = scmp.lt.s32.totalorder %s16, 3
      %p134 = pnand %p132, %p133
      %p135 = pneg %p134
      // Predicated region
      $region9: #{malconv_forward.1} parent=5 // pred_check
        _
      $region10: #{malconv_forward.1} parent=5 // pred_check_branch
        %137 = sbr.rel (%p134) target = $region12
      $region11: #{malconv_forward.1} parent=5 // pred_region
        %s138 = ssub.s32 %s16, 1
        // Predicated region
        $region13: #{malconv_forward.1} parent=11 // pred_check
          %p139 = pneg %p77
        $region14: #{malconv_forward.1} parent=11 // pred_check_branch
          %141 = sbr.rel (%p139) target = $region16
        $region15: #{malconv_forward.1} parent=11 // pred_region
          %s143 = ssub.s32 65536, 65536
          %144 = vsyncadd [#allocation6], %s143
          %s145 = sshll.u32 [#allocation5], 4
          %s146 = int_to_ptr.vmem [resolvable:$true] %s145
          %151 = dma.hbm_to_vmem [thread:$0]  %s1, 65536, %s146, [#allocation6], 128, 128, 8
        $region16: #{malconv_forward.1} parent=11 // pred_fallthru
          _
        // Predicated region
        $region17: #{malconv_forward.1} parent=11 // pred_check
          %p152 = pneg %p98
        $region18: #{malconv_forward.1} parent=11 // pred_check_branch
          %154 = sbr.rel (%p152) target = $region20
        $region19: #{malconv_forward.1} parent=11 // pred_region
          %s156 = ssub.s32 32, 32
          %157 = vsyncadd [#allocation6], %s156
          %s159 = sshll.u32 [#allocation7], 4
          %s160 = int_to_ptr.vmem [resolvable:$true] %s159
          %162 = dma.hbm_to_vmem [thread:$0]  %s2, 32, %s160, [#allocation6]
        $region20: #{malconv_forward.1} parent=11 // pred_fallthru
          _
      $region12: #{malconv_forward.1} parent=5 // pred_fallthru
        _
      %p163 = scmp.lt.s32.totalorder %s16, 2
      // Predicated region
      $region21: #{malconv_forward.1} parent=5 // pred_check
        %p164 = pneg %p163
      $region22: #{malconv_forward.1} parent=5 // pred_check_branch
        %166 = sbr.rel (%p164) target = $region24
      $region23: #{malconv_forward.1} parent=5 // pred_region
        // Predicated region
        $region25: #{malconv_forward.1} parent=23 // pred_check
          %p167 = pneg %p50
        $region26: #{malconv_forward.1} parent=23 // pred_check_branch
          %169 = sbr.rel (%p167) target = $region28
        $region27: #{malconv_forward.1} parent=23 // pred_region
          %s170 = sand.u32 %s40, 1
          %s171 = scalar_lea.sflag [#allocation3], %s170
          %s172 = sand.u32 %s40, 1
          %s173 = smul.addr %s172, 64
          %s174 = scalar_lea.vmem [#allocation2], %s173
          %s176 = ssub.s32 1024, 1024
          %177 = vsyncadd %s171, %s176
          %s178 = smul.addr %s24, 32
          %s179 = smul.addr %s23, 32
          %s180 = sadd.s32 %s178, %s179
          %s181 = smul.addr %s180, 32
          %s182 = scalar_lea.hbm %s0, %s181
          %s184 = sshll.u32 %s174, 4
          %s185 = int_to_ptr.vmem [resolvable:$true] %s184
          %187 = dma.hbm_to_vmem [thread:$0]  %s182, 1024, %s185, %s171
        $region28: #{malconv_forward.1} parent=23 // pred_fallthru
          _
      $region24: #{malconv_forward.1} parent=5 // pred_fallthru
        _
      %p188 = scmp.le.s32.totalorder 1, %s16
      %p189 = scmp.lt.s32.totalorder %s16, 3
      %p190 = pnand %p188, %p189
      %p191 = pneg %p190
      // Predicated region
      $region29: #{malconv_forward.1} parent=5 // pred_check
        _
      $region30: #{malconv_forward.1} parent=5 // pred_check_branch
        %193 = sbr.rel (%p190) target = $region32
      $region31: #{malconv_forward.1} parent=5 // pred_region
        %s194 = ssub.s32 %s16, 1
        %s195 = sand.u32 %s43, 1
        %s196 = scalar_lea.sflag [#allocation3], %s195
        %s197 = sand.u32 %s43, 1
        %s198 = smul.addr %s197, 64
        %s199 = scalar_lea.vmem [#allocation2], %s198
        // Predicated region
        $region33: #{malconv_forward.1} parent=31 // pred_check
          %p200 = pneg %p56
        $region34: #{malconv_forward.1} parent=31 // pred_check_branch
          %202 = sbr.rel (%p200) target = $region36
        $region35: #{malconv_forward.1} parent=31 // pred_region
          %203 = dma.done %s196, 1024
        $region36: #{malconv_forward.1} parent=31 // pred_fallthru
          _
        // Predicated region
        $region37: #{malconv_forward.1} parent=31 // pred_check
          %p204 = pneg %p77
        $region38: #{malconv_forward.1} parent=31 // pred_check_branch
          %206 = sbr.rel (%p204) target = $region40
        $region39: #{malconv_forward.1} parent=31 // pred_region
          %207 = dma.done [#allocation6], 65536
        $region40: #{malconv_forward.1} parent=31 // pred_fallthru
          _
        // Predicated region
        $region41: #{malconv_forward.1} parent=31 // pred_check
          %p208 = pneg %p98
        $region42: #{malconv_forward.1} parent=31 // pred_check_branch
          %210 = sbr.rel (%p208) target = $region44
        $region43: #{malconv_forward.1} parent=31 // pred_region
          %211 = dma.done [#allocation6], 32
        $region44: #{malconv_forward.1} parent=31 // pred_fallthru
          _
        %s212 = sand.u32 %s43, 1
        %s213 = scalar_lea.sflag [#allocation3], %s212
        %s214 = sand.u32 %s43, 1
        %s215 = smul.addr %s214, 64
        %s216 = scalar_lea.vmem [#allocation2], %s215
        %p217 = pneg %p56
        %p218 = pneg %p53
        %p219 = pneg %p77
        %p220 = pneg %p74
        %p221 = pneg %p98
        %p222 = pneg %p95
        %p223 = pneg %p124
        %p224 = pneg %p121
        %s225 = sand.u32 %s111, 1
        %s226 = scalar_lea.sflag [#allocation4], %s225
        %s227 = sand.u32 %s111, 1
        %s228 = scalar_lea.vmem [#allocation8], %s227
        %v229 = vld [vmem:[%s199] sm:$0xff]
        %v230 = vld [vmem:[%s199 + $0x8] sm:$0xff]
        %v231 = vld [vmem:[%s199 + $0x10] sm:$0xff]
        %v232 = vld [vmem:[%s199 + $0x18] sm:$0xff]
        %v233 = vld [vmem:[%s199 + $0x20] sm:$0xff]
        %v234 = vld [vmem:[%s199 + $0x28] sm:$0xff]
        %v235 = vld [vmem:[%s199 + $0x30] sm:$0xff]
        %v236 = vld [vmem:[%s199 + $0x38] sm:$0xff]
        %v237 = vld [vmem:[#allocation5] sm:$0xff]
        %v238 = vld [vmem:[#allocation5 + $0x8] sm:$0xff]
        %v239 = vld [vmem:[#allocation5 + $0x10] sm:$0xff]
        %v240 = vld [vmem:[#allocation5 + $0x18] sm:$0xff]
        %v241 = vld [vmem:[#allocation5 + $0x20] sm:$0xff]
        %v242 = vld [vmem:[#allocation5 + $0x28] sm:$0xff]
        %v243 = vld [vmem:[#allocation5 + $0x30] sm:$0xff]
        %v244 = vld [vmem:[#allocation5 + $0x38] sm:$0xff]
        %v245 = vld [vmem:[#allocation5 + $0x40] sm:$0xff]
        %v246 = vld [vmem:[#allocation5 + $0x48] sm:$0xff]
        %v247 = vld [vmem:[#allocation5 + $0x50] sm:$0xff]
        %v248 = vld [vmem:[#allocation5 + $0x58] sm:$0xff]
        %v249 = vld [vmem:[#allocation5 + $0x60] sm:$0xff]
        %v250 = vld [vmem:[#allocation5 + $0x68] sm:$0xff]
        %v251 = vld [vmem:[#allocation5 + $0x70] sm:$0xff]
        %v252 = vld [vmem:[#allocation5 + $0x78] sm:$0xff]
        %v253 = vld [vmem:[#allocation5 + $0x80] sm:$0xff]
        %v254 = vld [vmem:[#allocation5 + $0x88] sm:$0xff]
        %v255 = vld [vmem:[#allocation5 + $0x90] sm:$0xff]
        %v256 = vld [vmem:[#allocation5 + $0x98] sm:$0xff]
        %v257 = vld [vmem:[#allocation5 + $0xa0] sm:$0xff]
        %v258 = vld [vmem:[#allocation5 + $0xa8] sm:$0xff]
        %v259 = vld [vmem:[#allocation5 + $0xb0] sm:$0xff]
        %v260 = vld [vmem:[#allocation5 + $0xb8] sm:$0xff]
        %v261 = vld [vmem:[#allocation5 + $0xc0] sm:$0xff]
        %v262 = vld [vmem:[#allocation5 + $0xc8] sm:$0xff]
        %v263 = vld [vmem:[#allocation5 + $0xd0] sm:$0xff]
        %v264 = vld [vmem:[#allocation5 + $0xd8] sm:$0xff]
        %v265 = vld [vmem:[#allocation5 + $0xe0] sm:$0xff]
        %v266 = vld [vmem:[#allocation5 + $0xe8] sm:$0xff]
        %v267 = vld [vmem:[#allocation5 + $0xf0] sm:$0xff]
        %v268 = vld [vmem:[#allocation5 + $0xf8] sm:$0xff]
        %v269 = vld [vmem:[#allocation5 + $0x100] sm:$0xff]
        %v270 = vld [vmem:[#allocation5 + $0x108] sm:$0xff]
        %v271 = vld [vmem:[#allocation5 + $0x110] sm:$0xff]
        %v272 = vld [vmem:[#allocation5 + $0x118] sm:$0xff]
        %v273 = vld [vmem:[#allocation5 + $0x120] sm:$0xff]
        %v274 = vld [vmem:[#allocation5 + $0x128] sm:$0xff]
        %v275 = vld [vmem:[#allocation5 + $0x130] sm:$0xff]
        %v276 = vld [vmem:[#allocation5 + $0x138] sm:$0xff]
        %v277 = vld [vmem:[#allocation5 + $0x140] sm:$0xff]
        %v278 = vld [vmem:[#allocation5 + $0x148] sm:$0xff]
        %v279 = vld [vmem:[#allocation5 + $0x150] sm:$0xff]
        %v280 = vld [vmem:[#allocation5 + $0x158] sm:$0xff]
        %v281 = vld [vmem:[#allocation5 + $0x160] sm:$0xff]
        %v282 = vld [vmem:[#allocation5 + $0x168] sm:$0xff]
        %v283 = vld [vmem:[#allocation5 + $0x170] sm:$0xff]
        %v284 = vld [vmem:[#allocation5 + $0x178] sm:$0xff]
        %v285 = vld [vmem:[#allocation5 + $0x180] sm:$0xff]
        %v286 = vld [vmem:[#allocation5 + $0x188] sm:$0xff]
        %v287 = vld [vmem:[#allocation5 + $0x190] sm:$0xff]
        %v288 = vld [vmem:[#allocation5 + $0x198] sm:$0xff]
        %v289 = vld [vmem:[#allocation5 + $0x1a0] sm:$0xff]
        %v290 = vld [vmem:[#allocation5 + $0x1a8] sm:$0xff]
        %v291 = vld [vmem:[#allocation5 + $0x1b0] sm:$0xff]
        %v292 = vld [vmem:[#allocation5 + $0x1b8] sm:$0xff]
        %v293 = vld [vmem:[#allocation5 + $0x1c0] sm:$0xff]
        %v294 = vld [vmem:[#allocation5 + $0x1c8] sm:$0xff]
        %v295 = vld [vmem:[#allocation5 + $0x1d0] sm:$0xff]
        %v296 = vld [vmem:[#allocation5 + $0x1d8] sm:$0xff]
        %v297 = vld [vmem:[#allocation5 + $0x1e0] sm:$0xff]
        %v298 = vld [vmem:[#allocation5 + $0x1e8] sm:$0xff]
        %v299 = vld [vmem:[#allocation5 + $0x1f0] sm:$0xff]
        %v300 = vld [vmem:[#allocation5 + $0x1f8] sm:$0xff]
        %v301 = vld [vmem:[#allocation5 + $0x200] sm:$0xff]
        %v302 = vld [vmem:[#allocation5 + $0x208] sm:$0xff]
        %v303 = vld [vmem:[#allocation5 + $0x210] sm:$0xff]
        %v304 = vld [vmem:[#allocation5 + $0x218] sm:$0xff]
        %v305 = vld [vmem:[#allocation5 + $0x220] sm:$0xff]
        %v306 = vld [vmem:[#allocation5 + $0x228] sm:$0xff]
        %v307 = vld [vmem:[#allocation5 + $0x230] sm:$0xff]
        %v308 = vld [vmem:[#allocation5 + $0x238] sm:$0xff]
        %v309 = vld [vmem:[#allocation5 + $0x240] sm:$0xff]
        %v310 = vld [vmem:[#allocation5 + $0x248] sm:$0xff]
        %v311 = vld [vmem:[#allocation5 + $0x250] sm:$0xff]
        %v312 = vld [vmem:[#allocation5 + $0x258] sm:$0xff]
        %v313 = vld [vmem:[#allocation5 + $0x260] sm:$0xff]
        %v314 = vld [vmem:[#allocation5 + $0x268] sm:$0xff]
        %v315 = vld [vmem:[#allocation5 + $0x270] sm:$0xff]
        %v316 = vld [vmem:[#allocation5 + $0x278] sm:$0xff]
        %v317 = vld [vmem:[#allocation5 + $0x280] sm:$0xff]
        %v318 = vld [vmem:[#allocation5 + $0x288] sm:$0xff]
        %v319 = vld [vmem:[#allocation5 + $0x290] sm:$0xff]
        %v320 = vld [vmem:[#allocation5 + $0x298] sm:$0xff]
        %v321 = vld [vmem:[#allocation5 + $0x2a0] sm:$0xff]
        %v322 = vld [vmem:[#allocation5 + $0x2a8] sm:$0xff]
        %v323 = vld [vmem:[#allocation5 + $0x2b0] sm:$0xff]
        %v324 = vld [vmem:[#allocation5 + $0x2b8] sm:$0xff]
        %v325 = vld [vmem:[#allocation5 + $0x2c0] sm:$0xff]
        %v326 = vld [vmem:[#allocation5 + $0x2c8] sm:$0xff]
        %v327 = vld [vmem:[#allocation5 + $0x2d0] sm:$0xff]
        %v328 = vld [vmem:[#allocation5 + $0x2d8] sm:$0xff]
        %v329 = vld [vmem:[#allocation5 + $0x2e0] sm:$0xff]
        %v330 = vld [vmem:[#allocation5 + $0x2e8] sm:$0xff]
        %v331 = vld [vmem:[#allocation5 + $0x2f0] sm:$0xff]
        %v332 = vld [vmem:[#allocation5 + $0x2f8] sm:$0xff]
        %v333 = vld [vmem:[#allocation5 + $0x300] sm:$0xff]
        %v334 = vld [vmem:[#allocation5 + $0x308] sm:$0xff]
        %v335 = vld [vmem:[#allocation5 + $0x310] sm:$0xff]
        %v336 = vld [vmem:[#allocation5 + $0x318] sm:$0xff]
        %v337 = vld [vmem:[#allocation5 + $0x320] sm:$0xff]
        %v338 = vld [vmem:[#allocation5 + $0x328] sm:$0xff]
        %v339 = vld [vmem:[#allocation5 + $0x330] sm:$0xff]
        %v340 = vld [vmem:[#allocation5 + $0x338] sm:$0xff]
        %v341 = vld [vmem:[#allocation5 + $0x340] sm:$0xff]
        %v342 = vld [vmem:[#allocation5 + $0x348] sm:$0xff]
        %v343 = vld [vmem:[#allocation5 + $0x350] sm:$0xff]
        %v344 = vld [vmem:[#allocation5 + $0x358] sm:$0xff]
        %v345 = vld [vmem:[#allocation5 + $0x360] sm:$0xff]
        %v346 = vld [vmem:[#allocation5 + $0x368] sm:$0xff]
        %v347 = vld [vmem:[#allocation5 + $0x370] sm:$0xff]
        %v348 = vld [vmem:[#allocation5 + $0x378] sm:$0xff]
        %v349 = vld [vmem:[#allocation5 + $0x380] sm:$0xff]
        %v350 = vld [vmem:[#allocation5 + $0x388] sm:$0xff]
        %v351 = vld [vmem:[#allocation5 + $0x390] sm:$0xff]
        %v352 = vld [vmem:[#allocation5 + $0x398] sm:$0xff]
        %v353 = vld [vmem:[#allocation5 + $0x3a0] sm:$0xff]
        %v354 = vld [vmem:[#allocation5 + $0x3a8] sm:$0xff]
        %v355 = vld [vmem:[#allocation5 + $0x3b0] sm:$0xff]
        %v356 = vld [vmem:[#allocation5 + $0x3b8] sm:$0xff]
        %v357 = vld [vmem:[#allocation5 + $0x3c0] sm:$0xff]
        %v358 = vld [vmem:[#allocation5 + $0x3c8] sm:$0xff]
        %v359 = vld [vmem:[#allocation5 + $0x3d0] sm:$0xff]
        %v360 = vld [vmem:[#allocation5 + $0x3d8] sm:$0xff]
        %v361 = vld [vmem:[#allocation5 + $0x3e0] sm:$0xff]
        %v362 = vld [vmem:[#allocation5 + $0x3e8] sm:$0xff]
        %v363 = vld [vmem:[#allocation5 + $0x3f0] sm:$0xff]
        %v364 = vld [vmem:[#allocation5 + $0x3f8] sm:$0xff]
        %v365 = vld [vmem:[#allocation5 + $0x400] sm:$0xff]
        %v366 = vld [vmem:[#allocation5 + $0x408] sm:$0xff]
        %v367 = vld [vmem:[#allocation5 + $0x410] sm:$0xff]
        %v368 = vld [vmem:[#allocation5 + $0x418] sm:$0xff]
        %v369 = vld [vmem:[#allocation5 + $0x420] sm:$0xff]
        %v370 = vld [vmem:[#allocation5 + $0x428] sm:$0xff]
        %v371 = vld [vmem:[#allocation5 + $0x430] sm:$0xff]
        %v372 = vld [vmem:[#allocation5 + $0x438] sm:$0xff]
        %v373 = vld [vmem:[#allocation5 + $0x440] sm:$0xff]
        %v374 = vld [vmem:[#allocation5 + $0x448] sm:$0xff]
        %v375 = vld [vmem:[#allocation5 + $0x450] sm:$0xff]
        %v376 = vld [vmem:[#allocation5 + $0x458] sm:$0xff]
        %v377 = vld [vmem:[#allocation5 + $0x460] sm:$0xff]
        %v378 = vld [vmem:[#allocation5 + $0x468] sm:$0xff]
        %v379 = vld [vmem:[#allocation5 + $0x470] sm:$0xff]
        %v380 = vld [vmem:[#allocation5 + $0x478] sm:$0xff]
        %v381 = vld [vmem:[#allocation5 + $0x480] sm:$0xff]
        %v382 = vld [vmem:[#allocation5 + $0x488] sm:$0xff]
        %v383 = vld [vmem:[#allocation5 + $0x490] sm:$0xff]
        %v384 = vld [vmem:[#allocation5 + $0x498] sm:$0xff]
        %v385 = vld [vmem:[#allocation5 + $0x4a0] sm:$0xff]
        %v386 = vld [vmem:[#allocation5 + $0x4a8] sm:$0xff]
        %v387 = vld [vmem:[#allocation5 + $0x4b0] sm:$0xff]
        %v388 = vld [vmem:[#allocation5 + $0x4b8] sm:$0xff]
        %v389 = vld [vmem:[#allocation5 + $0x4c0] sm:$0xff]
        %v390 = vld [vmem:[#allocation5 + $0x4c8] sm:$0xff]
        %v391 = vld [vmem:[#allocation5 + $0x4d0] sm:$0xff]
        %v392 = vld [vmem:[#allocation5 + $0x4d8] sm:$0xff]
        %v393 = vld [vmem:[#allocation5 + $0x4e0] sm:$0xff]
        %v394 = vld [vmem:[#allocation5 + $0x4e8] sm:$0xff]
        %v395 = vld [vmem:[#allocation5 + $0x4f0] sm:$0xff]
        %v396 = vld [vmem:[#allocation5 + $0x4f8] sm:$0xff]
        %v397 = vld [vmem:[#allocation5 + $0x500] sm:$0xff]
        %v398 = vld [vmem:[#allocation5 + $0x508] sm:$0xff]
        %v399 = vld [vmem:[#allocation5 + $0x510] sm:$0xff]
        %v400 = vld [vmem:[#allocation5 + $0x518] sm:$0xff]
        %v401 = vld [vmem:[#allocation5 + $0x520] sm:$0xff]
        %v402 = vld [vmem:[#allocation5 + $0x528] sm:$0xff]
        %v403 = vld [vmem:[#allocation5 + $0x530] sm:$0xff]
        %v404 = vld [vmem:[#allocation5 + $0x538] sm:$0xff]
        %v405 = vld [vmem:[#allocation5 + $0x540] sm:$0xff]
        %v406 = vld [vmem:[#allocation5 + $0x548] sm:$0xff]
        %v407 = vld [vmem:[#allocation5 + $0x550] sm:$0xff]
        %v408 = vld [vmem:[#allocation5 + $0x558] sm:$0xff]
        %v409 = vld [vmem:[#allocation5 + $0x560] sm:$0xff]
        %v410 = vld [vmem:[#allocation5 + $0x568] sm:$0xff]
        %v411 = vld [vmem:[#allocation5 + $0x570] sm:$0xff]
        %v412 = vld [vmem:[#allocation5 + $0x578] sm:$0xff]
        %v413 = vld [vmem:[#allocation5 + $0x580] sm:$0xff]
        %v414 = vld [vmem:[#allocation5 + $0x588] sm:$0xff]
        %v415 = vld [vmem:[#allocation5 + $0x590] sm:$0xff]
        %v416 = vld [vmem:[#allocation5 + $0x598] sm:$0xff]
        %v417 = vld [vmem:[#allocation5 + $0x5a0] sm:$0xff]
        %v418 = vld [vmem:[#allocation5 + $0x5a8] sm:$0xff]
        %v419 = vld [vmem:[#allocation5 + $0x5b0] sm:$0xff]
        %v420 = vld [vmem:[#allocation5 + $0x5b8] sm:$0xff]
        %v421 = vld [vmem:[#allocation5 + $0x5c0] sm:$0xff]
        %v422 = vld [vmem:[#allocation5 + $0x5c8] sm:$0xff]
        %v423 = vld [vmem:[#allocation5 + $0x5d0] sm:$0xff]
        %v424 = vld [vmem:[#allocation5 + $0x5d8] sm:$0xff]
        %v425 = vld [vmem:[#allocation5 + $0x5e0] sm:$0xff]
        %v426 = vld [vmem:[#allocation5 + $0x5e8] sm:$0xff]
        %v427 = vld [vmem:[#allocation5 + $0x5f0] sm:$0xff]
        %v428 = vld [vmem:[#allocation5 + $0x5f8] sm:$0xff]
        %v429 = vld [vmem:[#allocation5 + $0x600] sm:$0xff]
        %v430 = vld [vmem:[#allocation5 + $0x608] sm:$0xff]
        %v431 = vld [vmem:[#allocation5 + $0x610] sm:$0xff]
        %v432 = vld [vmem:[#allocation5 + $0x618] sm:$0xff]
        %v433 = vld [vmem:[#allocation5 + $0x620] sm:$0xff]
        %v434 = vld [vmem:[#allocation5 + $0x628] sm:$0xff]
        %v435 = vld [vmem:[#allocation5 + $0x630] sm:$0xff]
        %v436 = vld [vmem:[#allocation5 + $0x638] sm:$0xff]
        %v437 = vld [vmem:[#allocation5 + $0x640] sm:$0xff]
        %v438 = vld [vmem:[#allocation5 + $0x648] sm:$0xff]
        %v439 = vld [vmem:[#allocation5 + $0x650] sm:$0xff]
        %v440 = vld [vmem:[#allocation5 + $0x658] sm:$0xff]
        %v441 = vld [vmem:[#allocation5 + $0x660] sm:$0xff]
        %v442 = vld [vmem:[#allocation5 + $0x668] sm:$0xff]
        %v443 = vld [vmem:[#allocation5 + $0x670] sm:$0xff]
        %v444 = vld [vmem:[#allocation5 + $0x678] sm:$0xff]
        %v445 = vld [vmem:[#allocation5 + $0x680] sm:$0xff]
        %v446 = vld [vmem:[#allocation5 + $0x688] sm:$0xff]
        %v447 = vld [vmem:[#allocation5 + $0x690] sm:$0xff]
        %v448 = vld [vmem:[#allocation5 + $0x698] sm:$0xff]
        %v449 = vld [vmem:[#allocation5 + $0x6a0] sm:$0xff]
        %v450 = vld [vmem:[#allocation5 + $0x6a8] sm:$0xff]
        %v451 = vld [vmem:[#allocation5 + $0x6b0] sm:$0xff]
        %v452 = vld [vmem:[#allocation5 + $0x6b8] sm:$0xff]
        %v453 = vld [vmem:[#allocation5 + $0x6c0] sm:$0xff]
        %v454 = vld [vmem:[#allocation5 + $0x6c8] sm:$0xff]
        %v455 = vld [vmem:[#allocation5 + $0x6d0] sm:$0xff]
        %v456 = vld [vmem:[#allocation5 + $0x6d8] sm:$0xff]
        %v457 = vld [vmem:[#allocation5 + $0x6e0] sm:$0xff]
        %v458 = vld [vmem:[#allocation5 + $0x6e8] sm:$0xff]
        %v459 = vld [vmem:[#allocation5 + $0x6f0] sm:$0xff]
        %v460 = vld [vmem:[#allocation5 + $0x6f8] sm:$0xff]
        %v461 = vld [vmem:[#allocation5 + $0x700] sm:$0xff]
        %v462 = vld [vmem:[#allocation5 + $0x708] sm:$0xff]
        %v463 = vld [vmem:[#allocation5 + $0x710] sm:$0xff]
        %v464 = vld [vmem:[#allocation5 + $0x718] sm:$0xff]
        %v465 = vld [vmem:[#allocation5 + $0x720] sm:$0xff]
        %v466 = vld [vmem:[#allocation5 + $0x728] sm:$0xff]
        %v467 = vld [vmem:[#allocation5 + $0x730] sm:$0xff]
        %v468 = vld [vmem:[#allocation5 + $0x738] sm:$0xff]
        %v469 = vld [vmem:[#allocation5 + $0x740] sm:$0xff]
        %v470 = vld [vmem:[#allocation5 + $0x748] sm:$0xff]
        %v471 = vld [vmem:[#allocation5 + $0x750] sm:$0xff]
        %v472 = vld [vmem:[#allocation5 + $0x758] sm:$0xff]
        %v473 = vld [vmem:[#allocation5 + $0x760] sm:$0xff]
        %v474 = vld [vmem:[#allocation5 + $0x768] sm:$0xff]
        %v475 = vld [vmem:[#allocation5 + $0x770] sm:$0xff]
        %v476 = vld [vmem:[#allocation5 + $0x778] sm:$0xff]
        %v477 = vld [vmem:[#allocation5 + $0x780] sm:$0xff]
        %v478 = vld [vmem:[#allocation5 + $0x788] sm:$0xff]
        %v479 = vld [vmem:[#allocation5 + $0x790] sm:$0xff]
        %v480 = vld [vmem:[#allocation5 + $0x798] sm:$0xff]
        %v481 = vld [vmem:[#allocation5 + $0x7a0] sm:$0xff]
        %v482 = vld [vmem:[#allocation5 + $0x7a8] sm:$0xff]
        %v483 = vld [vmem:[#allocation5 + $0x7b0] sm:$0xff]
        %v484 = vld [vmem:[#allocation5 + $0x7b8] sm:$0xff]
        %v485 = vld [vmem:[#allocation5 + $0x7c0] sm:$0xff]
        %v486 = vld [vmem:[#allocation5 + $0x7c8] sm:$0xff]
        %v487 = vld [vmem:[#allocation5 + $0x7d0] sm:$0xff]
        %v488 = vld [vmem:[#allocation5 + $0x7d8] sm:$0xff]
        %v489 = vld [vmem:[#allocation5 + $0x7e0] sm:$0xff]
        %v490 = vld [vmem:[#allocation5 + $0x7e8] sm:$0xff]
        %v491 = vld [vmem:[#allocation5 + $0x7f0] sm:$0xff]
        %v492 = vld [vmem:[#allocation5 + $0x7f8] sm:$0xff]
        %v493 = vld [vmem:[#allocation5 + $0x800] sm:$0xff]
        %v494 = vld [vmem:[#allocation5 + $0x808] sm:$0xff]
        %v495 = vld [vmem:[#allocation5 + $0x810] sm:$0xff]
        %v496 = vld [vmem:[#allocation5 + $0x818] sm:$0xff]
        %v497 = vld [vmem:[#allocation5 + $0x820] sm:$0xff]
        %v498 = vld [vmem:[#allocation5 + $0x828] sm:$0xff]
        %v499 = vld [vmem:[#allocation5 + $0x830] sm:$0xff]
        %v500 = vld [vmem:[#allocation5 + $0x838] sm:$0xff]
        %v501 = vld [vmem:[#allocation5 + $0x840] sm:$0xff]
        %v502 = vld [vmem:[#allocation5 + $0x848] sm:$0xff]
        %v503 = vld [vmem:[#allocation5 + $0x850] sm:$0xff]
        %v504 = vld [vmem:[#allocation5 + $0x858] sm:$0xff]
        %v505 = vld [vmem:[#allocation5 + $0x860] sm:$0xff]
        %v506 = vld [vmem:[#allocation5 + $0x868] sm:$0xff]
        %v507 = vld [vmem:[#allocation5 + $0x870] sm:$0xff]
        %v508 = vld [vmem:[#allocation5 + $0x878] sm:$0xff]
        %v509 = vld [vmem:[#allocation5 + $0x880] sm:$0xff]
        %v510 = vld [vmem:[#allocation5 + $0x888] sm:$0xff]
        %v511 = vld [vmem:[#allocation5 + $0x890] sm:$0xff]
        %v512 = vld [vmem:[#allocation5 + $0x898] sm:$0xff]
        %v513 = vld [vmem:[#allocation5 + $0x8a0] sm:$0xff]
        %v514 = vld [vmem:[#allocation5 + $0x8a8] sm:$0xff]
        %v515 = vld [vmem:[#allocation5 + $0x8b0] sm:$0xff]
        %v516 = vld [vmem:[#allocation5 + $0x8b8] sm:$0xff]
        %v517 = vld [vmem:[#allocation5 + $0x8c0] sm:$0xff]
        %v518 = vld [vmem:[#allocation5 + $0x8c8] sm:$0xff]
        %v519 = vld [vmem:[#allocation5 + $0x8d0] sm:$0xff]
        %v520 = vld [vmem:[#allocation5 + $0x8d8] sm:$0xff]
        %v521 = vld [vmem:[#allocation5 + $0x8e0] sm:$0xff]
        %v522 = vld [vmem:[#allocation5 + $0x8e8] sm:$0xff]
        %v523 = vld [vmem:[#allocation5 + $0x8f0] sm:$0xff]
        %v524 = vld [vmem:[#allocation5 + $0x8f8] sm:$0xff]
        %v525 = vld [vmem:[#allocation5 + $0x900] sm:$0xff]
        %v526 = vld [vmem:[#allocation5 + $0x908] sm:$0xff]
        %v527 = vld [vmem:[#allocation5 + $0x910] sm:$0xff]
        %v528 = vld [vmem:[#allocation5 + $0x918] sm:$0xff]
        %v529 = vld [vmem:[#allocation5 + $0x920] sm:$0xff]
        %v530 = vld [vmem:[#allocation5 + $0x928] sm:$0xff]
        %v531 = vld [vmem:[#allocation5 + $0x930] sm:$0xff]
        %v532 = vld [vmem:[#allocation5 + $0x938] sm:$0xff]
        %v533 = vld [vmem:[#allocation5 + $0x940] sm:$0xff]
        %v534 = vld [vmem:[#allocation5 + $0x948] sm:$0xff]
        %v535 = vld [vmem:[#allocation5 + $0x950] sm:$0xff]
        %v536 = vld [vmem:[#allocation5 + $0x958] sm:$0xff]
        %v537 = vld [vmem:[#allocation5 + $0x960] sm:$0xff]
        %v538 = vld [vmem:[#allocation5 + $0x968] sm:$0xff]
        %v539 = vld [vmem:[#allocation5 + $0x970] sm:$0xff]
        %v540 = vld [vmem:[#allocation5 + $0x978] sm:$0xff]
        %v541 = vld [vmem:[#allocation5 + $0x980] sm:$0xff]
        %v542 = vld [vmem:[#allocation5 + $0x988] sm:$0xff]
        %v543 = vld [vmem:[#allocation5 + $0x990] sm:$0xff]
        %v544 = vld [vmem:[#allocation5 + $0x998] sm:$0xff]
        %v545 = vld [vmem:[#allocation5 + $0x9a0] sm:$0xff]
        %v546 = vld [vmem:[#allocation5 + $0x9a8] sm:$0xff]
        %v547 = vld [vmem:[#allocation5 + $0x9b0] sm:$0xff]
        %v548 = vld [vmem:[#allocation5 + $0x9b8] sm:$0xff]
        %v549 = vld [vmem:[#allocation5 + $0x9c0] sm:$0xff]
        %v550 = vld [vmem:[#allocation5 + $0x9c8] sm:$0xff]
        %v551 = vld [vmem:[#allocation5 + $0x9d0] sm:$0xff]
        %v552 = vld [vmem:[#allocation5 + $0x9d8] sm:$0xff]
        %v553 = vld [vmem:[#allocation5 + $0x9e0] sm:$0xff]
        %v554 = vld [vmem:[#allocation5 + $0x9e8] sm:$0xff]
        %v555 = vld [vmem:[#allocation5 + $0x9f0] sm:$0xff]
        %v556 = vld [vmem:[#allocation5 + $0x9f8] sm:$0xff]
        %v557 = vld [vmem:[#allocation5 + $0xa00] sm:$0xff]
        %v558 = vld [vmem:[#allocation5 + $0xa08] sm:$0xff]
        %v559 = vld [vmem:[#allocation5 + $0xa10] sm:$0xff]
        %v560 = vld [vmem:[#allocation5 + $0xa18] sm:$0xff]
        %v561 = vld [vmem:[#allocation5 + $0xa20] sm:$0xff]
        %v562 = vld [vmem:[#allocation5 + $0xa28] sm:$0xff]
        %v563 = vld [vmem:[#allocation5 + $0xa30] sm:$0xff]
        %v564 = vld [vmem:[#allocation5 + $0xa38] sm:$0xff]
        %v565 = vld [vmem:[#allocation5 + $0xa40] sm:$0xff]
        %v566 = vld [vmem:[#allocation5 + $0xa48] sm:$0xff]
        %v567 = vld [vmem:[#allocation5 + $0xa50] sm:$0xff]
        %v568 = vld [vmem:[#allocation5 + $0xa58] sm:$0xff]
        %v569 = vld [vmem:[#allocation5 + $0xa60] sm:$0xff]
        %v570 = vld [vmem:[#allocation5 + $0xa68] sm:$0xff]
        %v571 = vld [vmem:[#allocation5 + $0xa70] sm:$0xff]
        %v572 = vld [vmem:[#allocation5 + $0xa78] sm:$0xff]
        %v573 = vld [vmem:[#allocation5 + $0xa80] sm:$0xff]
        %v574 = vld [vmem:[#allocation5 + $0xa88] sm:$0xff]
        %v575 = vld [vmem:[#allocation5 + $0xa90] sm:$0xff]
        %v576 = vld [vmem:[#allocation5 + $0xa98] sm:$0xff]
        %v577 = vld [vmem:[#allocation5 + $0xaa0] sm:$0xff]
        %v578 = vld [vmem:[#allocation5 + $0xaa8] sm:$0xff]
        %v579 = vld [vmem:[#allocation5 + $0xab0] sm:$0xff]
        %v580 = vld [vmem:[#allocation5 + $0xab8] sm:$0xff]
        %v581 = vld [vmem:[#allocation5 + $0xac0] sm:$0xff]
        %v582 = vld [vmem:[#allocation5 + $0xac8] sm:$0xff]
        %v583 = vld [vmem:[#allocation5 + $0xad0] sm:$0xff]
        %v584 = vld [vmem:[#allocation5 + $0xad8] sm:$0xff]
        %v585 = vld [vmem:[#allocation5 + $0xae0] sm:$0xff]
        %v586 = vld [vmem:[#allocation5 + $0xae8] sm:$0xff]
        %v587 = vld [vmem:[#allocation5 + $0xaf0] sm:$0xff]
        %v588 = vld [vmem:[#allocation5 + $0xaf8] sm:$0xff]
        %v589 = vld [vmem:[#allocation5 + $0xb00] sm:$0xff]
        %v590 = vld [vmem:[#allocation5 + $0xb08] sm:$0xff]
        %v591 = vld [vmem:[#allocation5 + $0xb10] sm:$0xff]
        %v592 = vld [vmem:[#allocation5 + $0xb18] sm:$0xff]
        %v593 = vld [vmem:[#allocation5 + $0xb20] sm:$0xff]
        %v594 = vld [vmem:[#allocation5 + $0xb28] sm:$0xff]
        %v595 = vld [vmem:[#allocation5 + $0xb30] sm:$0xff]
        %v596 = vld [vmem:[#allocation5 + $0xb38] sm:$0xff]
        %v597 = vld [vmem:[#allocation5 + $0xb40] sm:$0xff]
        %v598 = vld [vmem:[#allocation5 + $0xb48] sm:$0xff]
        %v599 = vld [vmem:[#allocation5 + $0xb50] sm:$0xff]
        %v600 = vld [vmem:[#allocation5 + $0xb58] sm:$0xff]
        %v601 = vld [vmem:[#allocation5 + $0xb60] sm:$0xff]
        %v602 = vld [vmem:[#allocation5 + $0xb68] sm:$0xff]
        %v603 = vld [vmem:[#allocation5 + $0xb70] sm:$0xff]
        %v604 = vld [vmem:[#allocation5 + $0xb78] sm:$0xff]
        %v605 = vld [vmem:[#allocation5 + $0xb80] sm:$0xff]
        %v606 = vld [vmem:[#allocation5 + $0xb88] sm:$0xff]
        %v607 = vld [vmem:[#allocation5 + $0xb90] sm:$0xff]
        %v608 = vld [vmem:[#allocation5 + $0xb98] sm:$0xff]
        %v609 = vld [vmem:[#allocation5 + $0xba0] sm:$0xff]
        %v610 = vld [vmem:[#allocation5 + $0xba8] sm:$0xff]
        %v611 = vld [vmem:[#allocation5 + $0xbb0] sm:$0xff]
        %v612 = vld [vmem:[#allocation5 + $0xbb8] sm:$0xff]
        %v613 = vld [vmem:[#allocation5 + $0xbc0] sm:$0xff]
        %v614 = vld [vmem:[#allocation5 + $0xbc8] sm:$0xff]
        %v615 = vld [vmem:[#allocation5 + $0xbd0] sm:$0xff]
        %v616 = vld [vmem:[#allocation5 + $0xbd8] sm:$0xff]
        %v617 = vld [vmem:[#allocation5 + $0xbe0] sm:$0xff]
        %v618 = vld [vmem:[#allocation5 + $0xbe8] sm:$0xff]
        %v619 = vld [vmem:[#allocation5 + $0xbf0] sm:$0xff]
        %v620 = vld [vmem:[#allocation5 + $0xbf8] sm:$0xff]
        %v621 = vld [vmem:[#allocation5 + $0xc00] sm:$0xff]
        %v622 = vld [vmem:[#allocation5 + $0xc08] sm:$0xff]
        %v623 = vld [vmem:[#allocation5 + $0xc10] sm:$0xff]
        %v624 = vld [vmem:[#allocation5 + $0xc18] sm:$0xff]
        %v625 = vld [vmem:[#allocation5 + $0xc20] sm:$0xff]
        %v626 = vld [vmem:[#allocation5 + $0xc28] sm:$0xff]
        %v627 = vld [vmem:[#allocation5 + $0xc30] sm:$0xff]
        %v628 = vld [vmem:[#allocation5 + $0xc38] sm:$0xff]
        %v629 = vld [vmem:[#allocation5 + $0xc40] sm:$0xff]
        %v630 = vld [vmem:[#allocation5 + $0xc48] sm:$0xff]
        %v631 = vld [vmem:[#allocation5 + $0xc50] sm:$0xff]
        %v632 = vld [vmem:[#allocation5 + $0xc58] sm:$0xff]
        %v633 = vld [vmem:[#allocation5 + $0xc60] sm:$0xff]
        %v634 = vld [vmem:[#allocation5 + $0xc68] sm:$0xff]
        %v635 = vld [vmem:[#allocation5 + $0xc70] sm:$0xff]
        %v636 = vld [vmem:[#allocation5 + $0xc78] sm:$0xff]
        %v637 = vld [vmem:[#allocation5 + $0xc80] sm:$0xff]
        %v638 = vld [vmem:[#allocation5 + $0xc88] sm:$0xff]
        %v639 = vld [vmem:[#allocation5 + $0xc90] sm:$0xff]
        %v640 = vld [vmem:[#allocation5 + $0xc98] sm:$0xff]
        %v641 = vld [vmem:[#allocation5 + $0xca0] sm:$0xff]
        %v642 = vld [vmem:[#allocation5 + $0xca8] sm:$0xff]
        %v643 = vld [vmem:[#allocation5 + $0xcb0] sm:$0xff]
        %v644 = vld [vmem:[#allocation5 + $0xcb8] sm:$0xff]
        %v645 = vld [vmem:[#allocation5 + $0xcc0] sm:$0xff]
        %v646 = vld [vmem:[#allocation5 + $0xcc8] sm:$0xff]
        %v647 = vld [vmem:[#allocation5 + $0xcd0] sm:$0xff]
        %v648 = vld [vmem:[#allocation5 + $0xcd8] sm:$0xff]
        %v649 = vld [vmem:[#allocation5 + $0xce0] sm:$0xff]
        %v650 = vld [vmem:[#allocation5 + $0xce8] sm:$0xff]
        %v651 = vld [vmem:[#allocation5 + $0xcf0] sm:$0xff]
        %v652 = vld [vmem:[#allocation5 + $0xcf8] sm:$0xff]
        %v653 = vld [vmem:[#allocation5 + $0xd00] sm:$0xff]
        %v654 = vld [vmem:[#allocation5 + $0xd08] sm:$0xff]
        %v655 = vld [vmem:[#allocation5 + $0xd10] sm:$0xff]
        %v656 = vld [vmem:[#allocation5 + $0xd18] sm:$0xff]
        %v657 = vld [vmem:[#allocation5 + $0xd20] sm:$0xff]
        %v658 = vld [vmem:[#allocation5 + $0xd28] sm:$0xff]
        %v659 = vld [vmem:[#allocation5 + $0xd30] sm:$0xff]
        %v660 = vld [vmem:[#allocation5 + $0xd38] sm:$0xff]
        %v661 = vld [vmem:[#allocation5 + $0xd40] sm:$0xff]
        %v662 = vld [vmem:[#allocation5 + $0xd48] sm:$0xff]
        %v663 = vld [vmem:[#allocation5 + $0xd50] sm:$0xff]
        %v664 = vld [vmem:[#allocation5 + $0xd58] sm:$0xff]
        %v665 = vld [vmem:[#allocation5 + $0xd60] sm:$0xff]
        %v666 = vld [vmem:[#allocation5 + $0xd68] sm:$0xff]
        %v667 = vld [vmem:[#allocation5 + $0xd70] sm:$0xff]
        %v668 = vld [vmem:[#allocation5 + $0xd78] sm:$0xff]
        %v669 = vld [vmem:[#allocation5 + $0xd80] sm:$0xff]
        %v670 = vld [vmem:[#allocation5 + $0xd88] sm:$0xff]
        %v671 = vld [vmem:[#allocation5 + $0xd90] sm:$0xff]
        %v672 = vld [vmem:[#allocation5 + $0xd98] sm:$0xff]
        %v673 = vld [vmem:[#allocation5 + $0xda0] sm:$0xff]
        %v674 = vld [vmem:[#allocation5 + $0xda8] sm:$0xff]
        %v675 = vld [vmem:[#allocation5 + $0xdb0] sm:$0xff]
        %v676 = vld [vmem:[#allocation5 + $0xdb8] sm:$0xff]
        %v677 = vld [vmem:[#allocation5 + $0xdc0] sm:$0xff]
        %v678 = vld [vmem:[#allocation5 + $0xdc8] sm:$0xff]
        %v679 = vld [vmem:[#allocation5 + $0xdd0] sm:$0xff]
        %v680 = vld [vmem:[#allocation5 + $0xdd8] sm:$0xff]
        %v681 = vld [vmem:[#allocation5 + $0xde0] sm:$0xff]
        %v682 = vld [vmem:[#allocation5 + $0xde8] sm:$0xff]
        %v683 = vld [vmem:[#allocation5 + $0xdf0] sm:$0xff]
        %v684 = vld [vmem:[#allocation5 + $0xdf8] sm:$0xff]
        %v685 = vld [vmem:[#allocation5 + $0xe00] sm:$0xff]
        %v686 = vld [vmem:[#allocation5 + $0xe08] sm:$0xff]
        %v687 = vld [vmem:[#allocation5 + $0xe10] sm:$0xff]
        %v688 = vld [vmem:[#allocation5 + $0xe18] sm:$0xff]
        %v689 = vld [vmem:[#allocation5 + $0xe20] sm:$0xff]
        %v690 = vld [vmem:[#allocation5 + $0xe28] sm:$0xff]
        %v691 = vld [vmem:[#allocation5 + $0xe30] sm:$0xff]
        %v692 = vld [vmem:[#allocation5 + $0xe38] sm:$0xff]
        %v693 = vld [vmem:[#allocation5 + $0xe40] sm:$0xff]
        %v694 = vld [vmem:[#allocation5 + $0xe48] sm:$0xff]
        %v695 = vld [vmem:[#allocation5 + $0xe50] sm:$0xff]
        %v696 = vld [vmem:[#allocation5 + $0xe58] sm:$0xff]
        %v697 = vld [vmem:[#allocation5 + $0xe60] sm:$0xff]
        %v698 = vld [vmem:[#allocation5 + $0xe68] sm:$0xff]
        %v699 = vld [vmem:[#allocation5 + $0xe70] sm:$0xff]
        %v700 = vld [vmem:[#allocation5 + $0xe78] sm:$0xff]
        %v701 = vld [vmem:[#allocation5 + $0xe80] sm:$0xff]
        %v702 = vld [vmem:[#allocation5 + $0xe88] sm:$0xff]
        %v703 = vld [vmem:[#allocation5 + $0xe90] sm:$0xff]
        %v704 = vld [vmem:[#allocation5 + $0xe98] sm:$0xff]
        %v705 = vld [vmem:[#allocation5 + $0xea0] sm:$0xff]
        %v706 = vld [vmem:[#allocation5 + $0xea8] sm:$0xff]
        %v707 = vld [vmem:[#allocation5 + $0xeb0] sm:$0xff]
        %v708 = vld [vmem:[#allocation5 + $0xeb8] sm:$0xff]
        %v709 = vld [vmem:[#allocation5 + $0xec0] sm:$0xff]
        %v710 = vld [vmem:[#allocation5 + $0xec8] sm:$0xff]
        %v711 = vld [vmem:[#allocation5 + $0xed0] sm:$0xff]
        %v712 = vld [vmem:[#allocation5 + $0xed8] sm:$0xff]
        %v713 = vld [vmem:[#allocation5 + $0xee0] sm:$0xff]
        %v714 = vld [vmem:[#allocation5 + $0xee8] sm:$0xff]
        %v715 = vld [vmem:[#allocation5 + $0xef0] sm:$0xff]
        %v716 = vld [vmem:[#allocation5 + $0xef8] sm:$0xff]
        %v717 = vld [vmem:[#allocation5 + $0xf00] sm:$0xff]
        %v718 = vld [vmem:[#allocation5 + $0xf08] sm:$0xff]
        %v719 = vld [vmem:[#allocation5 + $0xf10] sm:$0xff]
        %v720 = vld [vmem:[#allocation5 + $0xf18] sm:$0xff]
        %v721 = vld [vmem:[#allocation5 + $0xf20] sm:$0xff]
        %v722 = vld [vmem:[#allocation5 + $0xf28] sm:$0xff]
        %v723 = vld [vmem:[#allocation5 + $0xf30] sm:$0xff]
        %v724 = vld [vmem:[#allocation5 + $0xf38] sm:$0xff]
        %v725 = vld [vmem:[#allocation5 + $0xf40] sm:$0xff]
        %v726 = vld [vmem:[#allocation5 + $0xf48] sm:$0xff]
        %v727 = vld [vmem:[#allocation5 + $0xf50] sm:$0xff]
        %v728 = vld [vmem:[#allocation5 + $0xf58] sm:$0xff]
        %v729 = vld [vmem:[#allocation5 + $0xf60] sm:$0xff]
        %v730 = vld [vmem:[#allocation5 + $0xf68] sm:$0xff]
        %v731 = vld [vmem:[#allocation5 + $0xf70] sm:$0xff]
        %v732 = vld [vmem:[#allocation5 + $0xf78] sm:$0xff]
        %v733 = vld [vmem:[#allocation5 + $0xf80] sm:$0xff]
        %v734 = vld [vmem:[#allocation5 + $0xf88] sm:$0xff]
        %v735 = vld [vmem:[#allocation5 + $0xf90] sm:$0xff]
        %v736 = vld [vmem:[#allocation5 + $0xf98] sm:$0xff]
        %v737 = vld [vmem:[#allocation5 + $0xfa0] sm:$0xff]
        %v738 = vld [vmem:[#allocation5 + $0xfa8] sm:$0xff]
        %v739 = vld [vmem:[#allocation5 + $0xfb0] sm:$0xff]
        %v740 = vld [vmem:[#allocation5 + $0xfb8] sm:$0xff]
        %v741 = vld [vmem:[#allocation5 + $0xfc0] sm:$0xff]
        %v742 = vld [vmem:[#allocation5 + $0xfc8] sm:$0xff]
        %v743 = vld [vmem:[#allocation5 + $0xfd0] sm:$0xff]
        %v744 = vld [vmem:[#allocation5 + $0xfd8] sm:$0xff]
        %v745 = vld [vmem:[#allocation5 + $0xfe0] sm:$0xff]
        %v746 = vld [vmem:[#allocation5 + $0xfe8] sm:$0xff]
        %v747 = vld [vmem:[#allocation5 + $0xff0] sm:$0xff]
        %v748 = vld [vmem:[#allocation5 + $0xff8] sm:$0xff]
        %v749 = vld [vmem:[#allocation7] sm:$0x3]
        %v751 = vlaneseq
        %v752 = vshrl.u32 %v751, 7
        %v753 = vsub.s32 0, %v752
        %v754 = vrot.slane %v749, %v753
        %v755 = vlaneseq
        %v756 = vshrl.u32 %v755, 7
        %v757 = vsub.s32 1, %v756
        %v758 = vrot.slane %v749, %v757
        %v769 = vcombine.high %v229, %v229
        %v771 = vunpack.c.l.s4 1983009808
        %v772 = vunpack.c.0.s8 %v771
        %v773 = vlaneseq
        %v774 = vshrl.u32 %v773, 7
        %v775 = vsub.s32 %v772, %v774
        %v776 = vrot.slane %v229, %v775
        %v778 = vunpack.c.l.s4 1983009808
        %v779 = vunpack.c.0.s8 %v778
        %v780 = vlaneseq
        %v781 = vshrl.u32 %v780, 7
        %v782 = vsub.s32 %v779, %v781
        %v783 = vrot.slane %v769, %v782
        %v784 = vcombine.high %v776, %v776
        %v785 = vcombine.high %v783, %v783
        %v786 = vcombine.high %v230, %v230
        %v788 = vunpack.c.l.s4 1983009808
        %v789 = vunpack.c.0.s8 %v788
        %v790 = vlaneseq
        %v791 = vshrl.u32 %v790, 7
        %v792 = vsub.s32 %v789, %v791
        %v793 = vrot.slane %v230, %v792
        %v795 = vunpack.c.l.s4 1983009808
        %v796 = vunpack.c.0.s8 %v795
        %v797 = vlaneseq
        %v798 = vshrl.u32 %v797, 7
        %v799 = vsub.s32 %v796, %v798
        %v800 = vrot.slane %v786, %v799
        %v801 = vcombine.high %v793, %v793
        %v802 = vcombine.high %v800, %v800
        %v803 = vcombine.high %v231, %v231
        %v805 = vunpack.c.l.s4 1983009808
        %v806 = vunpack.c.0.s8 %v805
        %v807 = vlaneseq
        %v808 = vshrl.u32 %v807, 7
        %v809 = vsub.s32 %v806, %v808
        %v810 = vrot.slane %v231, %v809
        %v812 = vunpack.c.l.s4 1983009808
        %v813 = vunpack.c.0.s8 %v812
        %v814 = vlaneseq
        %v815 = vshrl.u32 %v814, 7
        %v816 = vsub.s32 %v813, %v815
        %v817 = vrot.slane %v803, %v816
        %v818 = vcombine.high %v810, %v810
        %v819 = vcombine.high %v817, %v817
        %v820 = vcombine.high %v232, %v232
        %v822 = vunpack.c.l.s4 1983009808
        %v823 = vunpack.c.0.s8 %v822
        %v824 = vlaneseq
        %v825 = vshrl.u32 %v824, 7
        %v826 = vsub.s32 %v823, %v825
        %v827 = vrot.slane %v232, %v826
        %v829 = vunpack.c.l.s4 1983009808
        %v830 = vunpack.c.0.s8 %v829
        %v831 = vlaneseq
        %v832 = vshrl.u32 %v831, 7
        %v833 = vsub.s32 %v830, %v832
        %v834 = vrot.slane %v820, %v833
        %v835 = vcombine.high %v827, %v827
        %v836 = vcombine.high %v834, %v834
        %v837 = vcombine.high %v233, %v233
        %v839 = vunpack.c.l.s4 1983009808
        %v840 = vunpack.c.0.s8 %v839
        %v841 = vlaneseq
        %v842 = vshrl.u32 %v841, 7
        %v843 = vsub.s32 %v840, %v842
        %v844 = vrot.slane %v233, %v843
        %v846 = vunpack.c.l.s4 1983009808
        %v847 = vunpack.c.0.s8 %v846
        %v848 = vlaneseq
        %v849 = vshrl.u32 %v848, 7
        %v850 = vsub.s32 %v847, %v849
        %v851 = vrot.slane %v837, %v850
        %v852 = vcombine.high %v844, %v844
        %v853 = vcombine.high %v851, %v851
        %v854 = vcombine.high %v234, %v234
        %v856 = vunpack.c.l.s4 1983009808
        %v857 = vunpack.c.0.s8 %v856
        %v858 = vlaneseq
        %v859 = vshrl.u32 %v858, 7
        %v860 = vsub.s32 %v857, %v859
        %v861 = vrot.slane %v234, %v860
        %v863 = vunpack.c.l.s4 1983009808
        %v864 = vunpack.c.0.s8 %v863
        %v865 = vlaneseq
        %v866 = vshrl.u32 %v865, 7
        %v867 = vsub.s32 %v864, %v866
        %v868 = vrot.slane %v854, %v867
        %v869 = vcombine.high %v861, %v861
        %v870 = vcombine.high %v868, %v868
        %v871 = vcombine.high %v235, %v235
        %v873 = vunpack.c.l.s4 1983009808
        %v874 = vunpack.c.0.s8 %v873
        %v875 = vlaneseq
        %v876 = vshrl.u32 %v875, 7
        %v877 = vsub.s32 %v874, %v876
        %v878 = vrot.slane %v235, %v877
        %v880 = vunpack.c.l.s4 1983009808
        %v881 = vunpack.c.0.s8 %v880
        %v882 = vlaneseq
        %v883 = vshrl.u32 %v882, 7
        %v884 = vsub.s32 %v881, %v883
        %v885 = vrot.slane %v871, %v884
        %v886 = vcombine.high %v878, %v878
        %v887 = vcombine.high %v885, %v885
        %v888 = vcombine.high %v236, %v236
        %v890 = vunpack.c.l.s4 1983009808
        %v891 = vunpack.c.0.s8 %v890
        %v892 = vlaneseq
        %v893 = vshrl.u32 %v892, 7
        %v894 = vsub.s32 %v891, %v893
        %v895 = vrot.slane %v236, %v894
        %v897 = vunpack.c.l.s4 1983009808
        %v898 = vunpack.c.0.s8 %v897
        %v899 = vlaneseq
        %v900 = vshrl.u32 %v899, 7
        %v901 = vsub.s32 %v898, %v900
        %v902 = vrot.slane %v888, %v901
        %v903 = vcombine.high %v895, %v895
        %v904 = vcombine.high %v902, %v902
        %v1449 = vunpack.c.l.b16 %v237
        %v1450 = vunpack.c.h.b16 %v237
        %v1451 = vunpack.c.l.b16 %v238
        %v1452 = vunpack.c.h.b16 %v238
        %v1453 = vunpack.c.l.b16 %v239
        %v1454 = vunpack.c.h.b16 %v239
        %v1455 = vunpack.c.l.b16 %v240
        %v1456 = vunpack.c.h.b16 %v240
        %v1457 = vunpack.c.l.b16 %v241
        %v1458 = vunpack.c.h.b16 %v241
        %v1459 = vunpack.c.l.b16 %v242
        %v1460 = vunpack.c.h.b16 %v242
        %v1461 = vunpack.c.l.b16 %v243
        %v1462 = vunpack.c.h.b16 %v243
        %v1463 = vunpack.c.l.b16 %v244
        %v1464 = vunpack.c.h.b16 %v244
        %v1465 = vunpack.c.l.b16 %v245
        %v1466 = vunpack.c.h.b16 %v245
        %v1467 = vunpack.c.l.b16 %v246
        %v1468 = vunpack.c.h.b16 %v246
        %v1469 = vunpack.c.l.b16 %v247
        %v1470 = vunpack.c.h.b16 %v247
        %v1471 = vunpack.c.l.b16 %v248
        %v1472 = vunpack.c.h.b16 %v248
        %v1473 = vunpack.c.l.b16 %v249
        %v1474 = vunpack.c.h.b16 %v249
        %v1475 = vunpack.c.l.b16 %v250
        %v1476 = vunpack.c.h.b16 %v250
        %v1477 = vunpack.c.l.b16 %v251
        %v1478 = vunpack.c.h.b16 %v251
        %v1479 = vunpack.c.l.b16 %v252
        %v1480 = vunpack.c.h.b16 %v252
        %v1481 = vunpack.c.l.b16 %v253
        %v1482 = vunpack.c.h.b16 %v253
        %v1483 = vunpack.c.l.b16 %v254
        %v1484 = vunpack.c.h.b16 %v254
        %v1485 = vunpack.c.l.b16 %v255
        %v1486 = vunpack.c.h.b16 %v255
        %v1487 = vunpack.c.l.b16 %v256
        %v1488 = vunpack.c.h.b16 %v256
        %v1489 = vunpack.c.l.b16 %v257
        %v1490 = vunpack.c.h.b16 %v257
        %v1491 = vunpack.c.l.b16 %v258
        %v1492 = vunpack.c.h.b16 %v258
        %v1493 = vunpack.c.l.b16 %v259
        %v1494 = vunpack.c.h.b16 %v259
        %v1495 = vunpack.c.l.b16 %v260
        %v1496 = vunpack.c.h.b16 %v260
        %v1497 = vunpack.c.l.b16 %v261
        %v1498 = vunpack.c.h.b16 %v261
        %v1499 = vunpack.c.l.b16 %v262
        %v1500 = vunpack.c.h.b16 %v262
        %v1501 = vunpack.c.l.b16 %v263
        %v1502 = vunpack.c.h.b16 %v263
        %v1503 = vunpack.c.l.b16 %v264
        %v1504 = vunpack.c.h.b16 %v264
        %v1505 = vunpack.c.l.b16 %v265
        %v1506 = vunpack.c.h.b16 %v265
        %v1507 = vunpack.c.l.b16 %v266
        %v1508 = vunpack.c.h.b16 %v266
        %v1509 = vunpack.c.l.b16 %v267
        %v1510 = vunpack.c.h.b16 %v267
        %v1511 = vunpack.c.l.b16 %v268
        %v1512 = vunpack.c.h.b16 %v268
        %v1513 = vunpack.c.l.b16 %v269
        %v1514 = vunpack.c.h.b16 %v269
        %v1515 = vunpack.c.l.b16 %v270
        %v1516 = vunpack.c.h.b16 %v270
        %v1517 = vunpack.c.l.b16 %v271
        %v1518 = vunpack.c.h.b16 %v271
        %v1519 = vunpack.c.l.b16 %v272
        %v1520 = vunpack.c.h.b16 %v272
        %v1521 = vunpack.c.l.b16 %v273
        %v1522 = vunpack.c.h.b16 %v273
        %v1523 = vunpack.c.l.b16 %v274
        %v1524 = vunpack.c.h.b16 %v274
        %v1525 = vunpack.c.l.b16 %v275
        %v1526 = vunpack.c.h.b16 %v275
        %v1527 = vunpack.c.l.b16 %v276
        %v1528 = vunpack.c.h.b16 %v276
        %v1529 = vunpack.c.l.b16 %v277
        %v1530 = vunpack.c.h.b16 %v277
        %v1531 = vunpack.c.l.b16 %v278
        %v1532 = vunpack.c.h.b16 %v278
        %v1533 = vunpack.c.l.b16 %v279
        %v1534 = vunpack.c.h.b16 %v279
        %v1535 = vunpack.c.l.b16 %v280
        %v1536 = vunpack.c.h.b16 %v280
        %v1537 = vunpack.c.l.b16 %v281
        %v1538 = vunpack.c.h.b16 %v281
        %v1539 = vunpack.c.l.b16 %v282
        %v1540 = vunpack.c.h.b16 %v282
        %v1541 = vunpack.c.l.b16 %v283
        %v1542 = vunpack.c.h.b16 %v283
        %v1543 = vunpack.c.l.b16 %v284
        %v1544 = vunpack.c.h.b16 %v284
        %v1545 = vunpack.c.l.b16 %v285
        %v1546 = vunpack.c.h.b16 %v285
        %v1547 = vunpack.c.l.b16 %v286
        %v1548 = vunpack.c.h.b16 %v286
        %v1549 = vunpack.c.l.b16 %v287
        %v1550 = vunpack.c.h.b16 %v287
        %v1551 = vunpack.c.l.b16 %v288
        %v1552 = vunpack.c.h.b16 %v288
        %v1553 = vunpack.c.l.b16 %v289
        %v1554 = vunpack.c.h.b16 %v289
        %v1555 = vunpack.c.l.b16 %v290
        %v1556 = vunpack.c.h.b16 %v290
        %v1557 = vunpack.c.l.b16 %v291
        %v1558 = vunpack.c.h.b16 %v291
        %v1559 = vunpack.c.l.b16 %v292
        %v1560 = vunpack.c.h.b16 %v292
        %v1561 = vunpack.c.l.b16 %v293
        %v1562 = vunpack.c.h.b16 %v293
        %v1563 = vunpack.c.l.b16 %v294
        %v1564 = vunpack.c.h.b16 %v294
        %v1565 = vunpack.c.l.b16 %v295
        %v1566 = vunpack.c.h.b16 %v295
        %v1567 = vunpack.c.l.b16 %v296
        %v1568 = vunpack.c.h.b16 %v296
        %v1569 = vunpack.c.l.b16 %v297
        %v1570 = vunpack.c.h.b16 %v297
        %v1571 = vunpack.c.l.b16 %v298
        %v1572 = vunpack.c.h.b16 %v298
        %v1573 = vunpack.c.l.b16 %v299
        %v1574 = vunpack.c.h.b16 %v299
        %v1575 = vunpack.c.l.b16 %v300
        %v1576 = vunpack.c.h.b16 %v300
        %v1577 = vunpack.c.l.b16 %v301
        %v1578 = vunpack.c.h.b16 %v301
        %v1579 = vunpack.c.l.b16 %v302
        %v1580 = vunpack.c.h.b16 %v302
        %v1581 = vunpack.c.l.b16 %v303
        %v1582 = vunpack.c.h.b16 %v303
        %v1583 = vunpack.c.l.b16 %v304
        %v1584 = vunpack.c.h.b16 %v304
        %v1585 = vunpack.c.l.b16 %v305
        %v1586 = vunpack.c.h.b16 %v305
        %v1587 = vunpack.c.l.b16 %v306
        %v1588 = vunpack.c.h.b16 %v306
        %v1589 = vunpack.c.l.b16 %v307
        %v1590 = vunpack.c.h.b16 %v307
        %v1591 = vunpack.c.l.b16 %v308
        %v1592 = vunpack.c.h.b16 %v308
        %v1593 = vunpack.c.l.b16 %v309
        %v1594 = vunpack.c.h.b16 %v309
        %v1595 = vunpack.c.l.b16 %v310
        %v1596 = vunpack.c.h.b16 %v310
        %v1597 = vunpack.c.l.b16 %v311
        %v1598 = vunpack.c.h.b16 %v311
        %v1599 = vunpack.c.l.b16 %v312
        %v1600 = vunpack.c.h.b16 %v312
        %v1601 = vunpack.c.l.b16 %v313
        %v1602 = vunpack.c.h.b16 %v313
        %v1603 = vunpack.c.l.b16 %v314
        %v1604 = vunpack.c.h.b16 %v314
        %v1605 = vunpack.c.l.b16 %v315
        %v1606 = vunpack.c.h.b16 %v315
        %v1607 = vunpack.c.l.b16 %v316
        %v1608 = vunpack.c.h.b16 %v316
        %v1609 = vunpack.c.l.b16 %v317
        %v1610 = vunpack.c.h.b16 %v317
        %v1611 = vunpack.c.l.b16 %v318
        %v1612 = vunpack.c.h.b16 %v318
        %v1613 = vunpack.c.l.b16 %v319
        %v1614 = vunpack.c.h.b16 %v319
        %v1615 = vunpack.c.l.b16 %v320
        %v1616 = vunpack.c.h.b16 %v320
        %v1617 = vunpack.c.l.b16 %v321
        %v1618 = vunpack.c.h.b16 %v321
        %v1619 = vunpack.c.l.b16 %v322
        %v1620 = vunpack.c.h.b16 %v322
        %v1621 = vunpack.c.l.b16 %v323
        %v1622 = vunpack.c.h.b16 %v323
        %v1623 = vunpack.c.l.b16 %v324
        %v1624 = vunpack.c.h.b16 %v324
        %v1625 = vunpack.c.l.b16 %v325
        %v1626 = vunpack.c.h.b16 %v325
        %v1627 = vunpack.c.l.b16 %v326
        %v1628 = vunpack.c.h.b16 %v326
        %v1629 = vunpack.c.l.b16 %v327
        %v1630 = vunpack.c.h.b16 %v327
        %v1631 = vunpack.c.l.b16 %v328
        %v1632 = vunpack.c.h.b16 %v328
        %v1633 = vunpack.c.l.b16 %v329
        %v1634 = vunpack.c.h.b16 %v329
        %v1635 = vunpack.c.l.b16 %v330
        %v1636 = vunpack.c.h.b16 %v330
        %v1637 = vunpack.c.l.b16 %v331
        %v1638 = vunpack.c.h.b16 %v331
        %v1639 = vunpack.c.l.b16 %v332
        %v1640 = vunpack.c.h.b16 %v332
        %v1641 = vunpack.c.l.b16 %v333
        %v1642 = vunpack.c.h.b16 %v333
        %v1643 = vunpack.c.l.b16 %v334
        %v1644 = vunpack.c.h.b16 %v334
        %v1645 = vunpack.c.l.b16 %v335
        %v1646 = vunpack.c.h.b16 %v335
        %v1647 = vunpack.c.l.b16 %v336
        %v1648 = vunpack.c.h.b16 %v336
        %v1649 = vunpack.c.l.b16 %v337
        %v1650 = vunpack.c.h.b16 %v337
        %v1651 = vunpack.c.l.b16 %v338
        %v1652 = vunpack.c.h.b16 %v338
        %v1653 = vunpack.c.l.b16 %v339
        %v1654 = vunpack.c.h.b16 %v339
        %v1655 = vunpack.c.l.b16 %v340
        %v1656 = vunpack.c.h.b16 %v340
        %v1657 = vunpack.c.l.b16 %v341
        %v1658 = vunpack.c.h.b16 %v341
        %v1659 = vunpack.c.l.b16 %v342
        %v1660 = vunpack.c.h.b16 %v342
        %v1661 = vunpack.c.l.b16 %v343
        %v1662 = vunpack.c.h.b16 %v343
        %v1663 = vunpack.c.l.b16 %v344
        %v1664 = vunpack.c.h.b16 %v344
        %v1665 = vunpack.c.l.b16 %v345
        %v1666 = vunpack.c.h.b16 %v345
        %v1667 = vunpack.c.l.b16 %v346
        %v1668 = vunpack.c.h.b16 %v346
        %v1669 = vunpack.c.l.b16 %v347
        %v1670 = vunpack.c.h.b16 %v347
        %v1671 = vunpack.c.l.b16 %v348
        %v1672 = vunpack.c.h.b16 %v348
        %v1673 = vunpack.c.l.b16 %v349
        %v1674 = vunpack.c.h.b16 %v349
        %v1675 = vunpack.c.l.b16 %v350
        %v1676 = vunpack.c.h.b16 %v350
        %v1677 = vunpack.c.l.b16 %v351
        %v1678 = vunpack.c.h.b16 %v351
        %v1679 = vunpack.c.l.b16 %v352
        %v1680 = vunpack.c.h.b16 %v352
        %v1681 = vunpack.c.l.b16 %v353
        %v1682 = vunpack.c.h.b16 %v353
        %v1683 = vunpack.c.l.b16 %v354
        %v1684 = vunpack.c.h.b16 %v354
        %v1685 = vunpack.c.l.b16 %v355
        %v1686 = vunpack.c.h.b16 %v355
        %v1687 = vunpack.c.l.b16 %v356
        %v1688 = vunpack.c.h.b16 %v356
        %v1689 = vunpack.c.l.b16 %v357
        %v1690 = vunpack.c.h.b16 %v357
        %v1691 = vunpack.c.l.b16 %v358
        %v1692 = vunpack.c.h.b16 %v358
        %v1693 = vunpack.c.l.b16 %v359
        %v1694 = vunpack.c.h.b16 %v359
        %v1695 = vunpack.c.l.b16 %v360
        %v1696 = vunpack.c.h.b16 %v360
        %v1697 = vunpack.c.l.b16 %v361
        %v1698 = vunpack.c.h.b16 %v361
        %v1699 = vunpack.c.l.b16 %v362
        %v1700 = vunpack.c.h.b16 %v362
        %v1701 = vunpack.c.l.b16 %v363
        %v1702 = vunpack.c.h.b16 %v363
        %v1703 = vunpack.c.l.b16 %v364
        %v1704 = vunpack.c.h.b16 %v364
        %v1705 = vunpack.c.l.b16 %v365
        %v1706 = vunpack.c.h.b16 %v365
        %v1707 = vunpack.c.l.b16 %v366
        %v1708 = vunpack.c.h.b16 %v366
        %v1709 = vunpack.c.l.b16 %v367
        %v1710 = vunpack.c.h.b16 %v367
        %v1711 = vunpack.c.l.b16 %v368
        %v1712 = vunpack.c.h.b16 %v368
        %v1713 = vunpack.c.l.b16 %v369
        %v1714 = vunpack.c.h.b16 %v369
        %v1715 = vunpack.c.l.b16 %v370
        %v1716 = vunpack.c.h.b16 %v370
        %v1717 = vunpack.c.l.b16 %v371
        %v1718 = vunpack.c.h.b16 %v371
        %v1719 = vunpack.c.l.b16 %v372
        %v1720 = vunpack.c.h.b16 %v372
        %v1721 = vunpack.c.l.b16 %v373
        %v1722 = vunpack.c.h.b16 %v373
        %v1723 = vunpack.c.l.b16 %v374
        %v1724 = vunpack.c.h.b16 %v374
        %v1725 = vunpack.c.l.b16 %v375
        %v1726 = vunpack.c.h.b16 %v375
        %v1727 = vunpack.c.l.b16 %v376
        %v1728 = vunpack.c.h.b16 %v376
        %v1729 = vunpack.c.l.b16 %v377
        %v1730 = vunpack.c.h.b16 %v377
        %v1731 = vunpack.c.l.b16 %v378
        %v1732 = vunpack.c.h.b16 %v378
        %v1733 = vunpack.c.l.b16 %v379
        %v1734 = vunpack.c.h.b16 %v379
        %v1735 = vunpack.c.l.b16 %v380
        %v1736 = vunpack.c.h.b16 %v380
        %v1737 = vunpack.c.l.b16 %v381
        %v1738 = vunpack.c.h.b16 %v381
        %v1739 = vunpack.c.l.b16 %v382
        %v1740 = vunpack.c.h.b16 %v382
        %v1741 = vunpack.c.l.b16 %v383
        %v1742 = vunpack.c.h.b16 %v383
        %v1743 = vunpack.c.l.b16 %v384
        %v1744 = vunpack.c.h.b16 %v384
        %v1745 = vunpack.c.l.b16 %v385
        %v1746 = vunpack.c.h.b16 %v385
        %v1747 = vunpack.c.l.b16 %v386
        %v1748 = vunpack.c.h.b16 %v386
        %v1749 = vunpack.c.l.b16 %v387
        %v1750 = vunpack.c.h.b16 %v387
        %v1751 = vunpack.c.l.b16 %v388
        %v1752 = vunpack.c.h.b16 %v388
        %v1753 = vunpack.c.l.b16 %v389
        %v1754 = vunpack.c.h.b16 %v389
        %v1755 = vunpack.c.l.b16 %v390
        %v1756 = vunpack.c.h.b16 %v390
        %v1757 = vunpack.c.l.b16 %v391
        %v1758 = vunpack.c.h.b16 %v391
        %v1759 = vunpack.c.l.b16 %v392
        %v1760 = vunpack.c.h.b16 %v392
        %v1761 = vunpack.c.l.b16 %v393
        %v1762 = vunpack.c.h.b16 %v393
        %v1763 = vunpack.c.l.b16 %v394
        %v1764 = vunpack.c.h.b16 %v394
        %v1765 = vunpack.c.l.b16 %v395
        %v1766 = vunpack.c.h.b16 %v395
        %v1767 = vunpack.c.l.b16 %v396
        %v1768 = vunpack.c.h.b16 %v396
        %v1769 = vunpack.c.l.b16 %v397
        %v1770 = vunpack.c.h.b16 %v397
        %v1771 = vunpack.c.l.b16 %v398
        %v1772 = vunpack.c.h.b16 %v398
        %v1773 = vunpack.c.l.b16 %v399
        %v1774 = vunpack.c.h.b16 %v399
        %v1775 = vunpack.c.l.b16 %v400
        %v1776 = vunpack.c.h.b16 %v400
        %v1777 = vunpack.c.l.b16 %v401
        %v1778 = vunpack.c.h.b16 %v401
        %v1779 = vunpack.c.l.b16 %v402
        %v1780 = vunpack.c.h.b16 %v402
        %v1781 = vunpack.c.l.b16 %v403
        %v1782 = vunpack.c.h.b16 %v403
        %v1783 = vunpack.c.l.b16 %v404
        %v1784 = vunpack.c.h.b16 %v404
        %v1785 = vunpack.c.l.b16 %v405
        %v1786 = vunpack.c.h.b16 %v405
        %v1787 = vunpack.c.l.b16 %v406
        %v1788 = vunpack.c.h.b16 %v406
        %v1789 = vunpack.c.l.b16 %v407
        %v1790 = vunpack.c.h.b16 %v407
        %v1791 = vunpack.c.l.b16 %v408
        %v1792 = vunpack.c.h.b16 %v408
        %v1793 = vunpack.c.l.b16 %v409
        %v1794 = vunpack.c.h.b16 %v409
        %v1795 = vunpack.c.l.b16 %v410
        %v1796 = vunpack.c.h.b16 %v410
        %v1797 = vunpack.c.l.b16 %v411
        %v1798 = vunpack.c.h.b16 %v411
        %v1799 = vunpack.c.l.b16 %v412
        %v1800 = vunpack.c.h.b16 %v412
        %v1801 = vunpack.c.l.b16 %v413
        %v1802 = vunpack.c.h.b16 %v413
        %v1803 = vunpack.c.l.b16 %v414
        %v1804 = vunpack.c.h.b16 %v414
        %v1805 = vunpack.c.l.b16 %v415
        %v1806 = vunpack.c.h.b16 %v415
        %v1807 = vunpack.c.l.b16 %v416
        %v1808 = vunpack.c.h.b16 %v416
        %v1809 = vunpack.c.l.b16 %v417
        %v1810 = vunpack.c.h.b16 %v417
        %v1811 = vunpack.c.l.b16 %v418
        %v1812 = vunpack.c.h.b16 %v418
        %v1813 = vunpack.c.l.b16 %v419
        %v1814 = vunpack.c.h.b16 %v419
        %v1815 = vunpack.c.l.b16 %v420
        %v1816 = vunpack.c.h.b16 %v420
        %v1817 = vunpack.c.l.b16 %v421
        %v1818 = vunpack.c.h.b16 %v421
        %v1819 = vunpack.c.l.b16 %v422
        %v1820 = vunpack.c.h.b16 %v422
        %v1821 = vunpack.c.l.b16 %v423
        %v1822 = vunpack.c.h.b16 %v423
        %v1823 = vunpack.c.l.b16 %v424
        %v1824 = vunpack.c.h.b16 %v424
        %v1825 = vunpack.c.l.b16 %v425
        %v1826 = vunpack.c.h.b16 %v425
        %v1827 = vunpack.c.l.b16 %v426
        %v1828 = vunpack.c.h.b16 %v426
        %v1829 = vunpack.c.l.b16 %v427
        %v1830 = vunpack.c.h.b16 %v427
        %v1831 = vunpack.c.l.b16 %v428
        %v1832 = vunpack.c.h.b16 %v428
        %v1833 = vunpack.c.l.b16 %v429
        %v1834 = vunpack.c.h.b16 %v429
        %v1835 = vunpack.c.l.b16 %v430
        %v1836 = vunpack.c.h.b16 %v430
        %v1837 = vunpack.c.l.b16 %v431
        %v1838 = vunpack.c.h.b16 %v431
        %v1839 = vunpack.c.l.b16 %v432
        %v1840 = vunpack.c.h.b16 %v432
        %v1841 = vunpack.c.l.b16 %v433
        %v1842 = vunpack.c.h.b16 %v433
        %v1843 = vunpack.c.l.b16 %v434
        %v1844 = vunpack.c.h.b16 %v434
        %v1845 = vunpack.c.l.b16 %v435
        %v1846 = vunpack.c.h.b16 %v435
        %v1847 = vunpack.c.l.b16 %v436
        %v1848 = vunpack.c.h.b16 %v436
        %v1849 = vunpack.c.l.b16 %v437
        %v1850 = vunpack.c.h.b16 %v437
        %v1851 = vunpack.c.l.b16 %v438
        %v1852 = vunpack.c.h.b16 %v438
        %v1853 = vunpack.c.l.b16 %v439
        %v1854 = vunpack.c.h.b16 %v439
        %v1855 = vunpack.c.l.b16 %v440
        %v1856 = vunpack.c.h.b16 %v440
        %v1857 = vunpack.c.l.b16 %v441
        %v1858 = vunpack.c.h.b16 %v441
        %v1859 = vunpack.c.l.b16 %v442
        %v1860 = vunpack.c.h.b16 %v442
        %v1861 = vunpack.c.l.b16 %v443
        %v1862 = vunpack.c.h.b16 %v443
        %v1863 = vunpack.c.l.b16 %v444
        %v1864 = vunpack.c.h.b16 %v444
        %v1865 = vunpack.c.l.b16 %v445
        %v1866 = vunpack.c.h.b16 %v445
        %v1867 = vunpack.c.l.b16 %v446
        %v1868 = vunpack.c.h.b16 %v446
        %v1869 = vunpack.c.l.b16 %v447
        %v1870 = vunpack.c.h.b16 %v447
        %v1871 = vunpack.c.l.b16 %v448
        %v1872 = vunpack.c.h.b16 %v448
        %v1873 = vunpack.c.l.b16 %v449
        %v1874 = vunpack.c.h.b16 %v449
        %v1875 = vunpack.c.l.b16 %v450
        %v1876 = vunpack.c.h.b16 %v450
        %v1877 = vunpack.c.l.b16 %v451
        %v1878 = vunpack.c.h.b16 %v451
        %v1879 = vunpack.c.l.b16 %v452
        %v1880 = vunpack.c.h.b16 %v452
        %v1881 = vunpack.c.l.b16 %v453
        %v1882 = vunpack.c.h.b16 %v453
        %v1883 = vunpack.c.l.b16 %v454
        %v1884 = vunpack.c.h.b16 %v454
        %v1885 = vunpack.c.l.b16 %v455
        %v1886 = vunpack.c.h.b16 %v455
        %v1887 = vunpack.c.l.b16 %v456
        %v1888 = vunpack.c.h.b16 %v456
        %v1889 = vunpack.c.l.b16 %v457
        %v1890 = vunpack.c.h.b16 %v457
        %v1891 = vunpack.c.l.b16 %v458
        %v1892 = vunpack.c.h.b16 %v458
        %v1893 = vunpack.c.l.b16 %v459
        %v1894 = vunpack.c.h.b16 %v459
        %v1895 = vunpack.c.l.b16 %v460
        %v1896 = vunpack.c.h.b16 %v460
        %v1897 = vunpack.c.l.b16 %v461
        %v1898 = vunpack.c.h.b16 %v461
        %v1899 = vunpack.c.l.b16 %v462
        %v1900 = vunpack.c.h.b16 %v462
        %v1901 = vunpack.c.l.b16 %v463
        %v1902 = vunpack.c.h.b16 %v463
        %v1903 = vunpack.c.l.b16 %v464
        %v1904 = vunpack.c.h.b16 %v464
        %v1905 = vunpack.c.l.b16 %v465
        %v1906 = vunpack.c.h.b16 %v465
        %v1907 = vunpack.c.l.b16 %v466
        %v1908 = vunpack.c.h.b16 %v466
        %v1909 = vunpack.c.l.b16 %v467
        %v1910 = vunpack.c.h.b16 %v467
        %v1911 = vunpack.c.l.b16 %v468
        %v1912 = vunpack.c.h.b16 %v468
        %v1913 = vunpack.c.l.b16 %v469
        %v1914 = vunpack.c.h.b16 %v469
        %v1915 = vunpack.c.l.b16 %v470
        %v1916 = vunpack.c.h.b16 %v470
        %v1917 = vunpack.c.l.b16 %v471
        %v1918 = vunpack.c.h.b16 %v471
        %v1919 = vunpack.c.l.b16 %v472
        %v1920 = vunpack.c.h.b16 %v472
        %v1921 = vunpack.c.l.b16 %v473
        %v1922 = vunpack.c.h.b16 %v473
        %v1923 = vunpack.c.l.b16 %v474
        %v1924 = vunpack.c.h.b16 %v474
        %v1925 = vunpack.c.l.b16 %v475
        %v1926 = vunpack.c.h.b16 %v475
        %v1927 = vunpack.c.l.b16 %v476
        %v1928 = vunpack.c.h.b16 %v476
        %v1929 = vunpack.c.l.b16 %v477
        %v1930 = vunpack.c.h.b16 %v477
        %v1931 = vunpack.c.l.b16 %v478
        %v1932 = vunpack.c.h.b16 %v478
        %v1933 = vunpack.c.l.b16 %v479
        %v1934 = vunpack.c.h.b16 %v479
        %v1935 = vunpack.c.l.b16 %v480
        %v1936 = vunpack.c.h.b16 %v480
        %v1937 = vunpack.c.l.b16 %v481
        %v1938 = vunpack.c.h.b16 %v481
        %v1939 = vunpack.c.l.b16 %v482
        %v1940 = vunpack.c.h.b16 %v482
        %v1941 = vunpack.c.l.b16 %v483
        %v1942 = vunpack.c.h.b16 %v483
        %v1943 = vunpack.c.l.b16 %v484
        %v1944 = vunpack.c.h.b16 %v484
        %v1945 = vunpack.c.l.b16 %v485
        %v1946 = vunpack.c.h.b16 %v485
        %v1947 = vunpack.c.l.b16 %v486
        %v1948 = vunpack.c.h.b16 %v486
        %v1949 = vunpack.c.l.b16 %v487
        %v1950 = vunpack.c.h.b16 %v487
        %v1951 = vunpack.c.l.b16 %v488
        %v1952 = vunpack.c.h.b16 %v488
        %v1953 = vunpack.c.l.b16 %v489
        %v1954 = vunpack.c.h.b16 %v489
        %v1955 = vunpack.c.l.b16 %v490
        %v1956 = vunpack.c.h.b16 %v490
        %v1957 = vunpack.c.l.b16 %v491
        %v1958 = vunpack.c.h.b16 %v491
        %v1959 = vunpack.c.l.b16 %v492
        %v1960 = vunpack.c.h.b16 %v492
        %v1961 = vunpack.c.l.b16 %v493
        %v1962 = vunpack.c.h.b16 %v493
        %v1963 = vunpack.c.l.b16 %v494
        %v1964 = vunpack.c.h.b16 %v494
        %v1965 = vunpack.c.l.b16 %v495
        %v1966 = vunpack.c.h.b16 %v495
        %v1967 = vunpack.c.l.b16 %v496
        %v1968 = vunpack.c.h.b16 %v496
        %v1969 = vunpack.c.l.b16 %v497
        %v1970 = vunpack.c.h.b16 %v497
        %v1971 = vunpack.c.l.b16 %v498
        %v1972 = vunpack.c.h.b16 %v498
        %v1973 = vunpack.c.l.b16 %v499
        %v1974 = vunpack.c.h.b16 %v499
        %v1975 = vunpack.c.l.b16 %v500
        %v1976 = vunpack.c.h.b16 %v500
        %v1977 = vunpack.c.l.b16 %v501
        %v1978 = vunpack.c.h.b16 %v501
        %v1979 = vunpack.c.l.b16 %v502
        %v1980 = vunpack.c.h.b16 %v502
        %v1981 = vunpack.c.l.b16 %v503
        %v1982 = vunpack.c.h.b16 %v503
        %v1983 = vunpack.c.l.b16 %v504
        %v1984 = vunpack.c.h.b16 %v504
        %v1985 = vunpack.c.l.b16 %v505
        %v1986 = vunpack.c.h.b16 %v505
        %v1987 = vunpack.c.l.b16 %v506
        %v1988 = vunpack.c.h.b16 %v506
        %v1989 = vunpack.c.l.b16 %v507
        %v1990 = vunpack.c.h.b16 %v507
        %v1991 = vunpack.c.l.b16 %v508
        %v1992 = vunpack.c.h.b16 %v508
        %v1993 = vunpack.c.l.b16 %v509
        %v1994 = vunpack.c.h.b16 %v509
        %v1995 = vunpack.c.l.b16 %v510
        %v1996 = vunpack.c.h.b16 %v510
        %v1997 = vunpack.c.l.b16 %v511
        %v1998 = vunpack.c.h.b16 %v511
        %v1999 = vunpack.c.l.b16 %v512
        %v2000 = vunpack.c.h.b16 %v512
        %v2001 = vunpack.c.l.b16 %v513
        %v2002 = vunpack.c.h.b16 %v513
        %v2003 = vunpack.c.l.b16 %v514
        %v2004 = vunpack.c.h.b16 %v514
        %v2005 = vunpack.c.l.b16 %v515
        %v2006 = vunpack.c.h.b16 %v515
        %v2007 = vunpack.c.l.b16 %v516
        %v2008 = vunpack.c.h.b16 %v516
        %v2009 = vunpack.c.l.b16 %v517
        %v2010 = vunpack.c.h.b16 %v517
        %v2011 = vunpack.c.l.b16 %v518
        %v2012 = vunpack.c.h.b16 %v518
        %v2013 = vunpack.c.l.b16 %v519
        %v2014 = vunpack.c.h.b16 %v519
        %v2015 = vunpack.c.l.b16 %v520
        %v2016 = vunpack.c.h.b16 %v520
        %v2017 = vunpack.c.l.b16 %v521
        %v2018 = vunpack.c.h.b16 %v521
        %v2019 = vunpack.c.l.b16 %v522
        %v2020 = vunpack.c.h.b16 %v522
        %v2021 = vunpack.c.l.b16 %v523
        %v2022 = vunpack.c.h.b16 %v523
        %v2023 = vunpack.c.l.b16 %v524
        %v2024 = vunpack.c.h.b16 %v524
        %v2025 = vunpack.c.l.b16 %v525
        %v2026 = vunpack.c.h.b16 %v525
        %v2027 = vunpack.c.l.b16 %v526
        %v2028 = vunpack.c.h.b16 %v526
        %v2029 = vunpack.c.l.b16 %v527
        %v2030 = vunpack.c.h.b16 %v527
        %v2031 = vunpack.c.l.b16 %v528
        %v2032 = vunpack.c.h.b16 %v528
        %v2033 = vunpack.c.l.b16 %v529
        %v2034 = vunpack.c.h.b16 %v529
        %v2035 = vunpack.c.l.b16 %v530
        %v2036 = vunpack.c.h.b16 %v530
        %v2037 = vunpack.c.l.b16 %v531
        %v2038 = vunpack.c.h.b16 %v531
        %v2039 = vunpack.c.l.b16 %v532
        %v2040 = vunpack.c.h.b16 %v532
        %v2041 = vunpack.c.l.b16 %v533
        %v2042 = vunpack.c.h.b16 %v533
        %v2043 = vunpack.c.l.b16 %v534
        %v2044 = vunpack.c.h.b16 %v534
        %v2045 = vunpack.c.l.b16 %v535
        %v2046 = vunpack.c.h.b16 %v535
        %v2047 = vunpack.c.l.b16 %v536
        %v2048 = vunpack.c.h.b16 %v536
        %v2049 = vunpack.c.l.b16 %v537
        %v2050 = vunpack.c.h.b16 %v537
        %v2051 = vunpack.c.l.b16 %v538
        %v2052 = vunpack.c.h.b16 %v538
        %v2053 = vunpack.c.l.b16 %v539
        %v2054 = vunpack.c.h.b16 %v539
        %v2055 = vunpack.c.l.b16 %v540
        %v2056 = vunpack.c.h.b16 %v540
        %v2057 = vunpack.c.l.b16 %v541
        %v2058 = vunpack.c.h.b16 %v541
        %v2059 = vunpack.c.l.b16 %v542
        %v2060 = vunpack.c.h.b16 %v542
        %v2061 = vunpack.c.l.b16 %v543
        %v2062 = vunpack.c.h.b16 %v543
        %v2063 = vunpack.c.l.b16 %v544
        %v2064 = vunpack.c.h.b16 %v544
        %v2065 = vunpack.c.l.b16 %v545
        %v2066 = vunpack.c.h.b16 %v545
        %v2067 = vunpack.c.l.b16 %v546
        %v2068 = vunpack.c.h.b16 %v546
        %v2069 = vunpack.c.l.b16 %v547
        %v2070 = vunpack.c.h.b16 %v547
        %v2071 = vunpack.c.l.b16 %v548
        %v2072 = vunpack.c.h.b16 %v548
        %v2073 = vunpack.c.l.b16 %v549
        %v2074 = vunpack.c.h.b16 %v549
        %v2075 = vunpack.c.l.b16 %v550
        %v2076 = vunpack.c.h.b16 %v550
        %v2077 = vunpack.c.l.b16 %v551
        %v2078 = vunpack.c.h.b16 %v551
        %v2079 = vunpack.c.l.b16 %v552
        %v2080 = vunpack.c.h.b16 %v552
        %v2081 = vunpack.c.l.b16 %v553
        %v2082 = vunpack.c.h.b16 %v553
        %v2083 = vunpack.c.l.b16 %v554
        %v2084 = vunpack.c.h.b16 %v554
        %v2085 = vunpack.c.l.b16 %v555
        %v2086 = vunpack.c.h.b16 %v555
        %v2087 = vunpack.c.l.b16 %v556
        %v2088 = vunpack.c.h.b16 %v556
        %v2089 = vunpack.c.l.b16 %v557
        %v2090 = vunpack.c.h.b16 %v557
        %v2091 = vunpack.c.l.b16 %v558
        %v2092 = vunpack.c.h.b16 %v558
        %v2093 = vunpack.c.l.b16 %v559
        %v2094 = vunpack.c.h.b16 %v559
        %v2095 = vunpack.c.l.b16 %v560
        %v2096 = vunpack.c.h.b16 %v560
        %v2097 = vunpack.c.l.b16 %v561
        %v2098 = vunpack.c.h.b16 %v561
        %v2099 = vunpack.c.l.b16 %v562
        %v2100 = vunpack.c.h.b16 %v562
        %v2101 = vunpack.c.l.b16 %v563
        %v2102 = vunpack.c.h.b16 %v563
        %v2103 = vunpack.c.l.b16 %v564
        %v2104 = vunpack.c.h.b16 %v564
        %v2105 = vunpack.c.l.b16 %v565
        %v2106 = vunpack.c.h.b16 %v565
        %v2107 = vunpack.c.l.b16 %v566
        %v2108 = vunpack.c.h.b16 %v566
        %v2109 = vunpack.c.l.b16 %v567
        %v2110 = vunpack.c.h.b16 %v567
        %v2111 = vunpack.c.l.b16 %v568
        %v2112 = vunpack.c.h.b16 %v568
        %v2113 = vunpack.c.l.b16 %v569
        %v2114 = vunpack.c.h.b16 %v569
        %v2115 = vunpack.c.l.b16 %v570
        %v2116 = vunpack.c.h.b16 %v570
        %v2117 = vunpack.c.l.b16 %v571
        %v2118 = vunpack.c.h.b16 %v571
        %v2119 = vunpack.c.l.b16 %v572
        %v2120 = vunpack.c.h.b16 %v572
        %v2121 = vunpack.c.l.b16 %v573
        %v2122 = vunpack.c.h.b16 %v573
        %v2123 = vunpack.c.l.b16 %v574
        %v2124 = vunpack.c.h.b16 %v574
        %v2125 = vunpack.c.l.b16 %v575
        %v2126 = vunpack.c.h.b16 %v575
        %v2127 = vunpack.c.l.b16 %v576
        %v2128 = vunpack.c.h.b16 %v576
        %v2129 = vunpack.c.l.b16 %v577
        %v2130 = vunpack.c.h.b16 %v577
        %v2131 = vunpack.c.l.b16 %v578
        %v2132 = vunpack.c.h.b16 %v578
        %v2133 = vunpack.c.l.b16 %v579
        %v2134 = vunpack.c.h.b16 %v579
        %v2135 = vunpack.c.l.b16 %v580
        %v2136 = vunpack.c.h.b16 %v580
        %v2137 = vunpack.c.l.b16 %v581
        %v2138 = vunpack.c.h.b16 %v581
        %v2139 = vunpack.c.l.b16 %v582
        %v2140 = vunpack.c.h.b16 %v582
        %v2141 = vunpack.c.l.b16 %v583
        %v2142 = vunpack.c.h.b16 %v583
        %v2143 = vunpack.c.l.b16 %v584
        %v2144 = vunpack.c.h.b16 %v584
        %v2145 = vunpack.c.l.b16 %v585
        %v2146 = vunpack.c.h.b16 %v585
        %v2147 = vunpack.c.l.b16 %v586
        %v2148 = vunpack.c.h.b16 %v586
        %v2149 = vunpack.c.l.b16 %v587
        %v2150 = vunpack.c.h.b16 %v587
        %v2151 = vunpack.c.l.b16 %v588
        %v2152 = vunpack.c.h.b16 %v588
        %v2153 = vunpack.c.l.b16 %v589
        %v2154 = vunpack.c.h.b16 %v589
        %v2155 = vunpack.c.l.b16 %v590
        %v2156 = vunpack.c.h.b16 %v590
        %v2157 = vunpack.c.l.b16 %v591
        %v2158 = vunpack.c.h.b16 %v591
        %v2159 = vunpack.c.l.b16 %v592
        %v2160 = vunpack.c.h.b16 %v592
        %v2161 = vunpack.c.l.b16 %v593
        %v2162 = vunpack.c.h.b16 %v593
        %v2163 = vunpack.c.l.b16 %v594
        %v2164 = vunpack.c.h.b16 %v594
        %v2165 = vunpack.c.l.b16 %v595
        %v2166 = vunpack.c.h.b16 %v595
        %v2167 = vunpack.c.l.b16 %v596
        %v2168 = vunpack.c.h.b16 %v596
        %v2169 = vunpack.c.l.b16 %v597
        %v2170 = vunpack.c.h.b16 %v597
        %v2171 = vunpack.c.l.b16 %v598
        %v2172 = vunpack.c.h.b16 %v598
        %v2173 = vunpack.c.l.b16 %v599
        %v2174 = vunpack.c.h.b16 %v599
        %v2175 = vunpack.c.l.b16 %v600
        %v2176 = vunpack.c.h.b16 %v600
        %v2177 = vunpack.c.l.b16 %v601
        %v2178 = vunpack.c.h.b16 %v601
        %v2179 = vunpack.c.l.b16 %v602
        %v2180 = vunpack.c.h.b16 %v602
        %v2181 = vunpack.c.l.b16 %v603
        %v2182 = vunpack.c.h.b16 %v603
        %v2183 = vunpack.c.l.b16 %v604
        %v2184 = vunpack.c.h.b16 %v604
        %v2185 = vunpack.c.l.b16 %v605
        %v2186 = vunpack.c.h.b16 %v605
        %v2187 = vunpack.c.l.b16 %v606
        %v2188 = vunpack.c.h.b16 %v606
        %v2189 = vunpack.c.l.b16 %v607
        %v2190 = vunpack.c.h.b16 %v607
        %v2191 = vunpack.c.l.b16 %v608
        %v2192 = vunpack.c.h.b16 %v608
        %v2193 = vunpack.c.l.b16 %v609
        %v2194 = vunpack.c.h.b16 %v609
        %v2195 = vunpack.c.l.b16 %v610
        %v2196 = vunpack.c.h.b16 %v610
        %v2197 = vunpack.c.l.b16 %v611
        %v2198 = vunpack.c.h.b16 %v611
        %v2199 = vunpack.c.l.b16 %v612
        %v2200 = vunpack.c.h.b16 %v612
        %v2201 = vunpack.c.l.b16 %v613
        %v2202 = vunpack.c.h.b16 %v613
        %v2203 = vunpack.c.l.b16 %v614
        %v2204 = vunpack.c.h.b16 %v614
        %v2205 = vunpack.c.l.b16 %v615
        %v2206 = vunpack.c.h.b16 %v615
        %v2207 = vunpack.c.l.b16 %v616
        %v2208 = vunpack.c.h.b16 %v616
        %v2209 = vunpack.c.l.b16 %v617
        %v2210 = vunpack.c.h.b16 %v617
        %v2211 = vunpack.c.l.b16 %v618
        %v2212 = vunpack.c.h.b16 %v618
        %v2213 = vunpack.c.l.b16 %v619
        %v2214 = vunpack.c.h.b16 %v619
        %v2215 = vunpack.c.l.b16 %v620
        %v2216 = vunpack.c.h.b16 %v620
        %v2217 = vunpack.c.l.b16 %v621
        %v2218 = vunpack.c.h.b16 %v621
        %v2219 = vunpack.c.l.b16 %v622
        %v2220 = vunpack.c.h.b16 %v622
        %v2221 = vunpack.c.l.b16 %v623
        %v2222 = vunpack.c.h.b16 %v623
        %v2223 = vunpack.c.l.b16 %v624
        %v2224 = vunpack.c.h.b16 %v624
        %v2225 = vunpack.c.l.b16 %v625
        %v2226 = vunpack.c.h.b16 %v625
        %v2227 = vunpack.c.l.b16 %v626
        %v2228 = vunpack.c.h.b16 %v626
        %v2229 = vunpack.c.l.b16 %v627
        %v2230 = vunpack.c.h.b16 %v627
        %v2231 = vunpack.c.l.b16 %v628
        %v2232 = vunpack.c.h.b16 %v628
        %v2233 = vunpack.c.l.b16 %v629
        %v2234 = vunpack.c.h.b16 %v629
        %v2235 = vunpack.c.l.b16 %v630
        %v2236 = vunpack.c.h.b16 %v630
        %v2237 = vunpack.c.l.b16 %v631
        %v2238 = vunpack.c.h.b16 %v631
        %v2239 = vunpack.c.l.b16 %v632
        %v2240 = vunpack.c.h.b16 %v632
        %v2241 = vunpack.c.l.b16 %v633
        %v2242 = vunpack.c.h.b16 %v633
        %v2243 = vunpack.c.l.b16 %v634
        %v2244 = vunpack.c.h.b16 %v634
        %v2245 = vunpack.c.l.b16 %v635
        %v2246 = vunpack.c.h.b16 %v635
        %v2247 = vunpack.c.l.b16 %v636
        %v2248 = vunpack.c.h.b16 %v636
        %v2249 = vunpack.c.l.b16 %v637
        %v2250 = vunpack.c.h.b16 %v637
        %v2251 = vunpack.c.l.b16 %v638
        %v2252 = vunpack.c.h.b16 %v638
        %v2253 = vunpack.c.l.b16 %v639
        %v2254 = vunpack.c.h.b16 %v639
        %v2255 = vunpack.c.l.b16 %v640
        %v2256 = vunpack.c.h.b16 %v640
        %v2257 = vunpack.c.l.b16 %v641
        %v2258 = vunpack.c.h.b16 %v641
        %v2259 = vunpack.c.l.b16 %v642
        %v2260 = vunpack.c.h.b16 %v642
        %v2261 = vunpack.c.l.b16 %v643
        %v2262 = vunpack.c.h.b16 %v643
        %v2263 = vunpack.c.l.b16 %v644
        %v2264 = vunpack.c.h.b16 %v644
        %v2265 = vunpack.c.l.b16 %v645
        %v2266 = vunpack.c.h.b16 %v645
        %v2267 = vunpack.c.l.b16 %v646
        %v2268 = vunpack.c.h.b16 %v646
        %v2269 = vunpack.c.l.b16 %v647
        %v2270 = vunpack.c.h.b16 %v647
        %v2271 = vunpack.c.l.b16 %v648
        %v2272 = vunpack.c.h.b16 %v648
        %v2273 = vunpack.c.l.b16 %v649
        %v2274 = vunpack.c.h.b16 %v649
        %v2275 = vunpack.c.l.b16 %v650
        %v2276 = vunpack.c.h.b16 %v650
        %v2277 = vunpack.c.l.b16 %v651
        %v2278 = vunpack.c.h.b16 %v651
        %v2279 = vunpack.c.l.b16 %v652
        %v2280 = vunpack.c.h.b16 %v652
        %v2281 = vunpack.c.l.b16 %v653
        %v2282 = vunpack.c.h.b16 %v653
        %v2283 = vunpack.c.l.b16 %v654
        %v2284 = vunpack.c.h.b16 %v654
        %v2285 = vunpack.c.l.b16 %v655
        %v2286 = vunpack.c.h.b16 %v655
        %v2287 = vunpack.c.l.b16 %v656
        %v2288 = vunpack.c.h.b16 %v656
        %v2289 = vunpack.c.l.b16 %v657
        %v2290 = vunpack.c.h.b16 %v657
        %v2291 = vunpack.c.l.b16 %v658
        %v2292 = vunpack.c.h.b16 %v658
        %v2293 = vunpack.c.l.b16 %v659
        %v2294 = vunpack.c.h.b16 %v659
        %v2295 = vunpack.c.l.b16 %v660
        %v2296 = vunpack.c.h.b16 %v660
        %v2297 = vunpack.c.l.b16 %v661
        %v2298 = vunpack.c.h.b16 %v661
        %v2299 = vunpack.c.l.b16 %v662
        %v2300 = vunpack.c.h.b16 %v662
        %v2301 = vunpack.c.l.b16 %v663
        %v2302 = vunpack.c.h.b16 %v663
        %v2303 = vunpack.c.l.b16 %v664
        %v2304 = vunpack.c.h.b16 %v664
        %v2305 = vunpack.c.l.b16 %v665
        %v2306 = vunpack.c.h.b16 %v665
        %v2307 = vunpack.c.l.b16 %v666
        %v2308 = vunpack.c.h.b16 %v666
        %v2309 = vunpack.c.l.b16 %v667
        %v2310 = vunpack.c.h.b16 %v667
        %v2311 = vunpack.c.l.b16 %v668
        %v2312 = vunpack.c.h.b16 %v668
        %v2313 = vunpack.c.l.b16 %v669
        %v2314 = vunpack.c.h.b16 %v669
        %v2315 = vunpack.c.l.b16 %v670
        %v2316 = vunpack.c.h.b16 %v670
        %v2317 = vunpack.c.l.b16 %v671
        %v2318 = vunpack.c.h.b16 %v671
        %v2319 = vunpack.c.l.b16 %v672
        %v2320 = vunpack.c.h.b16 %v672
        %v2321 = vunpack.c.l.b16 %v673
        %v2322 = vunpack.c.h.b16 %v673
        %v2323 = vunpack.c.l.b16 %v674
        %v2324 = vunpack.c.h.b16 %v674
        %v2325 = vunpack.c.l.b16 %v675
        %v2326 = vunpack.c.h.b16 %v675
        %v2327 = vunpack.c.l.b16 %v676
        %v2328 = vunpack.c.h.b16 %v676
        %v2329 = vunpack.c.l.b16 %v677
        %v2330 = vunpack.c.h.b16 %v677
        %v2331 = vunpack.c.l.b16 %v678
        %v2332 = vunpack.c.h.b16 %v678
        %v2333 = vunpack.c.l.b16 %v679
        %v2334 = vunpack.c.h.b16 %v679
        %v2335 = vunpack.c.l.b16 %v680
        %v2336 = vunpack.c.h.b16 %v680
        %v2337 = vunpack.c.l.b16 %v681
        %v2338 = vunpack.c.h.b16 %v681
        %v2339 = vunpack.c.l.b16 %v682
        %v2340 = vunpack.c.h.b16 %v682
        %v2341 = vunpack.c.l.b16 %v683
        %v2342 = vunpack.c.h.b16 %v683
        %v2343 = vunpack.c.l.b16 %v684
        %v2344 = vunpack.c.h.b16 %v684
        %v2345 = vunpack.c.l.b16 %v685
        %v2346 = vunpack.c.h.b16 %v685
        %v2347 = vunpack.c.l.b16 %v686
        %v2348 = vunpack.c.h.b16 %v686
        %v2349 = vunpack.c.l.b16 %v687
        %v2350 = vunpack.c.h.b16 %v687
        %v2351 = vunpack.c.l.b16 %v688
        %v2352 = vunpack.c.h.b16 %v688
        %v2353 = vunpack.c.l.b16 %v689
        %v2354 = vunpack.c.h.b16 %v689
        %v2355 = vunpack.c.l.b16 %v690
        %v2356 = vunpack.c.h.b16 %v690
        %v2357 = vunpack.c.l.b16 %v691
        %v2358 = vunpack.c.h.b16 %v691
        %v2359 = vunpack.c.l.b16 %v692
        %v2360 = vunpack.c.h.b16 %v692
        %v2361 = vunpack.c.l.b16 %v693
        %v2362 = vunpack.c.h.b16 %v693
        %v2363 = vunpack.c.l.b16 %v694
        %v2364 = vunpack.c.h.b16 %v694
        %v2365 = vunpack.c.l.b16 %v695
        %v2366 = vunpack.c.h.b16 %v695
        %v2367 = vunpack.c.l.b16 %v696
        %v2368 = vunpack.c.h.b16 %v696
        %v2369 = vunpack.c.l.b16 %v697
        %v2370 = vunpack.c.h.b16 %v697
        %v2371 = vunpack.c.l.b16 %v698
        %v2372 = vunpack.c.h.b16 %v698
        %v2373 = vunpack.c.l.b16 %v699
        %v2374 = vunpack.c.h.b16 %v699
        %v2375 = vunpack.c.l.b16 %v700
        %v2376 = vunpack.c.h.b16 %v700
        %v2377 = vunpack.c.l.b16 %v701
        %v2378 = vunpack.c.h.b16 %v701
        %v2379 = vunpack.c.l.b16 %v702
        %v2380 = vunpack.c.h.b16 %v702
        %v2381 = vunpack.c.l.b16 %v703
        %v2382 = vunpack.c.h.b16 %v703
        %v2383 = vunpack.c.l.b16 %v704
        %v2384 = vunpack.c.h.b16 %v704
        %v2385 = vunpack.c.l.b16 %v705
        %v2386 = vunpack.c.h.b16 %v705
        %v2387 = vunpack.c.l.b16 %v706
        %v2388 = vunpack.c.h.b16 %v706
        %v2389 = vunpack.c.l.b16 %v707
        %v2390 = vunpack.c.h.b16 %v707
        %v2391 = vunpack.c.l.b16 %v708
        %v2392 = vunpack.c.h.b16 %v708
        %v2393 = vunpack.c.l.b16 %v709
        %v2394 = vunpack.c.h.b16 %v709
        %v2395 = vunpack.c.l.b16 %v710
        %v2396 = vunpack.c.h.b16 %v710
        %v2397 = vunpack.c.l.b16 %v711
        %v2398 = vunpack.c.h.b16 %v711
        %v2399 = vunpack.c.l.b16 %v712
        %v2400 = vunpack.c.h.b16 %v712
        %v2401 = vunpack.c.l.b16 %v713
        %v2402 = vunpack.c.h.b16 %v713
        %v2403 = vunpack.c.l.b16 %v714
        %v2404 = vunpack.c.h.b16 %v714
        %v2405 = vunpack.c.l.b16 %v715
        %v2406 = vunpack.c.h.b16 %v715
        %v2407 = vunpack.c.l.b16 %v716
        %v2408 = vunpack.c.h.b16 %v716
        %v2409 = vunpack.c.l.b16 %v717
        %v2410 = vunpack.c.h.b16 %v717
        %v2411 = vunpack.c.l.b16 %v718
        %v2412 = vunpack.c.h.b16 %v718
        %v2413 = vunpack.c.l.b16 %v719
        %v2414 = vunpack.c.h.b16 %v719
        %v2415 = vunpack.c.l.b16 %v720
        %v2416 = vunpack.c.h.b16 %v720
        %v2417 = vunpack.c.l.b16 %v721
        %v2418 = vunpack.c.h.b16 %v721
        %v2419 = vunpack.c.l.b16 %v722
        %v2420 = vunpack.c.h.b16 %v722
        %v2421 = vunpack.c.l.b16 %v723
        %v2422 = vunpack.c.h.b16 %v723
        %v2423 = vunpack.c.l.b16 %v724
        %v2424 = vunpack.c.h.b16 %v724
        %v2425 = vunpack.c.l.b16 %v725
        %v2426 = vunpack.c.h.b16 %v725
        %v2427 = vunpack.c.l.b16 %v726
        %v2428 = vunpack.c.h.b16 %v726
        %v2429 = vunpack.c.l.b16 %v727
        %v2430 = vunpack.c.h.b16 %v727
        %v2431 = vunpack.c.l.b16 %v728
        %v2432 = vunpack.c.h.b16 %v728
        %v2433 = vunpack.c.l.b16 %v729
        %v2434 = vunpack.c.h.b16 %v729
        %v2435 = vunpack.c.l.b16 %v730
        %v2436 = vunpack.c.h.b16 %v730
        %v2437 = vunpack.c.l.b16 %v731
        %v2438 = vunpack.c.h.b16 %v731
        %v2439 = vunpack.c.l.b16 %v732
        %v2440 = vunpack.c.h.b16 %v732
        %v2441 = vunpack.c.l.b16 %v733
        %v2442 = vunpack.c.h.b16 %v733
        %v2443 = vunpack.c.l.b16 %v734
        %v2444 = vunpack.c.h.b16 %v734
        %v2445 = vunpack.c.l.b16 %v735
        %v2446 = vunpack.c.h.b16 %v735
        %v2447 = vunpack.c.l.b16 %v736
        %v2448 = vunpack.c.h.b16 %v736
        %v2449 = vunpack.c.l.b16 %v737
        %v2450 = vunpack.c.h.b16 %v737
        %v2451 = vunpack.c.l.b16 %v738
        %v2452 = vunpack.c.h.b16 %v738
        %v2453 = vunpack.c.l.b16 %v739
        %v2454 = vunpack.c.h.b16 %v739
        %v2455 = vunpack.c.l.b16 %v740
        %v2456 = vunpack.c.h.b16 %v740
        %v2457 = vunpack.c.l.b16 %v741
        %v2458 = vunpack.c.h.b16 %v741
        %v2459 = vunpack.c.l.b16 %v742
        %v2460 = vunpack.c.h.b16 %v742
        %v2461 = vunpack.c.l.b16 %v743
        %v2462 = vunpack.c.h.b16 %v743
        %v2463 = vunpack.c.l.b16 %v744
        %v2464 = vunpack.c.h.b16 %v744
        %v2465 = vunpack.c.l.b16 %v745
        %v2466 = vunpack.c.h.b16 %v745
        %v2467 = vunpack.c.l.b16 %v746
        %v2468 = vunpack.c.h.b16 %v746
        %v2469 = vunpack.c.l.b16 %v747
        %v2470 = vunpack.c.h.b16 %v747
        %v2471 = vunpack.c.l.b16 %v748
        %v2472 = vunpack.c.h.b16 %v748
        %v2473 = vpack.c.b16 %v1451, %v1449
        %v2474 = vpack.c.b16 %v1452, %v1450
        %v2475 = vpack.c.b16 %v1455, %v1453
        %v2476 = vpack.c.b16 %v1456, %v1454
        %v2477 = vpack.c.b16 %v1459, %v1457
        %v2478 = vpack.c.b16 %v1460, %v1458
        %v2479 = vpack.c.b16 %v1463, %v1461
        %v2480 = vpack.c.b16 %v1464, %v1462
        %v2481 = vpack.c.b16 %v1467, %v1465
        %v2482 = vpack.c.b16 %v1468, %v1466
        %v2483 = vpack.c.b16 %v1471, %v1469
        %v2484 = vpack.c.b16 %v1472, %v1470
        %v2485 = vpack.c.b16 %v1475, %v1473
        %v2486 = vpack.c.b16 %v1476, %v1474
        %v2487 = vpack.c.b16 %v1479, %v1477
        %v2488 = vpack.c.b16 %v1480, %v1478
        %v2489 = vpack.c.b16 %v1483, %v1481
        %v2490 = vpack.c.b16 %v1484, %v1482
        %v2491 = vpack.c.b16 %v1487, %v1485
        %v2492 = vpack.c.b16 %v1488, %v1486
        %v2493 = vpack.c.b16 %v1491, %v1489
        %v2494 = vpack.c.b16 %v1492, %v1490
        %v2495 = vpack.c.b16 %v1495, %v1493
        %v2496 = vpack.c.b16 %v1496, %v1494
        %v2497 = vpack.c.b16 %v1499, %v1497
        %v2498 = vpack.c.b16 %v1500, %v1498
        %v2499 = vpack.c.b16 %v1503, %v1501
        %v2500 = vpack.c.b16 %v1504, %v1502
        %v2501 = vpack.c.b16 %v1507, %v1505
        %v2502 = vpack.c.b16 %v1508, %v1506
        %v2503 = vpack.c.b16 %v1511, %v1509
        %v2504 = vpack.c.b16 %v1512, %v1510
        %v2505 = vpack.c.b16 %v1515, %v1513
        %v2506 = vpack.c.b16 %v1516, %v1514
        %v2507 = vpack.c.b16 %v1519, %v1517
        %v2508 = vpack.c.b16 %v1520, %v1518
        %v2509 = vpack.c.b16 %v1523, %v1521
        %v2510 = vpack.c.b16 %v1524, %v1522
        %v2511 = vpack.c.b16 %v1527, %v1525
        %v2512 = vpack.c.b16 %v1528, %v1526
        %v2513 = vpack.c.b16 %v1531, %v1529
        %v2514 = vpack.c.b16 %v1532, %v1530
        %v2515 = vpack.c.b16 %v1535, %v1533
        %v2516 = vpack.c.b16 %v1536, %v1534
        %v2517 = vpack.c.b16 %v1539, %v1537
        %v2518 = vpack.c.b16 %v1540, %v1538
        %v2519 = vpack.c.b16 %v1543, %v1541
        %v2520 = vpack.c.b16 %v1544, %v1542
        %v2521 = vpack.c.b16 %v1547, %v1545
        %v2522 = vpack.c.b16 %v1548, %v1546
        %v2523 = vpack.c.b16 %v1551, %v1549
        %v2524 = vpack.c.b16 %v1552, %v1550
        %v2525 = vpack.c.b16 %v1555, %v1553
        %v2526 = vpack.c.b16 %v1556, %v1554
        %v2527 = vpack.c.b16 %v1559, %v1557
        %v2528 = vpack.c.b16 %v1560, %v1558
        %v2529 = vpack.c.b16 %v1563, %v1561
        %v2530 = vpack.c.b16 %v1564, %v1562
        %v2531 = vpack.c.b16 %v1567, %v1565
        %v2532 = vpack.c.b16 %v1568, %v1566
        %v2533 = vpack.c.b16 %v1571, %v1569
        %v2534 = vpack.c.b16 %v1572, %v1570
        %v2535 = vpack.c.b16 %v1575, %v1573
        %v2536 = vpack.c.b16 %v1576, %v1574
        %v2537 = vpack.c.b16 %v1579, %v1577
        %v2538 = vpack.c.b16 %v1580, %v1578
        %v2539 = vpack.c.b16 %v1583, %v1581
        %v2540 = vpack.c.b16 %v1584, %v1582
        %v2541 = vpack.c.b16 %v1587, %v1585
        %v2542 = vpack.c.b16 %v1588, %v1586
        %v2543 = vpack.c.b16 %v1591, %v1589
        %v2544 = vpack.c.b16 %v1592, %v1590
        %v2545 = vpack.c.b16 %v1595, %v1593
        %v2546 = vpack.c.b16 %v1596, %v1594
        %v2547 = vpack.c.b16 %v1599, %v1597
        %v2548 = vpack.c.b16 %v1600, %v1598
        %v2549 = vpack.c.b16 %v1603, %v1601
        %v2550 = vpack.c.b16 %v1604, %v1602
        %v2551 = vpack.c.b16 %v1607, %v1605
        %v2552 = vpack.c.b16 %v1608, %v1606
        %v2553 = vpack.c.b16 %v1611, %v1609
        %v2554 = vpack.c.b16 %v1612, %v1610
        %v2555 = vpack.c.b16 %v1615, %v1613
        %v2556 = vpack.c.b16 %v1616, %v1614
        %v2557 = vpack.c.b16 %v1619, %v1617
        %v2558 = vpack.c.b16 %v1620, %v1618
        %v2559 = vpack.c.b16 %v1623, %v1621
        %v2560 = vpack.c.b16 %v1624, %v1622
        %v2561 = vpack.c.b16 %v1627, %v1625
        %v2562 = vpack.c.b16 %v1628, %v1626
        %v2563 = vpack.c.b16 %v1631, %v1629
        %v2564 = vpack.c.b16 %v1632, %v1630
        %v2565 = vpack.c.b16 %v1635, %v1633
        %v2566 = vpack.c.b16 %v1636, %v1634
        %v2567 = vpack.c.b16 %v1639, %v1637
        %v2568 = vpack.c.b16 %v1640, %v1638
        %v2569 = vpack.c.b16 %v1643, %v1641
        %v2570 = vpack.c.b16 %v1644, %v1642
        %v2571 = vpack.c.b16 %v1647, %v1645
        %v2572 = vpack.c.b16 %v1648, %v1646
        %v2573 = vpack.c.b16 %v1651, %v1649
        %v2574 = vpack.c.b16 %v1652, %v1650
        %v2575 = vpack.c.b16 %v1655, %v1653
        %v2576 = vpack.c.b16 %v1656, %v1654
        %v2577 = vpack.c.b16 %v1659, %v1657
        %v2578 = vpack.c.b16 %v1660, %v1658
        %v2579 = vpack.c.b16 %v1663, %v1661
        %v2580 = vpack.c.b16 %v1664, %v1662
        %v2581 = vpack.c.b16 %v1667, %v1665
        %v2582 = vpack.c.b16 %v1668, %v1666
        %v2583 = vpack.c.b16 %v1671, %v1669
        %v2584 = vpack.c.b16 %v1672, %v1670
        %v2585 = vpack.c.b16 %v1675, %v1673
        %v2586 = vpack.c.b16 %v1676, %v1674
        %v2587 = vpack.c.b16 %v1679, %v1677
        %v2588 = vpack.c.b16 %v1680, %v1678
        %v2589 = vpack.c.b16 %v1683, %v1681
        %v2590 = vpack.c.b16 %v1684, %v1682
        %v2591 = vpack.c.b16 %v1687, %v1685
        %v2592 = vpack.c.b16 %v1688, %v1686
        %v2593 = vpack.c.b16 %v1691, %v1689
        %v2594 = vpack.c.b16 %v1692, %v1690
        %v2595 = vpack.c.b16 %v1695, %v1693
        %v2596 = vpack.c.b16 %v1696, %v1694
        %v2597 = vpack.c.b16 %v1699, %v1697
        %v2598 = vpack.c.b16 %v1700, %v1698
        %v2599 = vpack.c.b16 %v1703, %v1701
        %v2600 = vpack.c.b16 %v1704, %v1702
        %v2601 = vpack.c.b16 %v1707, %v1705
        %v2602 = vpack.c.b16 %v1708, %v1706
        %v2603 = vpack.c.b16 %v1711, %v1709
        %v2604 = vpack.c.b16 %v1712, %v1710
        %v2605 = vpack.c.b16 %v1715, %v1713
        %v2606 = vpack.c.b16 %v1716, %v1714
        %v2607 = vpack.c.b16 %v1719, %v1717
        %v2608 = vpack.c.b16 %v1720, %v1718
        %v2609 = vpack.c.b16 %v1723, %v1721
        %v2610 = vpack.c.b16 %v1724, %v1722
        %v2611 = vpack.c.b16 %v1727, %v1725
        %v2612 = vpack.c.b16 %v1728, %v1726
        %v2613 = vpack.c.b16 %v1731, %v1729
        %v2614 = vpack.c.b16 %v1732, %v1730
        %v2615 = vpack.c.b16 %v1735, %v1733
        %v2616 = vpack.c.b16 %v1736, %v1734
        %v2617 = vpack.c.b16 %v1739, %v1737
        %v2618 = vpack.c.b16 %v1740, %v1738
        %v2619 = vpack.c.b16 %v1743, %v1741
        %v2620 = vpack.c.b16 %v1744, %v1742
        %v2621 = vpack.c.b16 %v1747, %v1745
        %v2622 = vpack.c.b16 %v1748, %v1746
        %v2623 = vpack.c.b16 %v1751, %v1749
        %v2624 = vpack.c.b16 %v1752, %v1750
        %v2625 = vpack.c.b16 %v1755, %v1753
        %v2626 = vpack.c.b16 %v1756, %v1754
        %v2627 = vpack.c.b16 %v1759, %v1757
        %v2628 = vpack.c.b16 %v1760, %v1758
        %v2629 = vpack.c.b16 %v1763, %v1761
        %v2630 = vpack.c.b16 %v1764, %v1762
        %v2631 = vpack.c.b16 %v1767, %v1765
        %v2632 = vpack.c.b16 %v1768, %v1766
        %v2633 = vpack.c.b16 %v1771, %v1769
        %v2634 = vpack.c.b16 %v1772, %v1770
        %v2635 = vpack.c.b16 %v1775, %v1773
        %v2636 = vpack.c.b16 %v1776, %v1774
        %v2637 = vpack.c.b16 %v1779, %v1777
        %v2638 = vpack.c.b16 %v1780, %v1778
        %v2639 = vpack.c.b16 %v1783, %v1781
        %v2640 = vpack.c.b16 %v1784, %v1782
        %v2641 = vpack.c.b16 %v1787, %v1785
        %v2642 = vpack.c.b16 %v1788, %v1786
        %v2643 = vpack.c.b16 %v1791, %v1789
        %v2644 = vpack.c.b16 %v1792, %v1790
        %v2645 = vpack.c.b16 %v1795, %v1793
        %v2646 = vpack.c.b16 %v1796, %v1794
        %v2647 = vpack.c.b16 %v1799, %v1797
        %v2648 = vpack.c.b16 %v1800, %v1798
        %v2649 = vpack.c.b16 %v1803, %v1801
        %v2650 = vpack.c.b16 %v1804, %v1802
        %v2651 = vpack.c.b16 %v1807, %v1805
        %v2652 = vpack.c.b16 %v1808, %v1806
        %v2653 = vpack.c.b16 %v1811, %v1809
        %v2654 = vpack.c.b16 %v1812, %v1810
        %v2655 = vpack.c.b16 %v1815, %v1813
        %v2656 = vpack.c.b16 %v1816, %v1814
        %v2657 = vpack.c.b16 %v1819, %v1817
        %v2658 = vpack.c.b16 %v1820, %v1818
        %v2659 = vpack.c.b16 %v1823, %v1821
        %v2660 = vpack.c.b16 %v1824, %v1822
        %v2661 = vpack.c.b16 %v1827, %v1825
        %v2662 = vpack.c.b16 %v1828, %v1826
        %v2663 = vpack.c.b16 %v1831, %v1829
        %v2664 = vpack.c.b16 %v1832, %v1830
        %v2665 = vpack.c.b16 %v1835, %v1833
        %v2666 = vpack.c.b16 %v1836, %v1834
        %v2667 = vpack.c.b16 %v1839, %v1837
        %v2668 = vpack.c.b16 %v1840, %v1838
        %v2669 = vpack.c.b16 %v1843, %v1841
        %v2670 = vpack.c.b16 %v1844, %v1842
        %v2671 = vpack.c.b16 %v1847, %v1845
        %v2672 = vpack.c.b16 %v1848, %v1846
        %v2673 = vpack.c.b16 %v1851, %v1849
        %v2674 = vpack.c.b16 %v1852, %v1850
        %v2675 = vpack.c.b16 %v1855, %v1853
        %v2676 = vpack.c.b16 %v1856, %v1854
        %v2677 = vpack.c.b16 %v1859, %v1857
        %v2678 = vpack.c.b16 %v1860, %v1858
        %v2679 = vpack.c.b16 %v1863, %v1861
        %v2680 = vpack.c.b16 %v1864, %v1862
        %v2681 = vpack.c.b16 %v1867, %v1865
        %v2682 = vpack.c.b16 %v1868, %v1866
        %v2683 = vpack.c.b16 %v1871, %v1869
        %v2684 = vpack.c.b16 %v1872, %v1870
        %v2685 = vpack.c.b16 %v1875, %v1873
        %v2686 = vpack.c.b16 %v1876, %v1874
        %v2687 = vpack.c.b16 %v1879, %v1877
        %v2688 = vpack.c.b16 %v1880, %v1878
        %v2689 = vpack.c.b16 %v1883, %v1881
        %v2690 = vpack.c.b16 %v1884, %v1882
        %v2691 = vpack.c.b16 %v1887, %v1885
        %v2692 = vpack.c.b16 %v1888, %v1886
        %v2693 = vpack.c.b16 %v1891, %v1889
        %v2694 = vpack.c.b16 %v1892, %v1890
        %v2695 = vpack.c.b16 %v1895, %v1893
        %v2696 = vpack.c.b16 %v1896, %v1894
        %v2697 = vpack.c.b16 %v1899, %v1897
        %v2698 = vpack.c.b16 %v1900, %v1898
        %v2699 = vpack.c.b16 %v1903, %v1901
        %v2700 = vpack.c.b16 %v1904, %v1902
        %v2701 = vpack.c.b16 %v1907, %v1905
        %v2702 = vpack.c.b16 %v1908, %v1906
        %v2703 = vpack.c.b16 %v1911, %v1909
        %v2704 = vpack.c.b16 %v1912, %v1910
        %v2705 = vpack.c.b16 %v1915, %v1913
        %v2706 = vpack.c.b16 %v1916, %v1914
        %v2707 = vpack.c.b16 %v1919, %v1917
        %v2708 = vpack.c.b16 %v1920, %v1918
        %v2709 = vpack.c.b16 %v1923, %v1921
        %v2710 = vpack.c.b16 %v1924, %v1922
        %v2711 = vpack.c.b16 %v1927, %v1925
        %v2712 = vpack.c.b16 %v1928, %v1926
        %v2713 = vpack.c.b16 %v1931, %v1929
        %v2714 = vpack.c.b16 %v1932, %v1930
        %v2715 = vpack.c.b16 %v1935, %v1933
        %v2716 = vpack.c.b16 %v1936, %v1934
        %v2717 = vpack.c.b16 %v1939, %v1937
        %v2718 = vpack.c.b16 %v1940, %v1938
        %v2719 = vpack.c.b16 %v1943, %v1941
        %v2720 = vpack.c.b16 %v1944, %v1942
        %v2721 = vpack.c.b16 %v1947, %v1945
        %v2722 = vpack.c.b16 %v1948, %v1946
        %v2723 = vpack.c.b16 %v1951, %v1949
        %v2724 = vpack.c.b16 %v1952, %v1950
        %v2725 = vpack.c.b16 %v1955, %v1953
        %v2726 = vpack.c.b16 %v1956, %v1954
        %v2727 = vpack.c.b16 %v1959, %v1957
        %v2728 = vpack.c.b16 %v1960, %v1958
        %v2729 = vpack.c.b16 %v1963, %v1961
        %v2730 = vpack.c.b16 %v1964, %v1962
        %v2731 = vpack.c.b16 %v1967, %v1965
        %v2732 = vpack.c.b16 %v1968, %v1966
        %v2733 = vpack.c.b16 %v1971, %v1969
        %v2734 = vpack.c.b16 %v1972, %v1970
        %v2735 = vpack.c.b16 %v1975, %v1973
        %v2736 = vpack.c.b16 %v1976, %v1974
        %v2737 = vpack.c.b16 %v1979, %v1977
        %v2738 = vpack.c.b16 %v1980, %v1978
        %v2739 = vpack.c.b16 %v1983, %v1981
        %v2740 = vpack.c.b16 %v1984, %v1982
        %v2741 = vpack.c.b16 %v1987, %v1985
        %v2742 = vpack.c.b16 %v1988, %v1986
        %v2743 = vpack.c.b16 %v1991, %v1989
        %v2744 = vpack.c.b16 %v1992, %v1990
        %v2745 = vpack.c.b16 %v1995, %v1993
        %v2746 = vpack.c.b16 %v1996, %v1994
        %v2747 = vpack.c.b16 %v1999, %v1997
        %v2748 = vpack.c.b16 %v2000, %v1998
        %v2749 = vpack.c.b16 %v2003, %v2001
        %v2750 = vpack.c.b16 %v2004, %v2002
        %v2751 = vpack.c.b16 %v2007, %v2005
        %v2752 = vpack.c.b16 %v2008, %v2006
        %v2753 = vpack.c.b16 %v2011, %v2009
        %v2754 = vpack.c.b16 %v2012, %v2010
        %v2755 = vpack.c.b16 %v2015, %v2013
        %v2756 = vpack.c.b16 %v2016, %v2014
        %v2757 = vpack.c.b16 %v2019, %v2017
        %v2758 = vpack.c.b16 %v2020, %v2018
        %v2759 = vpack.c.b16 %v2023, %v2021
        %v2760 = vpack.c.b16 %v2024, %v2022
        %v2761 = vpack.c.b16 %v2027, %v2025
        %v2762 = vpack.c.b16 %v2028, %v2026
        %v2763 = vpack.c.b16 %v2031, %v2029
        %v2764 = vpack.c.b16 %v2032, %v2030
        %v2765 = vpack.c.b16 %v2035, %v2033
        %v2766 = vpack.c.b16 %v2036, %v2034
        %v2767 = vpack.c.b16 %v2039, %v2037
        %v2768 = vpack.c.b16 %v2040, %v2038
        %v2769 = vpack.c.b16 %v2043, %v2041
        %v2770 = vpack.c.b16 %v2044, %v2042
        %v2771 = vpack.c.b16 %v2047, %v2045
        %v2772 = vpack.c.b16 %v2048, %v2046
        %v2773 = vpack.c.b16 %v2051, %v2049
        %v2774 = vpack.c.b16 %v2052, %v2050
        %v2775 = vpack.c.b16 %v2055, %v2053
        %v2776 = vpack.c.b16 %v2056, %v2054
        %v2777 = vpack.c.b16 %v2059, %v2057
        %v2778 = vpack.c.b16 %v2060, %v2058
        %v2779 = vpack.c.b16 %v2063, %v2061
        %v2780 = vpack.c.b16 %v2064, %v2062
        %v2781 = vpack.c.b16 %v2067, %v2065
        %v2782 = vpack.c.b16 %v2068, %v2066
        %v2783 = vpack.c.b16 %v2071, %v2069
        %v2784 = vpack.c.b16 %v2072, %v2070
        %v2785 = vpack.c.b16 %v2075, %v2073
        %v2786 = vpack.c.b16 %v2076, %v2074
        %v2787 = vpack.c.b16 %v2079, %v2077
        %v2788 = vpack.c.b16 %v2080, %v2078
        %v2789 = vpack.c.b16 %v2083, %v2081
        %v2790 = vpack.c.b16 %v2084, %v2082
        %v2791 = vpack.c.b16 %v2087, %v2085
        %v2792 = vpack.c.b16 %v2088, %v2086
        %v2793 = vpack.c.b16 %v2091, %v2089
        %v2794 = vpack.c.b16 %v2092, %v2090
        %v2795 = vpack.c.b16 %v2095, %v2093
        %v2796 = vpack.c.b16 %v2096, %v2094
        %v2797 = vpack.c.b16 %v2099, %v2097
        %v2798 = vpack.c.b16 %v2100, %v2098
        %v2799 = vpack.c.b16 %v2103, %v2101
        %v2800 = vpack.c.b16 %v2104, %v2102
        %v2801 = vpack.c.b16 %v2107, %v2105
        %v2802 = vpack.c.b16 %v2108, %v2106
        %v2803 = vpack.c.b16 %v2111, %v2109
        %v2804 = vpack.c.b16 %v2112, %v2110
        %v2805 = vpack.c.b16 %v2115, %v2113
        %v2806 = vpack.c.b16 %v2116, %v2114
        %v2807 = vpack.c.b16 %v2119, %v2117
        %v2808 = vpack.c.b16 %v2120, %v2118
        %v2809 = vpack.c.b16 %v2123, %v2121
        %v2810 = vpack.c.b16 %v2124, %v2122
        %v2811 = vpack.c.b16 %v2127, %v2125
        %v2812 = vpack.c.b16 %v2128, %v2126
        %v2813 = vpack.c.b16 %v2131, %v2129
        %v2814 = vpack.c.b16 %v2132, %v2130
        %v2815 = vpack.c.b16 %v2135, %v2133
        %v2816 = vpack.c.b16 %v2136, %v2134
        %v2817 = vpack.c.b16 %v2139, %v2137
        %v2818 = vpack.c.b16 %v2140, %v2138
        %v2819 = vpack.c.b16 %v2143, %v2141
        %v2820 = vpack.c.b16 %v2144, %v2142
        %v2821 = vpack.c.b16 %v2147, %v2145
        %v2822 = vpack.c.b16 %v2148, %v2146
        %v2823 = vpack.c.b16 %v2151, %v2149
        %v2824 = vpack.c.b16 %v2152, %v2150
        %v2825 = vpack.c.b16 %v2155, %v2153
        %v2826 = vpack.c.b16 %v2156, %v2154
        %v2827 = vpack.c.b16 %v2159, %v2157
        %v2828 = vpack.c.b16 %v2160, %v2158
        %v2829 = vpack.c.b16 %v2163, %v2161
        %v2830 = vpack.c.b16 %v2164, %v2162
        %v2831 = vpack.c.b16 %v2167, %v2165
        %v2832 = vpack.c.b16 %v2168, %v2166
        %v2833 = vpack.c.b16 %v2171, %v2169
        %v2834 = vpack.c.b16 %v2172, %v2170
        %v2835 = vpack.c.b16 %v2175, %v2173
        %v2836 = vpack.c.b16 %v2176, %v2174
        %v2837 = vpack.c.b16 %v2179, %v2177
        %v2838 = vpack.c.b16 %v2180, %v2178
        %v2839 = vpack.c.b16 %v2183, %v2181
        %v2840 = vpack.c.b16 %v2184, %v2182
        %v2841 = vpack.c.b16 %v2187, %v2185
        %v2842 = vpack.c.b16 %v2188, %v2186
        %v2843 = vpack.c.b16 %v2191, %v2189
        %v2844 = vpack.c.b16 %v2192, %v2190
        %v2845 = vpack.c.b16 %v2195, %v2193
        %v2846 = vpack.c.b16 %v2196, %v2194
        %v2847 = vpack.c.b16 %v2199, %v2197
        %v2848 = vpack.c.b16 %v2200, %v2198
        %v2849 = vpack.c.b16 %v2203, %v2201
        %v2850 = vpack.c.b16 %v2204, %v2202
        %v2851 = vpack.c.b16 %v2207, %v2205
        %v2852 = vpack.c.b16 %v2208, %v2206
        %v2853 = vpack.c.b16 %v2211, %v2209
        %v2854 = vpack.c.b16 %v2212, %v2210
        %v2855 = vpack.c.b16 %v2215, %v2213
        %v2856 = vpack.c.b16 %v2216, %v2214
        %v2857 = vpack.c.b16 %v2219, %v2217
        %v2858 = vpack.c.b16 %v2220, %v2218
        %v2859 = vpack.c.b16 %v2223, %v2221
        %v2860 = vpack.c.b16 %v2224, %v2222
        %v2861 = vpack.c.b16 %v2227, %v2225
        %v2862 = vpack.c.b16 %v2228, %v2226
        %v2863 = vpack.c.b16 %v2231, %v2229
        %v2864 = vpack.c.b16 %v2232, %v2230
        %v2865 = vpack.c.b16 %v2235, %v2233
        %v2866 = vpack.c.b16 %v2236, %v2234
        %v2867 = vpack.c.b16 %v2239, %v2237
        %v2868 = vpack.c.b16 %v2240, %v2238
        %v2869 = vpack.c.b16 %v2243, %v2241
        %v2870 = vpack.c.b16 %v2244, %v2242
        %v2871 = vpack.c.b16 %v2247, %v2245
        %v2872 = vpack.c.b16 %v2248, %v2246
        %v2873 = vpack.c.b16 %v2251, %v2249
        %v2874 = vpack.c.b16 %v2252, %v2250
        %v2875 = vpack.c.b16 %v2255, %v2253
        %v2876 = vpack.c.b16 %v2256, %v2254
        %v2877 = vpack.c.b16 %v2259, %v2257
        %v2878 = vpack.c.b16 %v2260, %v2258
        %v2879 = vpack.c.b16 %v2263, %v2261
        %v2880 = vpack.c.b16 %v2264, %v2262
        %v2881 = vpack.c.b16 %v2267, %v2265
        %v2882 = vpack.c.b16 %v2268, %v2266
        %v2883 = vpack.c.b16 %v2271, %v2269
        %v2884 = vpack.c.b16 %v2272, %v2270
        %v2885 = vpack.c.b16 %v2275, %v2273
        %v2886 = vpack.c.b16 %v2276, %v2274
        %v2887 = vpack.c.b16 %v2279, %v2277
        %v2888 = vpack.c.b16 %v2280, %v2278
        %v2889 = vpack.c.b16 %v2283, %v2281
        %v2890 = vpack.c.b16 %v2284, %v2282
        %v2891 = vpack.c.b16 %v2287, %v2285
        %v2892 = vpack.c.b16 %v2288, %v2286
        %v2893 = vpack.c.b16 %v2291, %v2289
        %v2894 = vpack.c.b16 %v2292, %v2290
        %v2895 = vpack.c.b16 %v2295, %v2293
        %v2896 = vpack.c.b16 %v2296, %v2294
        %v2897 = vpack.c.b16 %v2299, %v2297
        %v2898 = vpack.c.b16 %v2300, %v2298
        %v2899 = vpack.c.b16 %v2303, %v2301
        %v2900 = vpack.c.b16 %v2304, %v2302
        %v2901 = vpack.c.b16 %v2307, %v2305
        %v2902 = vpack.c.b16 %v2308, %v2306
        %v2903 = vpack.c.b16 %v2311, %v2309
        %v2904 = vpack.c.b16 %v2312, %v2310
        %v2905 = vpack.c.b16 %v2315, %v2313
        %v2906 = vpack.c.b16 %v2316, %v2314
        %v2907 = vpack.c.b16 %v2319, %v2317
        %v2908 = vpack.c.b16 %v2320, %v2318
        %v2909 = vpack.c.b16 %v2323, %v2321
        %v2910 = vpack.c.b16 %v2324, %v2322
        %v2911 = vpack.c.b16 %v2327, %v2325
        %v2912 = vpack.c.b16 %v2328, %v2326
        %v2913 = vpack.c.b16 %v2331, %v2329
        %v2914 = vpack.c.b16 %v2332, %v2330
        %v2915 = vpack.c.b16 %v2335, %v2333
        %v2916 = vpack.c.b16 %v2336, %v2334
        %v2917 = vpack.c.b16 %v2339, %v2337
        %v2918 = vpack.c.b16 %v2340, %v2338
        %v2919 = vpack.c.b16 %v2343, %v2341
        %v2920 = vpack.c.b16 %v2344, %v2342
        %v2921 = vpack.c.b16 %v2347, %v2345
        %v2922 = vpack.c.b16 %v2348, %v2346
        %v2923 = vpack.c.b16 %v2351, %v2349
        %v2924 = vpack.c.b16 %v2352, %v2350
        %v2925 = vpack.c.b16 %v2355, %v2353
        %v2926 = vpack.c.b16 %v2356, %v2354
        %v2927 = vpack.c.b16 %v2359, %v2357
        %v2928 = vpack.c.b16 %v2360, %v2358
        %v2929 = vpack.c.b16 %v2363, %v2361
        %v2930 = vpack.c.b16 %v2364, %v2362
        %v2931 = vpack.c.b16 %v2367, %v2365
        %v2932 = vpack.c.b16 %v2368, %v2366
        %v2933 = vpack.c.b16 %v2371, %v2369
        %v2934 = vpack.c.b16 %v2372, %v2370
        %v2935 = vpack.c.b16 %v2375, %v2373
        %v2936 = vpack.c.b16 %v2376, %v2374
        %v2937 = vpack.c.b16 %v2379, %v2377
        %v2938 = vpack.c.b16 %v2380, %v2378
        %v2939 = vpack.c.b16 %v2383, %v2381
        %v2940 = vpack.c.b16 %v2384, %v2382
        %v2941 = vpack.c.b16 %v2387, %v2385
        %v2942 = vpack.c.b16 %v2388, %v2386
        %v2943 = vpack.c.b16 %v2391, %v2389
        %v2944 = vpack.c.b16 %v2392, %v2390
        %v2945 = vpack.c.b16 %v2395, %v2393
        %v2946 = vpack.c.b16 %v2396, %v2394
        %v2947 = vpack.c.b16 %v2399, %v2397
        %v2948 = vpack.c.b16 %v2400, %v2398
        %v2949 = vpack.c.b16 %v2403, %v2401
        %v2950 = vpack.c.b16 %v2404, %v2402
        %v2951 = vpack.c.b16 %v2407, %v2405
        %v2952 = vpack.c.b16 %v2408, %v2406
        %v2953 = vpack.c.b16 %v2411, %v2409
        %v2954 = vpack.c.b16 %v2412, %v2410
        %v2955 = vpack.c.b16 %v2415, %v2413
        %v2956 = vpack.c.b16 %v2416, %v2414
        %v2957 = vpack.c.b16 %v2419, %v2417
        %v2958 = vpack.c.b16 %v2420, %v2418
        %v2959 = vpack.c.b16 %v2423, %v2421
        %v2960 = vpack.c.b16 %v2424, %v2422
        %v2961 = vpack.c.b16 %v2427, %v2425
        %v2962 = vpack.c.b16 %v2428, %v2426
        %v2963 = vpack.c.b16 %v2431, %v2429
        %v2964 = vpack.c.b16 %v2432, %v2430
        %v2965 = vpack.c.b16 %v2435, %v2433
        %v2966 = vpack.c.b16 %v2436, %v2434
        %v2967 = vpack.c.b16 %v2439, %v2437
        %v2968 = vpack.c.b16 %v2440, %v2438
        %v2969 = vpack.c.b16 %v2443, %v2441
        %v2970 = vpack.c.b16 %v2444, %v2442
        %v2971 = vpack.c.b16 %v2447, %v2445
        %v2972 = vpack.c.b16 %v2448, %v2446
        %v2973 = vpack.c.b16 %v2451, %v2449
        %v2974 = vpack.c.b16 %v2452, %v2450
        %v2975 = vpack.c.b16 %v2455, %v2453
        %v2976 = vpack.c.b16 %v2456, %v2454
        %v2977 = vpack.c.b16 %v2459, %v2457
        %v2978 = vpack.c.b16 %v2460, %v2458
        %v2979 = vpack.c.b16 %v2463, %v2461
        %v2980 = vpack.c.b16 %v2464, %v2462
        %v2981 = vpack.c.b16 %v2467, %v2465
        %v2982 = vpack.c.b16 %v2468, %v2466
        %v2983 = vpack.c.b16 %v2471, %v2469
        %v2984 = vpack.c.b16 %v2472, %v2470
        %3497 = vmatprep.subr.bf16.mxu0 %v2474
        %3498 = vmatpush1.bf16.msra.mxu0 %v2473
        %3499 = vmatprep.subr.bf16.mxu0 %v2476
        %3500 = vmatpush1.bf16.msra.mxu0 %v2475
        %3501 = vmatprep.subr.bf16.mxu0 %v2478
        %3502 = vmatpush1.bf16.msra.mxu0 %v2477
        %3503 = vmatprep.subr.bf16.mxu0 %v2480
        %3504 = vmatpush1.bf16.msra.mxu0 %v2479
        %3505 = vmatprep.subr.bf16.mxu0 %v2482
        %3506 = vmatpush1.bf16.msra.mxu0 %v2481
        %3507 = vmatprep.subr.bf16.mxu0 %v2484
        %3508 = vmatpush1.bf16.msra.mxu0 %v2483
        %3509 = vmatprep.subr.bf16.mxu0 %v2486
        %3510 = vmatpush1.bf16.msra.mxu0 %v2485
        %3511 = vmatprep.subr.bf16.mxu0 %v2488
        %3512 = vmatpush1.bf16.msra.mxu0 %v2487
        %3513 = vmatprep.subr.bf16.mxu0 %v2490
        %3514 = vmatpush1.bf16.msra.mxu0 %v2489
        %3515 = vmatprep.subr.bf16.mxu0 %v2492
        %3516 = vmatpush1.bf16.msra.mxu0 %v2491
        %3517 = vmatprep.subr.bf16.mxu0 %v2494
        %3518 = vmatpush1.bf16.msra.mxu0 %v2493
        %3519 = vmatprep.subr.bf16.mxu0 %v2496
        %3520 = vmatpush1.bf16.msra.mxu0 %v2495
        %3521 = vmatprep.subr.bf16.mxu0 %v2498
        %3522 = vmatpush1.bf16.msra.mxu0 %v2497
        %3523 = vmatprep.subr.bf16.mxu0 %v2500
        %3524 = vmatpush1.bf16.msra.mxu0 %v2499
        %3525 = vmatprep.subr.bf16.mxu0 %v2502
        %3526 = vmatpush1.bf16.msra.mxu0 %v2501
        %3527 = vmatprep.subr.bf16.mxu0 %v2504
        %3528 = vmatpush1.bf16.msra.mxu0 %v2503
        %3529 = vmatprep.mubr.bf16.mxu0 %v784
        %3530 = vmatmul.mubr.bf16.gmra.mrb[0].mxu0 %v776
        %v3531 = vpop.f32.mrb[0].mxu0
        %v3532 = vadd.f32 %v754, %v3531
        %v3533 = vpop.f32.mrb[0].mxu0
        %v3534 = vadd.f32 %v758, %v3533
        %v3535 = vpop.f32.mrb[0].mxu0
        %v3536 = vpop.f32.mrb[0].mxu0
        %3537 = vdwg.mxu0
        %3538 = vmatprep.subr.bf16.mxu0 %v2506
        %3539 = vmatpush1.bf16.msra.mxu0 %v2505
        %3540 = vmatprep.subr.bf16.mxu0 %v2508
        %3541 = vmatpush1.bf16.msra.mxu0 %v2507
        %3542 = vmatprep.subr.bf16.mxu0 %v2510
        %3543 = vmatpush1.bf16.msra.mxu0 %v2509
        %3544 = vmatprep.subr.bf16.mxu0 %v2512
        %3545 = vmatpush1.bf16.msra.mxu0 %v2511
        %3546 = vmatprep.subr.bf16.mxu0 %v2514
        %3547 = vmatpush1.bf16.msra.mxu0 %v2513
        %3548 = vmatprep.subr.bf16.mxu0 %v2516
        %3549 = vmatpush1.bf16.msra.mxu0 %v2515
        %3550 = vmatprep.subr.bf16.mxu0 %v2518
        %3551 = vmatpush1.bf16.msra.mxu0 %v2517
        %3552 = vmatprep.subr.bf16.mxu0 %v2520
        %3553 = vmatpush1.bf16.msra.mxu0 %v2519
        %3554 = vmatprep.subr.bf16.mxu0 %v2522
        %3555 = vmatpush1.bf16.msra.mxu0 %v2521
        %3556 = vmatprep.subr.bf16.mxu0 %v2524
        %3557 = vmatpush1.bf16.msra.mxu0 %v2523
        %3558 = vmatprep.subr.bf16.mxu0 %v2526
        %3559 = vmatpush1.bf16.msra.mxu0 %v2525
        %3560 = vmatprep.subr.bf16.mxu0 %v2528
        %3561 = vmatpush1.bf16.msra.mxu0 %v2527
        %3562 = vmatprep.subr.bf16.mxu0 %v2530
        %3563 = vmatpush1.bf16.msra.mxu0 %v2529
        %3564 = vmatprep.subr.bf16.mxu0 %v2532
        %3565 = vmatpush1.bf16.msra.mxu0 %v2531
        %3566 = vmatprep.subr.bf16.mxu0 %v2534
        %3567 = vmatpush1.bf16.msra.mxu0 %v2533
        %3568 = vmatprep.subr.bf16.mxu0 %v2536
        %3569 = vmatpush1.bf16.msra.mxu0 %v2535
        %3570 = vmatprep.mubr.bf16.mxu0 %v785
        %3571 = vmatmul.mubr.bf16.gmra.mrb[0].mxu0 %v783
        %v3572 = vpop.f32.mrb[0].mxu0
        %v3573 = vadd.f32 %v3532, %v3572
        %v3574 = vpop.f32.mrb[0].mxu0
        %v3575 = vadd.f32 %v3534, %v3574
        %v3576 = vpop.f32.mrb[0].mxu0
        %v3577 = vpop.f32.mrb[0].mxu0
        %3578 = vdwg.mxu0
        %3579 = vmatprep.subr.bf16.mxu0 %v2538
        %3580 = vmatpush1.bf16.msra.mxu0 %v2537
        %3581 = vmatprep.subr.bf16.mxu0 %v2540
        %3582 = vmatpush1.bf16.msra.mxu0 %v2539
        %3583 = vmatprep.subr.bf16.mxu0 %v2542
        %3584 = vmatpush1.bf16.msra.mxu0 %v2541
        %3585 = vmatprep.subr.bf16.mxu0 %v2544
        %3586 = vmatpush1.bf16.msra.mxu0 %v2543
        %3587 = vmatprep.subr.bf16.mxu0 %v2546
        %3588 = vmatpush1.bf16.msra.mxu0 %v2545
        %3589 = vmatprep.subr.bf16.mxu0 %v2548
        %3590 = vmatpush1.bf16.msra.mxu0 %v2547
        %3591 = vmatprep.subr.bf16.mxu0 %v2550
        %3592 = vmatpush1.bf16.msra.mxu0 %v2549
        %3593 = vmatprep.subr.bf16.mxu0 %v2552
        %3594 = vmatpush1.bf16.msra.mxu0 %v2551
        %3595 = vmatprep.subr.bf16.mxu0 %v2554
        %3596 = vmatpush1.bf16.msra.mxu0 %v2553
        %3597 = vmatprep.subr.bf16.mxu0 %v2556
        %3598 = vmatpush1.bf16.msra.mxu0 %v2555
        %3599 = vmatprep.subr.bf16.mxu0 %v2558
        %3600 = vmatpush1.bf16.msra.mxu0 %v2557
        %3601 = vmatprep.subr.bf16.mxu0 %v2560
        %3602 = vmatpush1.bf16.msra.mxu0 %v2559
        %3603 = vmatprep.subr.bf16.mxu0 %v2562
        %3604 = vmatpush1.bf16.msra.mxu0 %v2561
        %3605 = vmatprep.subr.bf16.mxu0 %v2564
        %3606 = vmatpush1.bf16.msra.mxu0 %v2563
        %3607 = vmatprep.subr.bf16.mxu0 %v2566
        %3608 = vmatpush1.bf16.msra.mxu0 %v2565
        %3609 = vmatprep.subr.bf16.mxu0 %v2568
        %3610 = vmatpush1.bf16.msra.mxu0 %v2567
        %3611 = vmatprep.mubr.bf16.mxu0 %v801
        %3612 = vmatmul.mubr.bf16.gmra.mrb[0].mxu0 %v793
        %v3613 = vpop.f32.mrb[0].mxu0
        %v3614 = vadd.f32 %v3573, %v3613
        %v3615 = vpop.f32.mrb[0].mxu0
        %v3616 = vadd.f32 %v3575, %v3615
        %v3617 = vpop.f32.mrb[0].mxu0
        %v3618 = vpop.f32.mrb[0].mxu0
        %3619 = vdwg.mxu0
        %3620 = vmatprep.subr.bf16.mxu0 %v2570
        %3621 = vmatpush1.bf16.msra.mxu0 %v2569
        %3622 = vmatprep.subr.bf16.mxu0 %v2572
        %3623 = vmatpush1.bf16.msra.mxu0 %v2571
        %3624 = vmatprep.subr.bf16.mxu0 %v2574
        %3625 = vmatpush1.bf16.msra.mxu0 %v2573
        %3626 = vmatprep.subr.bf16.mxu0 %v2576
        %3627 = vmatpush1.bf16.msra.mxu0 %v2575
        %3628 = vmatprep.subr.bf16.mxu0 %v2578
        %3629 = vmatpush1.bf16.msra.mxu0 %v2577
        %3630 = vmatprep.subr.bf16.mxu0 %v2580
        %3631 = vmatpush1.bf16.msra.mxu0 %v2579
        %3632 = vmatprep.subr.bf16.mxu0 %v2582
        %3633 = vmatpush1.bf16.msra.mxu0 %v2581
        %3634 = vmatprep.subr.bf16.mxu0 %v2584
        %3635 = vmatpush1.bf16.msra.mxu0 %v2583
        %3636 = vmatprep.subr.bf16.mxu0 %v2586
        %3637 = vmatpush1.bf16.msra.mxu0 %v2585
        %3638 = vmatprep.subr.bf16.mxu0 %v2588
        %3639 = vmatpush1.bf16.msra.mxu0 %v2587
        %3640 = vmatprep.subr.bf16.mxu0 %v2590
        %3641 = vmatpush1.bf16.msra.mxu0 %v2589
        %3642 = vmatprep.subr.bf16.mxu0 %v2592
        %3643 = vmatpush1.bf16.msra.mxu0 %v2591
        %3644 = vmatprep.subr.bf16.mxu0 %v2594
        %3645 = vmatpush1.bf16.msra.mxu0 %v2593
        %3646 = vmatprep.subr.bf16.mxu0 %v2596
        %3647 = vmatpush1.bf16.msra.mxu0 %v2595
        %3648 = vmatprep.subr.bf16.mxu0 %v2598
        %3649 = vmatpush1.bf16.msra.mxu0 %v2597
        %3650 = vmatprep.subr.bf16.mxu0 %v2600
        %3651 = vmatpush1.bf16.msra.mxu0 %v2599
        %3652 = vmatprep.mubr.bf16.mxu0 %v802
        %3653 = vmatmul.mubr.bf16.gmra.mrb[0].mxu0 %v800
        %v3654 = vpop.f32.mrb[0].mxu0
        %v3655 = vadd.f32 %v3614, %v3654
        %v3656 = vpop.f32.mrb[0].mxu0
        %v3657 = vadd.f32 %v3616, %v3656
        %v3658 = vpop.f32.mrb[0].mxu0
        %v3659 = vpop.f32.mrb[0].mxu0
        %3660 = vdwg.mxu0
        %3661 = vmatprep.subr.bf16.mxu0 %v2602
        %3662 = vmatpush1.bf16.msra.mxu0 %v2601
        %3663 = vmatprep.subr.bf16.mxu0 %v2604
        %3664 = vmatpush1.bf16.msra.mxu0 %v2603
        %3665 = vmatprep.subr.bf16.mxu0 %v2606
        %3666 = vmatpush1.bf16.msra.mxu0 %v2605
        %3667 = vmatprep.subr.bf16.mxu0 %v2608
        %3668 = vmatpush1.bf16.msra.mxu0 %v2607
        %3669 = vmatprep.subr.bf16.mxu0 %v2610
        %3670 = vmatpush1.bf16.msra.mxu0 %v2609
        %3671 = vmatprep.subr.bf16.mxu0 %v2612
        %3672 = vmatpush1.bf16.msra.mxu0 %v2611
        %3673 = vmatprep.subr.bf16.mxu0 %v2614
        %3674 = vmatpush1.bf16.msra.mxu0 %v2613
        %3675 = vmatprep.subr.bf16.mxu0 %v2616
        %3676 = vmatpush1.bf16.msra.mxu0 %v2615
        %3677 = vmatprep.subr.bf16.mxu0 %v2618
        %3678 = vmatpush1.bf16.msra.mxu0 %v2617
        %3679 = vmatprep.subr.bf16.mxu0 %v2620
        %3680 = vmatpush1.bf16.msra.mxu0 %v2619
        %3681 = vmatprep.subr.bf16.mxu0 %v2622
        %3682 = vmatpush1.bf16.msra.mxu0 %v2621
        %3683 = vmatprep.subr.bf16.mxu0 %v2624
        %3684 = vmatpush1.bf16.msra.mxu0 %v2623
        %3685 = vmatprep.subr.bf16.mxu0 %v2626
        %3686 = vmatpush1.bf16.msra.mxu0 %v2625
        %3687 = vmatprep.subr.bf16.mxu0 %v2628
        %3688 = vmatpush1.bf16.msra.mxu0 %v2627
        %3689 = vmatprep.subr.bf16.mxu0 %v2630
        %3690 = vmatpush1.bf16.msra.mxu0 %v2629
        %3691 = vmatprep.subr.bf16.mxu0 %v2632
        %3692 = vmatpush1.bf16.msra.mxu0 %v2631
        %3693 = vmatprep.mubr.bf16.mxu0 %v818
        %3694 = vmatmul.mubr.bf16.gmra.mrb[0].mxu0 %v810
        %v3695 = vpop.f32.mrb[0].mxu0
        %v3696 = vadd.f32 %v3655, %v3695
        %v3697 = vpop.f32.mrb[0].mxu0
        %v3698 = vadd.f32 %v3657, %v3697
        %v3699 = vpop.f32.mrb[0].mxu0
        %v3700 = vpop.f32.mrb[0].mxu0
        %3701 = vdwg.mxu0
        %3702 = vmatprep.subr.bf16.mxu0 %v2634
        %3703 = vmatpush1.bf16.msra.mxu0 %v2633
        %3704 = vmatprep.subr.bf16.mxu0 %v2636
        %3705 = vmatpush1.bf16.msra.mxu0 %v2635
        %3706 = vmatprep.subr.bf16.mxu0 %v2638
        %3707 = vmatpush1.bf16.msra.mxu0 %v2637
        %3708 = vmatprep.subr.bf16.mxu0 %v2640
        %3709 = vmatpush1.bf16.msra.mxu0 %v2639
        %3710 = vmatprep.subr.bf16.mxu0 %v2642
        %3711 = vmatpush1.bf16.msra.mxu0 %v2641
        %3712 = vmatprep.subr.bf16.mxu0 %v2644
        %3713 = vmatpush1.bf16.msra.mxu0 %v2643
        %3714 = vmatprep.subr.bf16.mxu0 %v2646
        %3715 = vmatpush1.bf16.msra.mxu0 %v2645
        %3716 = vmatprep.subr.bf16.mxu0 %v2648
        %3717 = vmatpush1.bf16.msra.mxu0 %v2647
        %3718 = vmatprep.subr.bf16.mxu0 %v2650
        %3719 = vmatpush1.bf16.msra.mxu0 %v2649
        %3720 = vmatprep.subr.bf16.mxu0 %v2652
        %3721 = vmatpush1.bf16.msra.mxu0 %v2651
        %3722 = vmatprep.subr.bf16.mxu0 %v2654
        %3723 = vmatpush1.bf16.msra.mxu0 %v2653
        %3724 = vmatprep.subr.bf16.mxu0 %v2656
        %3725 = vmatpush1.bf16.msra.mxu0 %v2655
        %3726 = vmatprep.subr.bf16.mxu0 %v2658
        %3727 = vmatpush1.bf16.msra.mxu0 %v2657
        %3728 = vmatprep.subr.bf16.mxu0 %v2660
        %3729 = vmatpush1.bf16.msra.mxu0 %v2659
        %3730 = vmatprep.subr.bf16.mxu0 %v2662
        %3731 = vmatpush1.bf16.msra.mxu0 %v2661
        %3732 = vmatprep.subr.bf16.mxu0 %v2664
        %3733 = vmatpush1.bf16.msra.mxu0 %v2663
        %3734 = vmatprep.mubr.bf16.mxu0 %v819
        %3735 = vmatmul.mubr.bf16.gmra.mrb[0].mxu0 %v817
        %v3736 = vpop.f32.mrb[0].mxu0
        %v3737 = vadd.f32 %v3696, %v3736
        %v3738 = vpop.f32.mrb[0].mxu0
        %v3739 = vadd.f32 %v3698, %v3738
        %v3740 = vpop.f32.mrb[0].mxu0
        %v3741 = vpop.f32.mrb[0].mxu0
        %3742 = vdwg.mxu0
        %3743 = vmatprep.subr.bf16.mxu0 %v2666
        %3744 = vmatpush1.bf16.msra.mxu0 %v2665
        %3745 = vmatprep.subr.bf16.mxu0 %v2668
        %3746 = vmatpush1.bf16.msra.mxu0 %v2667
        %3747 = vmatprep.subr.bf16.mxu0 %v2670
        %3748 = vmatpush1.bf16.msra.mxu0 %v2669
        %3749 = vmatprep.subr.bf16.mxu0 %v2672
        %3750 = vmatpush1.bf16.msra.mxu0 %v2671
        %3751 = vmatprep.subr.bf16.mxu0 %v2674
        %3752 = vmatpush1.bf16.msra.mxu0 %v2673
        %3753 = vmatprep.subr.bf16.mxu0 %v2676
        %3754 = vmatpush1.bf16.msra.mxu0 %v2675
        %3755 = vmatprep.subr.bf16.mxu0 %v2678
        %3756 = vmatpush1.bf16.msra.mxu0 %v2677
        %3757 = vmatprep.subr.bf16.mxu0 %v2680
        %3758 = vmatpush1.bf16.msra.mxu0 %v2679
        %3759 = vmatprep.subr.bf16.mxu0 %v2682
        %3760 = vmatpush1.bf16.msra.mxu0 %v2681
        %3761 = vmatprep.subr.bf16.mxu0 %v2684
        %3762 = vmatpush1.bf16.msra.mxu0 %v2683
        %3763 = vmatprep.subr.bf16.mxu0 %v2686
        %3764 = vmatpush1.bf16.msra.mxu0 %v2685
        %3765 = vmatprep.subr.bf16.mxu0 %v2688
        %3766 = vmatpush1.bf16.msra.mxu0 %v2687
        %3767 = vmatprep.subr.bf16.mxu0 %v2690
        %3768 = vmatpush1.bf16.msra.mxu0 %v2689
        %3769 = vmatprep.subr.bf16.mxu0 %v2692
        %3770 = vmatpush1.bf16.msra.mxu0 %v2691
        %3771 = vmatprep.subr.bf16.mxu0 %v2694
        %3772 = vmatpush1.bf16.msra.mxu0 %v2693
        %3773 = vmatprep.subr.bf16.mxu0 %v2696
        %3774 = vmatpush1.bf16.msra.mxu0 %v2695
        %3775 = vmatprep.mubr.bf16.mxu0 %v835
        %3776 = vmatmul.mubr.bf16.gmra.mrb[0].mxu0 %v827
        %v3777 = vpop.f32.mrb[0].mxu0
        %v3778 = vadd.f32 %v3737, %v3777
        %v3779 = vpop.f32.mrb[0].mxu0
        %v3780 = vadd.f32 %v3739, %v3779
        %v3781 = vpop.f32.mrb[0].mxu0
        %v3782 = vpop.f32.mrb[0].mxu0
        %3783 = vdwg.mxu0
        %3784 = vmatprep.subr.bf16.mxu0 %v2698
        %3785 = vmatpush1.bf16.msra.mxu0 %v2697
        %3786 = vmatprep.subr.bf16.mxu0 %v2700
        %3787 = vmatpush1.bf16.msra.mxu0 %v2699
        %3788 = vmatprep.subr.bf16.mxu0 %v2702
        %3789 = vmatpush1.bf16.msra.mxu0 %v2701
        %3790 = vmatprep.subr.bf16.mxu0 %v2704
        %3791 = vmatpush1.bf16.msra.mxu0 %v2703
        %3792 = vmatprep.subr.bf16.mxu0 %v2706
        %3793 = vmatpush1.bf16.msra.mxu0 %v2705
        %3794 = vmatprep.subr.bf16.mxu0 %v2708
        %3795 = vmatpush1.bf16.msra.mxu0 %v2707
        %3796 = vmatprep.subr.bf16.mxu0 %v2710
        %3797 = vmatpush1.bf16.msra.mxu0 %v2709
        %3798 = vmatprep.subr.bf16.mxu0 %v2712
        %3799 = vmatpush1.bf16.msra.mxu0 %v2711
        %3800 = vmatprep.subr.bf16.mxu0 %v2714
        %3801 = vmatpush1.bf16.msra.mxu0 %v2713
        %3802 = vmatprep.subr.bf16.mxu0 %v2716
        %3803 = vmatpush1.bf16.msra.mxu0 %v2715
        %3804 = vmatprep.subr.bf16.mxu0 %v2718
        %3805 = vmatpush1.bf16.msra.mxu0 %v2717
        %3806 = vmatprep.subr.bf16.mxu0 %v2720
        %3807 = vmatpush1.bf16.msra.mxu0 %v2719
        %3808 = vmatprep.subr.bf16.mxu0 %v2722
        %3809 = vmatpush1.bf16.msra.mxu0 %v2721
        %3810 = vmatprep.subr.bf16.mxu0 %v2724
        %3811 = vmatpush1.bf16.msra.mxu0 %v2723
        %3812 = vmatprep.subr.bf16.mxu0 %v2726
        %3813 = vmatpush1.bf16.msra.mxu0 %v2725
        %3814 = vmatprep.subr.bf16.mxu0 %v2728
        %3815 = vmatpush1.bf16.msra.mxu0 %v2727
        %3816 = vmatprep.mubr.bf16.mxu0 %v836
        %3817 = vmatmul.mubr.bf16.gmra.mrb[0].mxu0 %v834
        %v3818 = vpop.f32.mrb[0].mxu0
        %v3819 = vadd.f32 %v3778, %v3818
        %v3820 = vpop.f32.mrb[0].mxu0
        %v3821 = vadd.f32 %v3780, %v3820
        %v3822 = vpop.f32.mrb[0].mxu0
        %v3823 = vpop.f32.mrb[0].mxu0
        %3824 = vdwg.mxu0
        %3825 = vmatprep.subr.bf16.mxu0 %v2730
        %3826 = vmatpush1.bf16.msra.mxu0 %v2729
        %3827 = vmatprep.subr.bf16.mxu0 %v2732
        %3828 = vmatpush1.bf16.msra.mxu0 %v2731
        %3829 = vmatprep.subr.bf16.mxu0 %v2734
        %3830 = vmatpush1.bf16.msra.mxu0 %v2733
        %3831 = vmatprep.subr.bf16.mxu0 %v2736
        %3832 = vmatpush1.bf16.msra.mxu0 %v2735
        %3833 = vmatprep.subr.bf16.mxu0 %v2738
        %3834 = vmatpush1.bf16.msra.mxu0 %v2737
        %3835 = vmatprep.subr.bf16.mxu0 %v2740
        %3836 = vmatpush1.bf16.msra.mxu0 %v2739
        %3837 = vmatprep.subr.bf16.mxu0 %v2742
        %3838 = vmatpush1.bf16.msra.mxu0 %v2741
        %3839 = vmatprep.subr.bf16.mxu0 %v2744
        %3840 = vmatpush1.bf16.msra.mxu0 %v2743
        %3841 = vmatprep.subr.bf16.mxu0 %v2746
        %3842 = vmatpush1.bf16.msra.mxu0 %v2745
        %3843 = vmatprep.subr.bf16.mxu0 %v2748
        %3844 = vmatpush1.bf16.msra.mxu0 %v2747
        %3845 = vmatprep.subr.bf16.mxu0 %v2750
        %3846 = vmatpush1.bf16.msra.mxu0 %v2749
        %3847 = vmatprep.subr.bf16.mxu0 %v2752
        %3848 = vmatpush1.bf16.msra.mxu0 %v2751
        %3849 = vmatprep.subr.bf16.mxu0 %v2754
        %3850 = vmatpush1.bf16.msra.mxu0 %v2753
        %3851 = vmatprep.subr.bf16.mxu0 %v2756
        %3852 = vmatpush1.bf16.msra.mxu0 %v2755
        %3853 = vmatprep.subr.bf16.mxu0 %v2758
        %3854 = vmatpush1.bf16.msra.mxu0 %v2757
        %3855 = vmatprep.subr.bf16.mxu0 %v2760
        %3856 = vmatpush1.bf16.msra.mxu0 %v2759
        %3857 = vmatprep.mubr.bf16.mxu0 %v852
        %3858 = vmatmul.mubr.bf16.gmra.mrb[0].mxu0 %v844
        %v3859 = vpop.f32.mrb[0].mxu0
        %v3860 = vadd.f32 %v3819, %v3859
        %v3861 = vpop.f32.mrb[0].mxu0
        %v3862 = vadd.f32 %v3821, %v3861
        %v3863 = vpop.f32.mrb[0].mxu0
        %v3864 = vpop.f32.mrb[0].mxu0
        %3865 = vdwg.mxu0
        %3866 = vmatprep.subr.bf16.mxu0 %v2762
        %3867 = vmatpush1.bf16.msra.mxu0 %v2761
        %3868 = vmatprep.subr.bf16.mxu0 %v2764
        %3869 = vmatpush1.bf16.msra.mxu0 %v2763
        %3870 = vmatprep.subr.bf16.mxu0 %v2766
        %3871 = vmatpush1.bf16.msra.mxu0 %v2765
        %3872 = vmatprep.subr.bf16.mxu0 %v2768
        %3873 = vmatpush1.bf16.msra.mxu0 %v2767
        %3874 = vmatprep.subr.bf16.mxu0 %v2770
        %3875 = vmatpush1.bf16.msra.mxu0 %v2769
        %3876 = vmatprep.subr.bf16.mxu0 %v2772
        %3877 = vmatpush1.bf16.msra.mxu0 %v2771
        %3878 = vmatprep.subr.bf16.mxu0 %v2774
        %3879 = vmatpush1.bf16.msra.mxu0 %v2773
        %3880 = vmatprep.subr.bf16.mxu0 %v2776
        %3881 = vmatpush1.bf16.msra.mxu0 %v2775
        %3882 = vmatprep.subr.bf16.mxu0 %v2778
        %3883 = vmatpush1.bf16.msra.mxu0 %v2777
        %3884 = vmatprep.subr.bf16.mxu0 %v2780
        %3885 = vmatpush1.bf16.msra.mxu0 %v2779
        %3886 = vmatprep.subr.bf16.mxu0 %v2782
        %3887 = vmatpush1.bf16.msra.mxu0 %v2781
        %3888 = vmatprep.subr.bf16.mxu0 %v2784
        %3889 = vmatpush1.bf16.msra.mxu0 %v2783
        %3890 = vmatprep.subr.bf16.mxu0 %v2786
        %3891 = vmatpush1.bf16.msra.mxu0 %v2785
        %3892 = vmatprep.subr.bf16.mxu0 %v2788
        %3893 = vmatpush1.bf16.msra.mxu0 %v2787
        %3894 = vmatprep.subr.bf16.mxu0 %v2790
        %3895 = vmatpush1.bf16.msra.mxu0 %v2789
        %3896 = vmatprep.subr.bf16.mxu0 %v2792
        %3897 = vmatpush1.bf16.msra.mxu0 %v2791
        %3898 = vmatprep.mubr.bf16.mxu0 %v853
        %3899 = vmatmul.mubr.bf16.gmra.mrb[0].mxu0 %v851
        %v3900 = vpop.f32.mrb[0].mxu0
        %v3901 = vadd.f32 %v3860, %v3900
        %v3902 = vpop.f32.mrb[0].mxu0
        %v3903 = vadd.f32 %v3862, %v3902
        %v3904 = vpop.f32.mrb[0].mxu0
        %v3905 = vpop.f32.mrb[0].mxu0
        %3906 = vdwg.mxu0
        %3907 = vmatprep.subr.bf16.mxu0 %v2794
        %3908 = vmatpush1.bf16.msra.mxu0 %v2793
        %3909 = vmatprep.subr.bf16.mxu0 %v2796
        %3910 = vmatpush1.bf16.msra.mxu0 %v2795
        %3911 = vmatprep.subr.bf16.mxu0 %v2798
        %3912 = vmatpush1.bf16.msra.mxu0 %v2797
        %3913 = vmatprep.subr.bf16.mxu0 %v2800
        %3914 = vmatpush1.bf16.msra.mxu0 %v2799
        %3915 = vmatprep.subr.bf16.mxu0 %v2802
        %3916 = vmatpush1.bf16.msra.mxu0 %v2801
        %3917 = vmatprep.subr.bf16.mxu0 %v2804
        %3918 = vmatpush1.bf16.msra.mxu0 %v2803
        %3919 = vmatprep.subr.bf16.mxu0 %v2806
        %3920 = vmatpush1.bf16.msra.mxu0 %v2805
        %3921 = vmatprep.subr.bf16.mxu0 %v2808
        %3922 = vmatpush1.bf16.msra.mxu0 %v2807
        %3923 = vmatprep.subr.bf16.mxu0 %v2810
        %3924 = vmatpush1.bf16.msra.mxu0 %v2809
        %3925 = vmatprep.subr.bf16.mxu0 %v2812
        %3926 = vmatpush1.bf16.msra.mxu0 %v2811
        %3927 = vmatprep.subr.bf16.mxu0 %v2814
        %3928 = vmatpush1.bf16.msra.mxu0 %v2813
        %3929 = vmatprep.subr.bf16.mxu0 %v2816
        %3930 = vmatpush1.bf16.msra.mxu0 %v2815
        %3931 = vmatprep.subr.bf16.mxu0 %v2818
        %3932 = vmatpush1.bf16.msra.mxu0 %v2817
        %3933 = vmatprep.subr.bf16.mxu0 %v2820
        %3934 = vmatpush1.bf16.msra.mxu0 %v2819
        %3935 = vmatprep.subr.bf16.mxu0 %v2822
        %3936 = vmatpush1.bf16.msra.mxu0 %v2821
        %3937 = vmatprep.subr.bf16.mxu0 %v2824
        %3938 = vmatpush1.bf16.msra.mxu0 %v2823
        %3939 = vmatprep.mubr.bf16.mxu0 %v869
        %3940 = vmatmul.mubr.bf16.gmra.mrb[0].mxu0 %v861
        %v3941 = vpop.f32.mrb[0].mxu0
        %v3942 = vadd.f32 %v3901, %v3941
        %v3943 = vpop.f32.mrb[0].mxu0
        %v3944 = vadd.f32 %v3903, %v3943
        %v3945 = vpop.f32.mrb[0].mxu0
        %v3946 = vpop.f32.mrb[0].mxu0
        %3947 = vdwg.mxu0
        %3948 = vmatprep.subr.bf16.mxu0 %v2826
        %3949 = vmatpush1.bf16.msra.mxu0 %v2825
        %3950 = vmatprep.subr.bf16.mxu0 %v2828
        %3951 = vmatpush1.bf16.msra.mxu0 %v2827
        %3952 = vmatprep.subr.bf16.mxu0 %v2830
        %3953 = vmatpush1.bf16.msra.mxu0 %v2829
        %3954 = vmatprep.subr.bf16.mxu0 %v2832
        %3955 = vmatpush1.bf16.msra.mxu0 %v2831
        %3956 = vmatprep.subr.bf16.mxu0 %v2834
        %3957 = vmatpush1.bf16.msra.mxu0 %v2833
        %3958 = vmatprep.subr.bf16.mxu0 %v2836
        %3959 = vmatpush1.bf16.msra.mxu0 %v2835
        %3960 = vmatprep.subr.bf16.mxu0 %v2838
        %3961 = vmatpush1.bf16.msra.mxu0 %v2837
        %3962 = vmatprep.subr.bf16.mxu0 %v2840
        %3963 = vmatpush1.bf16.msra.mxu0 %v2839
        %3964 = vmatprep.subr.bf16.mxu0 %v2842
        %3965 = vmatpush1.bf16.msra.mxu0 %v2841
        %3966 = vmatprep.subr.bf16.mxu0 %v2844
        %3967 = vmatpush1.bf16.msra.mxu0 %v2843
        %3968 = vmatprep.subr.bf16.mxu0 %v2846
        %3969 = vmatpush1.bf16.msra.mxu0 %v2845
        %3970 = vmatprep.subr.bf16.mxu0 %v2848
        %3971 = vmatpush1.bf16.msra.mxu0 %v2847
        %3972 = vmatprep.subr.bf16.mxu0 %v2850
        %3973 = vmatpush1.bf16.msra.mxu0 %v2849
        %3974 = vmatprep.subr.bf16.mxu0 %v2852
        %3975 = vmatpush1.bf16.msra.mxu0 %v2851
        %3976 = vmatprep.subr.bf16.mxu0 %v2854
        %3977 = vmatpush1.bf16.msra.mxu0 %v2853
        %3978 = vmatprep.subr.bf16.mxu0 %v2856
        %3979 = vmatpush1.bf16.msra.mxu0 %v2855
        %3980 = vmatprep.mubr.bf16.mxu0 %v870
        %3981 = vmatmul.mubr.bf16.gmra.mrb[0].mxu0 %v868
        %v3982 = vpop.f32.mrb[0].mxu0
        %v3983 = vadd.f32 %v3942, %v3982
        %v3984 = vpop.f32.mrb[0].mxu0
        %v3985 = vadd.f32 %v3944, %v3984
        %v3986 = vpop.f32.mrb[0].mxu0
        %v3987 = vpop.f32.mrb[0].mxu0
        %3988 = vdwg.mxu0
        %3989 = vmatprep.subr.bf16.mxu0 %v2858
        %3990 = vmatpush1.bf16.msra.mxu0 %v2857
        %3991 = vmatprep.subr.bf16.mxu0 %v2860
        %3992 = vmatpush1.bf16.msra.mxu0 %v2859
        %3993 = vmatprep.subr.bf16.mxu0 %v2862
        %3994 = vmatpush1.bf16.msra.mxu0 %v2861
        %3995 = vmatprep.subr.bf16.mxu0 %v2864
        %3996 = vmatpush1.bf16.msra.mxu0 %v2863
        %3997 = vmatprep.subr.bf16.mxu0 %v2866
        %3998 = vmatpush1.bf16.msra.mxu0 %v2865
        %3999 = vmatprep.subr.bf16.mxu0 %v2868
        %4000 = vmatpush1.bf16.msra.mxu0 %v2867
        %4001 = vmatprep.subr.bf16.mxu0 %v2870
        %4002 = vmatpush1.bf16.msra.mxu0 %v2869
        %4003 = vmatprep.subr.bf16.mxu0 %v2872
        %4004 = vmatpush1.bf16.msra.mxu0 %v2871
        %4005 = vmatprep.subr.bf16.mxu0 %v2874
        %4006 = vmatpush1.bf16.msra.mxu0 %v2873
        %4007 = vmatprep.subr.bf16.mxu0 %v2876
        %4008 = vmatpush1.bf16.msra.mxu0 %v2875
        %4009 = vmatprep.subr.bf16.mxu0 %v2878
        %4010 = vmatpush1.bf16.msra.mxu0 %v2877
        %4011 = vmatprep.subr.bf16.mxu0 %v2880
        %4012 = vmatpush1.bf16.msra.mxu0 %v2879
        %4013 = vmatprep.subr.bf16.mxu0 %v2882
        %4014 = vmatpush1.bf16.msra.mxu0 %v2881
        %4015 = vmatprep.subr.bf16.mxu0 %v2884
        %4016 = vmatpush1.bf16.msra.mxu0 %v2883
        %4017 = vmatprep.subr.bf16.mxu0 %v2886
        %4018 = vmatpush1.bf16.msra.mxu0 %v2885
        %4019 = vmatprep.subr.bf16.mxu0 %v2888
        %4020 = vmatpush1.bf16.msra.mxu0 %v2887
        %4021 = vmatprep.mubr.bf16.mxu0 %v886
        %4022 = vmatmul.mubr.bf16.gmra.mrb[0].mxu0 %v878
        %v4023 = vpop.f32.mrb[0].mxu0
        %v4024 = vadd.f32 %v3983, %v4023
        %v4025 = vpop.f32.mrb[0].mxu0
        %v4026 = vadd.f32 %v3985, %v4025
        %v4027 = vpop.f32.mrb[0].mxu0
        %v4028 = vpop.f32.mrb[0].mxu0
        %4029 = vdwg.mxu0
        %4030 = vmatprep.subr.bf16.mxu0 %v2890
        %4031 = vmatpush1.bf16.msra.mxu0 %v2889
        %4032 = vmatprep.subr.bf16.mxu0 %v2892
        %4033 = vmatpush1.bf16.msra.mxu0 %v2891
        %4034 = vmatprep.subr.bf16.mxu0 %v2894
        %4035 = vmatpush1.bf16.msra.mxu0 %v2893
        %4036 = vmatprep.subr.bf16.mxu0 %v2896
        %4037 = vmatpush1.bf16.msra.mxu0 %v2895
        %4038 = vmatprep.subr.bf16.mxu0 %v2898
        %4039 = vmatpush1.bf16.msra.mxu0 %v2897
        %4040 = vmatprep.subr.bf16.mxu0 %v2900
        %4041 = vmatpush1.bf16.msra.mxu0 %v2899
        %4042 = vmatprep.subr.bf16.mxu0 %v2902
        %4043 = vmatpush1.bf16.msra.mxu0 %v2901
        %4044 = vmatprep.subr.bf16.mxu0 %v2904
        %4045 = vmatpush1.bf16.msra.mxu0 %v2903
        %4046 = vmatprep.subr.bf16.mxu0 %v2906
        %4047 = vmatpush1.bf16.msra.mxu0 %v2905
        %4048 = vmatprep.subr.bf16.mxu0 %v2908
        %4049 = vmatpush1.bf16.msra.mxu0 %v2907
        %4050 = vmatprep.subr.bf16.mxu0 %v2910
        %4051 = vmatpush1.bf16.msra.mxu0 %v2909
        %4052 = vmatprep.subr.bf16.mxu0 %v2912
        %4053 = vmatpush1.bf16.msra.mxu0 %v2911
        %4054 = vmatprep.subr.bf16.mxu0 %v2914
        %4055 = vmatpush1.bf16.msra.mxu0 %v2913
        %4056 = vmatprep.subr.bf16.mxu0 %v2916
        %4057 = vmatpush1.bf16.msra.mxu0 %v2915
        %4058 = vmatprep.subr.bf16.mxu0 %v2918
        %4059 = vmatpush1.bf16.msra.mxu0 %v2917
        %4060 = vmatprep.subr.bf16.mxu0 %v2920
        %4061 = vmatpush1.bf16.msra.mxu0 %v2919
        %4062 = vmatprep.mubr.bf16.mxu0 %v887
        %4063 = vmatmul.mubr.bf16.gmra.mrb[0].mxu0 %v885
        %v4064 = vpop.f32.mrb[0].mxu0
        %v4065 = vadd.f32 %v4024, %v4064
        %v4066 = vpop.f32.mrb[0].mxu0
        %v4067 = vadd.f32 %v4026, %v4066
        %v4068 = vpop.f32.mrb[0].mxu0
        %v4069 = vpop.f32.mrb[0].mxu0
        %4070 = vdwg.mxu0
        %4071 = vmatprep.subr.bf16.mxu0 %v2922
        %4072 = vmatpush1.bf16.msra.mxu0 %v2921
        %4073 = vmatprep.subr.bf16.mxu0 %v2924
        %4074 = vmatpush1.bf16.msra.mxu0 %v2923
        %4075 = vmatprep.subr.bf16.mxu0 %v2926
        %4076 = vmatpush1.bf16.msra.mxu0 %v2925
        %4077 = vmatprep.subr.bf16.mxu0 %v2928
        %4078 = vmatpush1.bf16.msra.mxu0 %v2927
        %4079 = vmatprep.subr.bf16.mxu0 %v2930
        %4080 = vmatpush1.bf16.msra.mxu0 %v2929
        %4081 = vmatprep.subr.bf16.mxu0 %v2932
        %4082 = vmatpush1.bf16.msra.mxu0 %v2931
        %4083 = vmatprep.subr.bf16.mxu0 %v2934
        %4084 = vmatpush1.bf16.msra.mxu0 %v2933
        %4085 = vmatprep.subr.bf16.mxu0 %v2936
        %4086 = vmatpush1.bf16.msra.mxu0 %v2935
        %4087 = vmatprep.subr.bf16.mxu0 %v2938
        %4088 = vmatpush1.bf16.msra.mxu0 %v2937
        %4089 = vmatprep.subr.bf16.mxu0 %v2940
        %4090 = vmatpush1.bf16.msra.mxu0 %v2939
        %4091 = vmatprep.subr.bf16.mxu0 %v2942
        %4092 = vmatpush1.bf16.msra.mxu0 %v2941
        %4093 = vmatprep.subr.bf16.mxu0 %v2944
        %4094 = vmatpush1.bf16.msra.mxu0 %v2943
        %4095 = vmatprep.subr.bf16.mxu0 %v2946
        %4096 = vmatpush1.bf16.msra.mxu0 %v2945
        %4097 = vmatprep.subr.bf16.mxu0 %v2948
        %4098 = vmatpush1.bf16.msra.mxu0 %v2947
        %4099 = vmatprep.subr.bf16.mxu0 %v2950
        %4100 = vmatpush1.bf16.msra.mxu0 %v2949
        %4101 = vmatprep.subr.bf16.mxu0 %v2952
        %4102 = vmatpush1.bf16.msra.mxu0 %v2951
        %4103 = vmatprep.mubr.bf16.mxu0 %v903
        %4104 = vmatmul.mubr.bf16.gmra.mrb[0].mxu0 %v895
        %v4105 = vpop.f32.mrb[0].mxu0
        %v4106 = vadd.f32 %v4065, %v4105
        %v4107 = vpop.f32.mrb[0].mxu0
        %v4108 = vadd.f32 %v4067, %v4107
        %v4109 = vpop.f32.mrb[0].mxu0
        %v4110 = vpop.f32.mrb[0].mxu0
        %4111 = vdwg.mxu0
        %4112 = vmatprep.subr.bf16.mxu0 %v2954
        %4113 = vmatpush1.bf16.msra.mxu0 %v2953
        %4114 = vmatprep.subr.bf16.mxu0 %v2956
        %4115 = vmatpush1.bf16.msra.mxu0 %v2955
        %4116 = vmatprep.subr.bf16.mxu0 %v2958
        %4117 = vmatpush1.bf16.msra.mxu0 %v2957
        %4118 = vmatprep.subr.bf16.mxu0 %v2960
        %4119 = vmatpush1.bf16.msra.mxu0 %v2959
        %4120 = vmatprep.subr.bf16.mxu0 %v2962
        %4121 = vmatpush1.bf16.msra.mxu0 %v2961
        %4122 = vmatprep.subr.bf16.mxu0 %v2964
        %4123 = vmatpush1.bf16.msra.mxu0 %v2963
        %4124 = vmatprep.subr.bf16.mxu0 %v2966
        %4125 = vmatpush1.bf16.msra.mxu0 %v2965
        %4126 = vmatprep.subr.bf16.mxu0 %v2968
        %4127 = vmatpush1.bf16.msra.mxu0 %v2967
        %4128 = vmatprep.subr.bf16.mxu0 %v2970
        %4129 = vmatpush1.bf16.msra.mxu0 %v2969
        %4130 = vmatprep.subr.bf16.mxu0 %v2972
        %4131 = vmatpush1.bf16.msra.mxu0 %v2971
        %4132 = vmatprep.subr.bf16.mxu0 %v2974
        %4133 = vmatpush1.bf16.msra.mxu0 %v2973
        %4134 = vmatprep.subr.bf16.mxu0 %v2976
        %4135 = vmatpush1.bf16.msra.mxu0 %v2975
        %4136 = vmatprep.subr.bf16.mxu0 %v2978
        %4137 = vmatpush1.bf16.msra.mxu0 %v2977
        %4138 = vmatprep.subr.bf16.mxu0 %v2980
        %4139 = vmatpush1.bf16.msra.mxu0 %v2979
        %4140 = vmatprep.subr.bf16.mxu0 %v2982
        %4141 = vmatpush1.bf16.msra.mxu0 %v2981
        %4142 = vmatprep.subr.bf16.mxu0 %v2984
        %4143 = vmatpush1.bf16.msra.mxu0 %v2983
        %4144 = vmatprep.mubr.bf16.mxu0 %v904
        %4145 = vmatmul.mubr.bf16.gmra.mrb[0].mxu0 %v902
        %v4146 = vpop.f32.mrb[0].mxu0
        %v4147 = vadd.f32 %v4106, %v4146
        %v4148 = vpop.f32.mrb[0].mxu0
        %v4149 = vadd.f32 %v4108, %v4148
        %v4150 = vpop.f32.mrb[0].mxu0
        %v4151 = vpop.f32.mrb[0].mxu0
        %4152 = vdwg.mxu0
        %v4153 = vxor.u32 %v4149, 2147483648
        %v4154 = vmul.f32 %v4153, 1.442695
        %v4155 = vpow.pop %v4154
        %v4156 = vadd.f32 %v4155, 1.0
        %v4157 = vrcp.pop %v4156
        %v4158 = vmul.f32 1.0, %v4157
        %v4159 = vmul.f32 %v4147, %v4158
        %vm4160 = vcmask 1043456
        %v4161 = vsel %vm4160, %v4159, -inf
        %v4162 = vrot.slane %v4161, 4
        %v4163 = vmax.f32 %v4161, %v4162
        %v4164 = vrot.slane %v4163, 2
        %v4165 = vmax.f32 %v4163, %v4164
        %v4166 = vrot.slane %v4165, 1
        %v4167 = vmax.f32 %v4165, %v4166
        %p4168 = scmp.eq.s32.totalorder %s26, 0
        // Predicated region
        $region45: #{malconv_forward.1} parent=31 // pred_check
          %p4169 = pneg %p4168
        $region46: #{malconv_forward.1} parent=31 // pred_check_branch
          %4171 = sbr.rel (%p4169) target = $region48
        $region47: #{malconv_forward.1} parent=31 // pred_region
          %4172 = vst [vmem:[%s228] sm:$0x1] %v4167
        $region48: #{malconv_forward.1} parent=31 // pred_fallthru
          _
        %p4173 = scmp.gt.s32.totalorder %s26, 0
        // Predicated region
        $region49: #{malconv_forward.1} parent=31 // pred_check
          %p4174 = pneg %p4173
        $region50: #{malconv_forward.1} parent=31 // pred_check_branch
          %4176 = sbr.rel (%p4174) target = $region52
        $region51: #{malconv_forward.1} parent=31 // pred_region
          %v4177 = vld [vmem:[%s228] sm:$0x1]
          %v4178 = vmax.f32 %v4177, %v4167
          %4179 = vst [vmem:[%s228] sm:$0x1] %v4178
        $region52: #{malconv_forward.1} parent=31 // pred_fallthru
          _
        %s4180 = sand.u32 %s111, 1
        %s4181 = scalar_lea.sflag [#allocation4], %s4180
        %s4182 = sand.u32 %s111, 1
        %s4183 = scalar_lea.vmem [#allocation8], %s4182
        // Predicated region
        $region53: #{malconv_forward.1} parent=31 // pred_check
          %p4184 = pneg %p121
        $region54: #{malconv_forward.1} parent=31 // pred_check_branch
          %4186 = sbr.rel (%p4184) target = $region56
        $region55: #{malconv_forward.1} parent=31 // pred_region
          %s4188 = ssub.s32 16, 16
          %4189 = vsyncadd %s4181, %s4188
          %s4190 = smul.addr %s25, 16
          %s4191 = scalar_lea.hbm %s3, %s4190
          %s4193 = sshll.u32 %s4183, 4
          %s4194 = int_to_ptr.vmem [resolvable:$true] %s4193
          %4196 = dma.vmem_to_hbm [thread:$0]  %s4194, 16, %s4191, %s4181
        $region56: #{malconv_forward.1} parent=31 // pred_fallthru
          _
      $region32: #{malconv_forward.1} parent=5 // pred_fallthru
        _
      %p4197 = scmp.le.s32.totalorder 2, %s16
      // Predicated region
      $region57: #{malconv_forward.1} parent=5 // pred_check
        %p4198 = pneg %p4197
      $region58: #{malconv_forward.1} parent=5 // pred_check_branch
        %4200 = sbr.rel (%p4198) target = $region60
      $region59: #{malconv_forward.1} parent=5 // pred_region
        %s4201 = ssub.s32 %s16, 2
        // Predicated region
        $region61: #{malconv_forward.1} parent=59 // pred_check
          %p4202 = pneg %p127
        $region62: #{malconv_forward.1} parent=59 // pred_check_branch
          %4204 = sbr.rel (%p4202) target = $region64
        $region63: #{malconv_forward.1} parent=59 // pred_region
          %s4205 = sand.u32 %s112, 1
          %s4206 = scalar_lea.sflag [#allocation4], %s4205
          %s4207 = sand.u32 %s112, 1
          %s4208 = scalar_lea.vmem [#allocation8], %s4207
          %4209 = dma.done %s4206, 16
        $region64: #{malconv_forward.1} parent=59 // pred_fallthru
          _
      $region60: #{malconv_forward.1} parent=5 // pred_fallthru
        _
    $region6: #{malconv_forward.1} parent=1 // loop_footer
      %s20 = sadd.s32 1, %s16
    $region7: #{malconv_forward.1} parent=1 // loop_footer_branch
      %15 = sbr.rel target = $region3
    $region8: #{malconv_forward.1} parent=1 // loop_exit
      _
    %4210 = vsyncpa [#allocation3], 1
    %s4211 = scalar_lea.sflag [#allocation3], 1
    %4212 = vsyncpa %s4211, 1
    %4213 = vsyncpa [#allocation6], 1
    %4214 = vsyncpa [#allocation4], 1
    %s4215 = scalar_lea.sflag [#allocation4], 1
    %4216 = vsyncpa %s4215, 1

</llo_original>
